<compile_context>
chip_gen: v6e
topology: v6e:2x2x1
jax: 0.10.0
libtpu: 0.0.40
codegen_flags: <defaults>
</compile_context>

<pallas_src>
import functools

import jax
import jax.numpy as jnp
from jax.experimental import pallas as pl
from jax.experimental.pallas import tpu as pltpu

EPS = 1e-5                      # nn.BatchNorm2d default eps
LANE = 128                      # TPU lane width; channel dims padded to this
VMEM_LIMIT = 32 * 1024 * 1024   # safe on v5e/v6e/v7x


def _round_up(x, m):
    return (x + m - 1) // m * m


# ----------------------------- Pallas kernels ------------------------------ #

def _conv_stats_kernel(x_ref, w_ref, o_ref, st_ref, *, ksize, stride, ho, wo):
    """k x k conv as k*k shifted sub-matmuls + per-tile BN partial sums.

    x_ref : (stride*stride, He, We, Cin) f32   phase-stacked input (one image)
    w_ref : (ksize*ksize, Cin, Cp)       bf16  tap-major weights (Cp = 128*n)
    o_ref : (1, ho, wo, Cp)              f32   raw (pre-BN) conv output
    st_ref: (1, 2, Cp)                   f32   [sum, sum_of_squares] over ho*wo
    """
    cp = w_ref.shape[-1]
    acc = jnp.zeros((ho * wo, cp), jnp.float32)
    t = 0
    for kh in range(ksize):
        for kw in range(ksize):
            ph = (kh % stride) * stride + (kw % stride)
            oh, ow = kh // stride, kw // stride
            patch = (x_ref[ph, oh:oh + ho, ow:ow + wo, :]
                     .reshape(ho * wo, -1).astype(jnp.bfloat16))
            acc = acc + jnp.dot(patch, w_ref[t],
                                preferred_element_type=jnp.float32)
            t += 1
    o_ref[...] = acc.reshape(1, ho, wo, cp)
    s1 = jnp.sum(acc, axis=0, keepdims=True)
    s2 = jnp.sum(acc * acc, axis=0, keepdims=True)
    st_ref[...] = jnp.concatenate([s1, s2], axis=0).reshape(1, 2, cp)


def _bnrelu_conv_stats_kernel(x_ref, s_ref, b_ref, w_ref, o_ref, st_ref, *,
                              ho, wo):
    """Fused: y = relu(x*scale1 + shift1); conv3x3(y); BN2 partial sums.

    x_ref : (1, ho, wo, Cp)   f32   raw conv1 output (un-normalised)
    s_ref : (1, Cp)           f32   folded BN1 scale
    b_ref : (1, Cp)           f32   folded BN1 shift
    w_ref : (9, Cp, Cp)       bf16  tap-major conv2 weights
    o_ref : (1, ho, wo, Cp)   f32   raw conv2 output
    st_ref: (1, 2, Cp)        f32
    """
    c = x_ref.shape[-1]
    cp = w_ref.shape[-1]
    x = x_ref[0]                                              # (ho, wo, c)
    x = jnp.maximum(x * s_ref[...].reshape(1, 1, c)
                    + b_ref[...].reshape(1, 1, c), 0.0)
    # zero-pad spatially by 1 in VMEM (never round-trips through HBM)
    zr = jnp.zeros((1, wo, c), jnp.float32)
    x = jnp.concatenate([zr, x, zr], axis=0)                  # (ho+2, wo, c)
    zc = jnp.zeros((ho + 2, 1, c), jnp.float32)
    x = jnp.concatenate([zc, x, zc], axis=1)                  # (ho+2, wo+2, c)
    acc = jnp.zeros((ho * wo, cp), jnp.float32)
    t = 0
    for kh in range(3):
        for kw in range(3):
            patch = (x[kh:kh + ho, kw:kw + wo, :]
                     .reshape(ho * wo, c).astype(jnp.bfloat16))
            acc = acc + jnp.dot(patch, w_ref[t],
                                preferred_element_type=jnp.float32)
            t += 1
    o_ref[...] = acc.reshape(1, ho, wo, cp)
    s1 = jnp.sum(acc, axis=0, keepdims=True)
    s2 = jnp.sum(acc * acc, axis=0, keepdims=True)
    st_ref[...] = jnp.concatenate([s1, s2], axis=0).reshape(1, 2, cp)


def _bn_add_relu_kernel(a_ref, sa_ref, ba_ref, r_ref, sr_ref, br_ref, o_ref):
    """out = relu(a*sa + ba + r*sr + br): BN2 + shortcut-BN + add + ReLU."""
    cp = a_ref.shape[-1]
    y = (a_ref[...] * sa_ref[...].reshape(1, 1, 1, cp)
         + ba_ref[...].reshape(1, 1, 1, cp)
         + r_ref[...] * sr_ref[...].reshape(1, 1, 1, cp)
         + br_ref[...].reshape(1, 1, 1, cp))
    o_ref[...] = jnp.maximum(y, 0.0)


# --------------------------- pallas_call wrappers --------------------------- #

def _compiler_params():
    # batch/M axis is "parallel" -> megacore sharding on v7x, harmless elsewhere
    return pltpu.CompilerParams(dimension_semantics=("parallel",),
                                vmem_limit_bytes=VMEM_LIMIT)


def conv_stats(x_ph, w_taps, *, ksize, stride, ho, wo):
    np_, he, we, c = x_ph.shape
    p = stride * stride
    nb = np_ // p
    cp = w_taps.shape[-1]
    kern = functools.partial(_conv_stats_kernel, ksize=ksize, stride=stride,
                             ho=ho, wo=wo)
    cost = pl.CostEstimate(
        flops=2 * nb * ho * wo * ksize * ksize * c * cp,
        transcendentals=0,
        bytes_accessed=(x_ph.size * 4 + w_taps.size * 2
                        + nb * ho * wo * cp * 4 + nb * 2 * cp * 4))
    return pl.pallas_call(
        kern,
        grid=(nb,),
        in_specs=[
            pl.BlockSpec((p, he, we, c), lambda b: (b, 0, 0, 0)),
            pl.BlockSpec((ksize * ksize, c, cp), lambda b: (0, 0, 0)),
        ],
        out_specs=(
            pl.BlockSpec((1, ho, wo, cp), lambda b: (b, 0, 0, 0)),
            pl.BlockSpec((1, 2, cp), lambda b: (b, 0, 0)),
        ),
        out_shape=(
            jax.ShapeDtypeStruct((nb, ho, wo, cp), jnp.float32),
            jax.ShapeDtypeStruct((nb, 2, cp), jnp.float32),
        ),
        compiler_params=_compiler_params(),
        cost_estimate=cost,
    )(x_ph, w_taps)


def bnrelu_conv_stats(x, scale, shift, w_taps, *, ho, wo):
    n = x.shape[0]
    c = x.shape[-1]
    cp = w_taps.shape[-1]
    kern = functools.partial(_bnrelu_conv_stats_kernel, ho=ho, wo=wo)
    cost = pl.CostEstimate(
        flops=2 * n * ho * wo * 9 * c * cp,
        transcendentals=0,
        bytes_accessed=(x.size * 4 + w_taps.size * 2
                        + n * ho * wo * cp * 4 + n * 2 * cp * 4))
    return pl.pallas_call(
        kern,
        grid=(n,),
        in_specs=[
            pl.BlockSpec((1, ho, wo, c), lambda b: (b, 0, 0, 0)),
            pl.BlockSpec((1, c), lambda b: (0, 0)),
            pl.BlockSpec((1, c), lambda b: (0, 0)),
            pl.BlockSpec((9, c, cp), lambda b: (0, 0, 0)),
        ],
        out_specs=(
            pl.BlockSpec((1, ho, wo, cp), lambda b: (b, 0, 0, 0)),
            pl.BlockSpec((1, 2, cp), lambda b: (b, 0, 0)),
        ),
        out_shape=(
            jax.ShapeDtypeStruct((n, ho, wo, cp), jnp.float32),
            jax.ShapeDtypeStruct((n, 2, cp), jnp.float32),
        ),
        compiler_params=_compiler_params(),
        cost_estimate=cost,
    )(x, scale, shift, w_taps)


def bn_add_relu(a, sa, ba, r, sr, br):
    n, ho, wo, cp = a.shape
    spec_t = pl.BlockSpec((1, ho, wo, cp), lambda b: (b, 0, 0, 0))
    spec_v = pl.BlockSpec((1, cp), lambda b: (0, 0))
    cost = pl.CostEstimate(flops=5 * n * ho * wo * cp, transcendentals=0,
                           bytes_accessed=3 * a.size * 4 + 4 * cp * 4)
    return pl.pallas_call(
        _bn_add_relu_kernel,
        grid=(n,),
        in_specs=[spec_t, spec_v, spec_v, spec_t, spec_v, spec_v],
        out_specs=spec_t,
        out_shape=jax.ShapeDtypeStruct((n, ho, wo, cp), jnp.float32),
        compiler_params=_compiler_params(),
        cost_estimate=cost,
    )(a, sa, ba, r, sr, br)


# ------------------------------ JAX glue ----------------------------------- #

def _phase_stack(x, *, ksize, stride, pad, ho, wo):
    """Space-to-depth phase stack so the kernel only needs unit-stride taps.

    Pure relayout of the (zero-padded) input, ~1x data volume: NOT im2col.
    Returns (N*stride*stride, He, We, C) with He = ho + (ksize-1)//stride.
    """
    n, h, w, c = x.shape
    e = (ksize - 1) // stride
    he, we = ho + e, wo + e
    pb = stride * he - h - pad
    pr = stride * we - w - pad
    assert pb >= 0 and pr >= 0, (pb, pr)
    xp = jnp.pad(x, ((0, 0), (pad, pb), (pad, pr), (0, 0)))
    phases = [xp[:, p::stride, q::stride, :]
              for p in range(stride) for q in range(stride)]
    xs = jnp.stack(phases, axis=1)                  # (n, s*s, he, we, c)
    return xs.reshape(n * stride * stride, he, we, c)


def _w_to_taps(w_oihw, cout_pad, cin_pad=None):
    """PyTorch (O, I, kh, kw) -> (kh*kw, I[_pad], O_pad) bf16, tap-major."""
    o, i, kh, kw = w_oihw.shape
    w = jnp.transpose(w_oihw, (2, 3, 1, 0)).reshape(kh * kw, i, o)
    ipad = (cin_pad - i) if cin_pad is not None else 0
    w = jnp.pad(w, ((0, 0), (0, ipad), (0, cout_pad - o)))
    return w.astype(jnp.bfloat16)


def _bn_scale_shift(stats, gamma, beta, count, cp):
    """Fold training-mode BatchNorm into per-channel (scale, shift) in f32."""
    g = jnp.pad(gamma.astype(jnp.float32), (0, cp - gamma.shape[0]))
    b = jnp.pad(beta.astype(jnp.float32), (0, cp - beta.shape[0]))
    tot = jnp.sum(stats, axis=0)                    # (2, cp) over all tiles
    mean = tot[0] / count
    var = jnp.maximum(tot[1] / count - mean * mean, 0.0)
    scale = g * jax.lax.rsqrt(var + EPS)
    shift = b - mean * scale
    return scale.reshape(1, cp), shift.reshape(1, cp)


@functools.partial(jax.jit, static_argnames=("stride",))
def residual_block_forward(x_nchw, params, *, stride):
    x = jnp.transpose(x_nchw, (0, 2, 3, 1)).astype(jnp.float32)   # NHWC
    n, h, w, cin = x.shape
    planes = params["conv1_w"].shape[0]
    cp = _round_up(planes, LANE)                    # lane-dense channel dim
    ho = (h + 2 - 3) // stride + 1
    wo = (w + 2 - 3) // stride + 1
    count = n * ho * wo

    # conv1 (3x3, stride) -> raw output + BN1 partial stats (pass 1)
    x_ph = _phase_stack(x, ksize=3, stride=stride, pad=1, ho=ho, wo=wo)
    w1 = _w_to_taps(params["conv1_w"], cp)
    c1_raw, st1 = conv_stats(x_ph, w1, ksize=3, stride=stride, ho=ho, wo=wo)
    scale1, shift1 = _bn_scale_shift(st1, params["bn1_gamma"],
                                     params["bn1_beta"], count, cp)

    # conv2 (3x3, stride 1) fused with BN1-apply + ReLU; emits BN2 stats
    w2 = _w_to_taps(params["conv2_w"], cp, cin_pad=cp)
    c2_raw, st2 = bnrelu_conv_stats(c1_raw, scale1, shift1, w2, ho=ho, wo=wo)
    scale2, shift2 = _bn_scale_shift(st2, params["bn2_gamma"],
                                     params["bn2_beta"], count, cp)

    # shortcut
    if stride != 1 or cin != planes:                # projection: 1x1 conv + BN
        xs = x[:, ::stride, ::stride, :][:, :ho, :wo, :]
        xs_ph = _phase_stack(xs, ksize=1, stride=1, pad=0, ho=ho, wo=wo)
        ws = _w_to_taps(params["short_w"], cp)
        sc_raw, st_s = conv_stats(xs_ph, ws, ksize=1, stride=1, ho=ho, wo=wo)
        scale_s, shift_s = _bn_scale_shift(st_s, params["short_gamma"],
                                           params["short_beta"], count, cp)
    else:                                           # identity shortcut
        sc_raw = jnp.pad(x, ((0, 0), (0, 0), (0, 0), (0, cp - cin)))
        scale_s = jnp.ones((1, cp), jnp.float32)
        shift_s = jnp.zeros((1, cp), jnp.float32)

    # BN2-apply + shortcut-BN-apply + residual add + ReLU (fused, lane-dense)
    out = bn_add_relu(c2_raw, scale2, shift2, sc_raw, scale_s, shift_s)
    out = out[:, :, :, :planes]
    return jnp.transpose(out, (0, 3, 1, 2))         # back to NCHW


# ------------------------------ reference ---------------------------------- #

def _ref_forward(x, params, stride, conv_dtype):
    def conv(v, w, s, pad):
        return jax.lax.conv_general_dilated(
            v.astype(conv_dtype), w.astype(conv_dtype), (s, s),
            ((pad, pad), (pad, pad)),
            dimension_numbers=("NCHW", "OIHW", "NCHW"),
            preferred_element_type=jnp.float32)

    def bn(v, g, b):
        mean = jnp.mean(v, axis=(0, 2, 3), keepdims=True)
        var = jnp.mean(jnp.square(v - mean), axis=(0, 2, 3), keepdims=True)
        return ((v - mean) * jax.lax.rsqrt(var + EPS)
                * g.reshape(1, -1, 1, 1) + b.reshape(1, -1, 1, 1))

    planes = params["conv1_w"].shape[0]
    out = jax.nn.relu(bn(conv(x, params["conv1_w"], stride, 1),
                         params["bn1_gamma"], params["bn1_beta"]))
    out = bn(conv(out, params["conv2_w"], 1, 1),
             params["bn2_gamma"], params["bn2_beta"])
    if stride != 1 or x.shape[1] != planes:
        sc = bn(conv(x, params["short_w"], stride, 0),
                params["short_gamma"], params["short_beta"])
    else:
        sc = x
    return jax.nn.relu(out + sc)


# --------------------------------- main ------------------------------------ #

if __name__ == "__main__":
    def run_case(key, n, cin, h, w, planes, stride):
        ks = jax.random.split(key, 10)
        params = {
            "conv1_w": 0.1 * jax.random.normal(ks[0], (planes, cin, 3, 3), jnp.float32),
            "conv2_w": 0.1 * jax.random.normal(ks[1], (planes, planes, 3, 3), jnp.float32),
            "short_w": 0.1 * jax.random.normal(ks[2], (planes, cin, 1, 1), jnp.float32),
            "bn1_gamma": 1.0 + 0.1 * jax.random.normal(ks[3], (planes,), jnp.float32),
            "bn1_beta": 0.1 * jax.random.normal(ks[4], (planes,), jnp.float32),
            "bn2_gamma": 1.0 + 0.1 * jax.random.normal(ks[5], (planes,), jnp.float32),
            "bn2_beta": 0.1 * jax.random.normal(ks[6], (planes,), jnp.float32),
            "short_gamma": 1.0 + 0.1 * jax.random.normal(ks[7], (planes,), jnp.float32),
            "short_beta": 0.1 * jax.random.normal(ks[8], (planes,), jnp.float32),
        }
        x = jax.random.normal(ks[9], (n, cin, h, w), jnp.float32)

        out = jax.block_until_ready(
            residual_block_forward(x, params, stride=stride))
        ho = (h + 2 - 3) // stride + 1
        wo = (w + 2 - 3) // stride + 1
        assert out.shape == (n, planes, ho, wo), out.shape

        # reference with the same bf16 operand precision -> tight check
        ref16 = jax.block_until_ready(_ref_forward(x, params, stride, jnp.bfloat16))
        err16 = float(jnp.max(jnp.abs(out - ref16)))
        assert err16 < 5e-3, err16
        # full-f32 reference -> loose sanity check (deviation is bf16 rounding)
        ref32 = jax.block_until_ready(_ref_forward(x, params, stride, jnp.float32))
        err32 = float(jnp.max(jnp.abs(out - ref32)))
        assert err32 < 1.5e-1, err32

    key = jax.random.PRNGKey(0)
    k1, k2 = jax.random.split(key)
    # projection shortcut: stride 2, in_planes != planes
    run_case(k1, 2, 4, 16, 16, 8, 2)
    # identity shortcut: stride 1, in_planes == planes
    run_case(k2, 2, 8, 16, 16, 8, 1)

    # TODO(synk): BatchNorm running_mean/running_var buffer updates (a
    # training-time side effect) are not emulated; forward output unaffected.
    print("KERNEL_OK")
</pallas_src>

<mosaic_0001>
module attributes {stable_mosaic.version = 11 : i64} {
  func.func @_conv_stats_kernel(%arg0: i32, %arg1: memref<1x8x8x4xf32, #tpu.memory_space<vmem>>, %arg2: memref<1x4x128xbf16, #tpu.memory_space<vmem>>, %arg3: memref<1x8x8x128xf32, #tpu.memory_space<vmem>>, %arg4: memref<1x2x128xf32, #tpu.memory_space<vmem>>) attributes {dimension_semantics = [#tpu.dimension_semantics<parallel>], iteration_bounds = array<i64: 2>, scalar_prefetch = 0 : i64, scratch_operands = 0 : i64, tpu.core_type = #tpu.core_type<tc>, window_params = [{transform_indices = @transform_0, window_bounds = array<i64: 1, 8, 8, 4>}, {pipeline_mode = #tpu.pipeline_mode<synchronous>, transform_indices = @transform_1, window_bounds = array<i64: 1, 4, 128>}, {transform_indices = @transform_2, window_bounds = array<i64: 1, 8, 8, 128>}, {transform_indices = @transform_3, window_bounds = array<i64: 1, 2, 128>}]} {
    %cst = arith.constant 0.000000e+00 : f32
    %0 = vector.broadcast %cst : f32 to vector<64x128xf32>
    %c0 = arith.constant 0 : index
    %c0_0 = arith.constant 0 : index
    %c0_1 = arith.constant 0 : index
    %c0_2 = arith.constant 0 : index
    %1 = vector.load %arg1[%c0, %c0_0, %c0_1, %c0_2] : memref<1x8x8x4xf32, #tpu.memory_space<vmem>>, vector<1x8x8x4xf32>
    %2 = vector.shape_cast %1 : vector<1x8x8x4xf32> to vector<8x8x4xf32>
    %3 = vector.shape_cast %2 : vector<8x8x4xf32> to vector<64x4xf32>
    %4 = arith.truncf %3 : vector<64x4xf32> to vector<64x4xbf16>
    %c0_3 = arith.constant 0 : index
    %c0_4 = arith.constant 0 : index
    %c0_5 = arith.constant 0 : index
    %5 = vector.load %arg2[%c0_3, %c0_4, %c0_5] : memref<1x4x128xbf16, #tpu.memory_space<vmem>>, vector<1x4x128xbf16>
    %6 = vector.shape_cast %5 : vector<1x4x128xbf16> to vector<4x128xbf16>
    %cst_6 = arith.constant dense<0.000000e+00> : vector<64x128xf32>
    %7 = tpu.matmul %4, %6, %cst_6 {dimension_numbers = #tpu.dot_dimension_numbers<[1], [0], [0], [1], [0, 0, 1, 1], [], []>} : vector<64x4xbf16>, vector<4x128xbf16>, vector<64x128xf32> -> vector<64x128xf32>
    %8 = arith.addf %0, %7 : vector<64x128xf32>
    %9 = vector.shape_cast %8 : vector<64x128xf32> to vector<1x8x8x128xf32>
    %c0_7 = arith.constant 0 : index
    %c0_8 = arith.constant 0 : index
    %c0_9 = arith.constant 0 : index
    %c0_10 = arith.constant 0 : index
    %10 = vector.load %arg3[%c0_7, %c0_8, %c0_9, %c0_10] : memref<1x8x8x128xf32, #tpu.memory_space<vmem>>, vector<1x8x8x128xf32>
    tpu.vector_store %arg3[%c0_7, %c0_8, %c0_9, %c0_10], %9 {strides = array<i32>} : memref<1x8x8x128xf32, #tpu.memory_space<vmem>>, vector<1x8x8x128xf32>,
    %cst_11 = arith.constant dense<0.000000e+00> : vector<128xf32>
    %11 = vector.multi_reduction <add>, %8, %cst_11 [0] : vector<64x128xf32> to vector<128xf32>
    %12 = vector.shape_cast %11 : vector<128xf32> to vector<1x128xf32>
    %13 = arith.mulf %8, %8 : vector<64x128xf32>
    %cst_12 = arith.constant dense<0.000000e+00> : vector<128xf32>
    %14 = vector.multi_reduction <add>, %13, %cst_12 [0] : vector<64x128xf32> to vector<128xf32>
    %15 = vector.shape_cast %14 : vector<128xf32> to vector<1x128xf32>
    %16 = tpu.concatenate %12, %15 in 0 : vector<1x128xf32>, vector<1x128xf32> -> vector<2x128xf32>
    %17 = vector.shape_cast %16 : vector<2x128xf32> to vector<1x2x128xf32>
    %c0_13 = arith.constant 0 : index
    %c0_14 = arith.constant 0 : index
    %c0_15 = arith.constant 0 : index
    %18 = vector.load %arg4[%c0_13, %c0_14, %c0_15] : memref<1x2x128xf32, #tpu.memory_space<vmem>>, vector<1x2x128xf32>
    tpu.vector_store %arg4[%c0_13, %c0_14, %c0_15], %17 {strides = array<i32>} : memref<1x2x128xf32, #tpu.memory_space<vmem>>, vector<1x2x128xf32>,
    return
  }
  func.func @transform_0(%arg0: i32) -> (i32, i32, i32, i32) {
    %c0_i32 = arith.constant 0 : i32
    %c0_i32_0 = arith.constant 0 : i32
    %c0_i32_1 = arith.constant 0 : i32
    %c0_i32_2 = arith.constant 0 : i32
    return %arg0, %c0_i32, %c0_i32_0, %c0_i32_1 : i32, i32, i32, i32
  }
  func.func @transform_1(%arg0: i32) -> (i32, i32, i32) {
    %c0_i32 = arith.constant 0 : i32
    %c0_i32_0 = arith.constant 0 : i32
    %c0_i32_1 = arith.constant 0 : i32
    %c0_i32_2 = arith.constant 0 : i32
    return %c0_i32, %c0_i32_0, %c0_i32_1 : i32, i32, i32
  }
  func.func @transform_2(%arg0: i32) -> (i32, i32, i32, i32) {
    %c0_i32 = arith.constant 0 : i32
    %c0_i32_0 = arith.constant 0 : i32
    %c0_i32_1 = arith.constant 0 : i32
    %c0_i32_2 = arith.constant 0 : i32
    return %arg0, %c0_i32, %c0_i32_0, %c0_i32_1 : i32, i32, i32, i32
  }
  func.func @transform_3(%arg0: i32) -> (i32, i32, i32) {
    %c0_i32 = arith.constant 0 : i32
    %c0_i32_0 = arith.constant 0 : i32
    %c0_i32_1 = arith.constant 0 : i32
    return %arg0, %c0_i32, %c0_i32_0 : i32, i32, i32
  }
}

module attributes {stable_mosaic.version = 11 : i64} {
  func.func @_conv_stats_kernel(%arg0: i32, %arg1: memref<4x9x9x4xf32, #tpu.memory_space<vmem>>, %arg2: memref<9x4x128xbf16, #tpu.memory_space<vmem>>, %arg3: memref<1x8x8x128xf32, #tpu.memory_space<vmem>>, %arg4: memref<1x2x128xf32, #tpu.memory_space<vmem>>) attributes {dimension_semantics = [#tpu.dimension_semantics<parallel>], iteration_bounds = array<i64: 2>, scalar_prefetch = 0 : i64, scratch_operands = 0 : i64, tpu.core_type = #tpu.core_type<tc>, window_params = [{transform_indices = @transform_0, window_bounds = array<i64: 4, 9, 9, 4>}, {pipeline_mode = #tpu.pipeline_mode<synchronous>, transform_indices = @transform_1, window_bounds = array<i64: 9, 4, 128>}, {transform_indices = @transform_2, window_bounds = array<i64: 1, 8, 8, 128>}, {transform_indices = @transform_3, window_bounds = array<i64: 1, 2, 128>}]} {
    %cst = arith.constant 0.000000e+00 : f32
    %0 = vector.broadcast %cst : f32 to vector<64x128xf32>
    %c0 = arith.constant 0 : index
    %c0_0 = arith.constant 0 : index
    %c0_1 = arith.constant 0 : index
    %c0_2 = arith.constant 0 : index
    %1 = vector.load %arg1[%c0, %c0_0, %c0_1, %c0_2] : memref<4x9x9x4xf32, #tpu.memory_space<vmem>>, vector<1x8x8x4xf32>
    %2 = vector.shape_cast %1 : vector<1x8x8x4xf32> to vector<8x8x4xf32>
    %3 = vector.shape_cast %2 : vector<8x8x4xf32> to vector<64x4xf32>
    %4 = arith.truncf %3 : vector<64x4xf32> to vector<64x4xbf16>
    %c0_3 = arith.constant 0 : index
    %c0_4 = arith.constant 0 : index
    %c0_5 = arith.constant 0 : index
    %5 = vector.load %arg2[%c0_3, %c0_4, %c0_5] : memref<9x4x128xbf16, #tpu.memory_space<vmem>>, vector<1x4x128xbf16>
    %6 = vector.shape_cast %5 : vector<1x4x128xbf16> to vector<4x128xbf16>
    %cst_6 = arith.constant dense<0.000000e+00> : vector<64x128xf32>
    %7 = tpu.matmul %4, %6, %cst_6 {dimension_numbers = #tpu.dot_dimension_numbers<[1], [0], [0], [1], [0, 0, 1, 1], [], []>} : vector<64x4xbf16>, vector<4x128xbf16>, vector<64x128xf32> -> vector<64x128xf32>
    %8 = arith.addf %0, %7 : vector<64x128xf32>
    %c1 = arith.constant 1 : index
    %c0_7 = arith.constant 0 : index
    %c0_8 = arith.constant 0 : index
    %c0_9 = arith.constant 0 : index
    %9 = vector.load %arg1[%c1, %c0_7, %c0_8, %c0_9] : memref<4x9x9x4xf32, #tpu.memory_space<vmem>>, vector<1x8x8x4xf32>
    %10 = vector.shape_cast %9 : vector<1x8x8x4xf32> to vector<8x8x4xf32>
    %11 = vector.shape_cast %10 : vector<8x8x4xf32> to vector<64x4xf32>
    %12 = arith.truncf %11 : vector<64x4xf32> to vector<64x4xbf16>
    %c1_10 = arith.constant 1 : index
    %c0_11 = arith.constant 0 : index
    %c0_12 = arith.constant 0 : index
    %13 = vector.load %arg2[%c1_10, %c0_11, %c0_12] : memref<9x4x128xbf16, #tpu.memory_space<vmem>>, vector<1x4x128xbf16>
    %14 = vector.shape_cast %13 : vector<1x4x128xbf16> to vector<4x128xbf16>
    %cst_13 = arith.constant dense<0.000000e+00> : vector<64x128xf32>
    %15 = tpu.matmul %12, %14, %cst_13 {dimension_numbers = #tpu.dot_dimension_numbers<[1], [0], [0], [1], [0, 0, 1, 1], [], []>} : vector<64x4xbf16>, vector<4x128xbf16>, vector<64x128xf32> -> vector<64x128xf32>
    %16 = arith.addf %8, %15 : vector<64x128xf32>
    %c0_14 = arith.constant 0 : index
    %c0_15 = arith.constant 0 : index
    %c1_16 = arith.constant 1 : index
    %c0_17 = arith.constant 0 : index
    %17 = vector.load %arg1[%c0_14, %c0_15, %c1_16, %c0_17] : memref<4x9x9x4xf32, #tpu.memory_space<vmem>>, vector<1x8x8x4xf32>
    %18 = vector.shape_cast %17 : vector<1x8x8x4xf32> to vector<8x8x4xf32>
    %19 = vector.shape_cast %18 : vector<8x8x4xf32> to vector<64x4xf32>
    %20 = arith.truncf %19 : vector<64x4xf32> to vector<64x4xbf16>
    %c2 = arith.constant 2 : index
    %c0_18 = arith.constant 0 : index
    %c0_19 = arith.constant 0 : index
    %21 = vector.load %arg2[%c2, %c0_18, %c0_19] : memref<9x4x128xbf16, #tpu.memory_space<vmem>>, vector<1x4x128xbf16>
    %22 = vector.shape_cast %21 : vector<1x4x128xbf16> to vector<4x128xbf16>
    %cst_20 = arith.constant dense<0.000000e+00> : vector<64x128xf32>
    %23 = tpu.matmul %20, %22, %cst_20 {dimension_numbers = #tpu.dot_dimension_numbers<[1], [0], [0], [1], [0, 0, 1, 1], [], []>} : vector<64x4xbf16>, vector<4x128xbf16>, vector<64x128xf32> -> vector<64x128xf32>
    %24 = arith.addf %16, %23 : vector<64x128xf32>
    %c2_21 = arith.constant 2 : index
    %c0_22 = arith.constant 0 : index
    %c0_23 = arith.constant 0 : index
    %c0_24 = arith.constant 0 : index
    %25 = vector.load %arg1[%c2_21, %c0_22, %c0_23, %c0_24] : memref<4x9x9x4xf32, #tpu.memory_space<vmem>>, vector<1x8x8x4xf32>
    %26 = vector.shape_cast %25 : vector<1x8x8x4xf32> to vector<8x8x4xf32>
    %27 = vector.shape_cast %26 : vector<8x8x4xf32> to vector<64x4xf32>
    %28 = arith.truncf %27 : vector<64x4xf32> to vector<64x4xbf16>
    %c3 = arith.constant 3 : index
    %c0_25 = arith.constant 0 : index
    %c0_26 = arith.constant 0 : index
    %29 = vector.load %arg2[%c3, %c0_25, %c0_26] : memref<9x4x128xbf16, #tpu.memory_space<vmem>>, vector<1x4x128xbf16>
    %30 = vector.shape_cast %29 : vector<1x4x128xbf16> to vector<4x128xbf16>
    %cst_27 = arith.constant dense<0.000000e+00> : vector<64x128xf32>
    %31 = tpu.matmul %28, %30, %cst_27 {dimension_numbers = #tpu.dot_dimension_numbers<[1], [0], [0], [1], [0, 0, 1, 1], [], []>} : vector<64x4xbf16>, vector<4x128xbf16>, vector<64x128xf32> -> vector<64x128xf32>
    %32 = arith.addf %24, %31 : vector<64x128xf32>
    %c3_28 = arith.constant 3 : index
    %c0_29 = arith.constant 0 : index
    %c0_30 = arith.constant 0 : index
    %c0_31 = arith.constant 0 : index
    %33 = vector.load %arg1[%c3_28, %c0_29, %c0_30, %c0_31] : memref<4x9x9x4xf32, #tpu.memory_space<vmem>>, vector<1x8x8x4xf32>
    %34 = vector.shape_cast %33 : vector<1x8x8x4xf32> to vector<8x8x4xf32>
    %35 = vector.shape_cast %34 : vector<8x8x4xf32> to vector<64x4xf32>
    %36 = arith.truncf %35 : vector<64x4xf32> to vector<64x4xbf16>
    %c4 = arith.constant 4 : index
    %c0_32 = arith.constant 0 : index
    %c0_33 = arith.constant 0 : index
    %37 = vector.load %arg2[%c4, %c0_32, %c0_33] : memref<9x4x128xbf16, #tpu.memory_space<vmem>>, vector<1x4x128xbf16>
    %38 = vector.shape_cast %37 : vector<1x4x128xbf16> to vector<4x128xbf16>
    %cst_34 = arith.constant dense<0.000000e+00> : vector<64x128xf32>
    %39 = tpu.matmul %36, %38, %cst_34 {dimension_numbers = #tpu.dot_dimension_numbers<[1], [0], [0], [1], [0, 0, 1, 1], [], []>} : vector<64x4xbf16>, vector<4x128xbf16>, vector<64x128xf32> -> vector<64x128xf32>
    %40 = arith.addf %32, %39 : vector<64x128xf32>
    %c2_35 = arith.constant 2 : index
    %c0_36 = arith.constant 0 : index
    %c1_37 = arith.constant 1 : index
    %c0_38 = arith.constant 0 : index
    %41 = vector.load %arg1[%c2_35, %c0_36, %c1_37, %c0_38] : memref<4x9x9x4xf32, #tpu.memory_space<vmem>>, vector<1x8x8x4xf32>
    %42 = vector.shape_cast %41 : vector<1x8x8x4xf32> to vector<8x8x4xf32>
    %43 = vector.shape_cast %42 : vector<8x8x4xf32> to vector<64x4xf32>
    %44 = arith.truncf %43 : vector<64x4xf32> to vector<64x4xbf16>
    %c5 = arith.constant 5 : index
    %c0_39 = arith.constant 0 : index
    %c0_40 = arith.constant 0 : index
    %45 = vector.load %arg2[%c5, %c0_39, %c0_40] : memref<9x4x128xbf16, #tpu.memory_space<vmem>>, vector<1x4x128xbf16>
    %46 = vector.shape_cast %45 : vector<1x4x128xbf16> to vector<4x128xbf16>
    %cst_41 = arith.constant dense<0.000000e+00> : vector<64x128xf32>
    %47 = tpu.matmul %44, %46, %cst_41 {dimension_numbers = #tpu.dot_dimension_numbers<[1], [0], [0], [1], [0, 0, 1, 1], [], []>} : vector<64x4xbf16>, vector<4x128xbf16>, vector<64x128xf32> -> vector<64x128xf32>
    %48 = arith.addf %40, %47 : vector<64x128xf32>
    %c0_42 = arith.constant 0 : index
    %c1_43 = arith.constant 1 : index
    %c0_44 = arith.constant 0 : index
    %c0_45 = arith.constant 0 : index
    %49 = vector.load %arg1[%c0_42, %c1_43, %c0_44, %c0_45] : memref<4x9x9x4xf32, #tpu.memory_space<vmem>>, vector<1x8x8x4xf32>
    %50 = vector.shape_cast %49 : vector<1x8x8x4xf32> to vector<8x8x4xf32>
    %51 = vector.shape_cast %50 : vector<8x8x4xf32> to vector<64x4xf32>
    %52 = arith.truncf %51 : vector<64x4xf32> to vector<64x4xbf16>
    %c6 = arith.constant 6 : index
    %c0_46 = arith.constant 0 : index
    %c0_47 = arith.constant 0 : index
    %53 = vector.load %arg2[%c6, %c0_46, %c0_47] : memref<9x4x128xbf16, #tpu.memory_space<vmem>>, vector<1x4x128xbf16>
    %54 = vector.shape_cast %53 : vector<1x4x128xbf16> to vector<4x128xbf16>
    %cst_48 = arith.constant dense<0.000000e+00> : vector<64x128xf32>
    %55 = tpu.matmul %52, %54, %cst_48 {dimension_numbers = #tpu.dot_dimension_numbers<[1], [0], [0], [1], [0, 0, 1, 1], [], []>} : vector<64x4xbf16>, vector<4x128xbf16>, vector<64x128xf32> -> vector<64x128xf32>
    %56 = arith.addf %48, %55 : vector<64x128xf32>
    %c1_49 = arith.constant 1 : index
    %c1_50 = arith.constant 1 : index
    %c0_51 = arith.constant 0 : index
    %c0_52 = arith.constant 0 : index
    %57 = vector.load %arg1[%c1_49, %c1_50, %c0_51, %c0_52] : memref<4x9x9x4xf32, #tpu.memory_space<vmem>>, vector<1x8x8x4xf32>
    %58 = vector.shape_cast %57 : vector<1x8x8x4xf32> to vector<8x8x4xf32>
    %59 = vector.shape_cast %58 : vector<8x8x4xf32> to vector<64x4xf32>
    %60 = arith.truncf %59 : vector<64x4xf32> to vector<64x4xbf16>
    %c7 = arith.constant 7 : index
    %c0_53 = arith.constant 0 : index
    %c0_54 = arith.constant 0 : index
    %61 = vector.load %arg2[%c7, %c0_53, %c0_54] : memref<9x4x128xbf16, #tpu.memory_space<vmem>>, vector<1x4x128xbf16>
    %62 = vector.shape_cast %61 : vector<1x4x128xbf16> to vector<4x128xbf16>
    %cst_55 = arith.constant dense<0.000000e+00> : vector<64x128xf32>
    %63 = tpu.matmul %60, %62, %cst_55 {dimension_numbers = #tpu.dot_dimension_numbers<[1], [0], [0], [1], [0, 0, 1, 1], [], []>} : vector<64x4xbf16>, vector<4x128xbf16>, vector<64x128xf32> -> vector<64x128xf32>
    %64 = arith.addf %56, %63 : vector<64x128xf32>
    %c0_56 = arith.constant 0 : index
    %c1_57 = arith.constant 1 : index
    %c1_58 = arith.constant 1 : index
    %c0_59 = arith.constant 0 : index
    %65 = vector.load %arg1[%c0_56, %c1_57, %c1_58, %c0_59] : memref<4x9x9x4xf32, #tpu.memory_space<vmem>>, vector<1x8x8x4xf32>
    %66 = vector.shape_cast %65 : vector<1x8x8x4xf32> to vector<8x8x4xf32>
    %67 = vector.shape_cast %66 : vector<8x8x4xf32> to vector<64x4xf32>
    %68 = arith.truncf %67 : vector<64x4xf32> to vector<64x4xbf16>
    %c8 = arith.constant 8 : index
    %c0_60 = arith.constant 0 : index
    %c0_61 = arith.constant 0 : index
    %69 = vector.load %arg2[%c8, %c0_60, %c0_61] : memref<9x4x128xbf16, #tpu.memory_space<vmem>>, vector<1x4x128xbf16>
    %70 = vector.shape_cast %69 : vector<1x4x128xbf16> to vector<4x128xbf16>
    %cst_62 = arith.constant dense<0.000000e+00> : vector<64x128xf32>
    %71 = tpu.matmul %68, %70, %cst_62 {dimension_numbers = #tpu.dot_dimension_numbers<[1], [0], [0], [1], [0, 0, 1, 1], [], []>} : vector<64x4xbf16>, vector<4x128xbf16>, vector<64x128xf32> -> vector<64x128xf32>
    %72 = arith.addf %64, %71 : vector<64x128xf32>
    %73 = vector.shape_cast %72 : vector<64x128xf32> to vector<1x8x8x128xf32>
    %c0_63 = arith.constant 0 : index
    %c0_64 = arith.constant 0 : index
    %c0_65 = arith.constant 0 : index
    %c0_66 = arith.constant 0 : index
    %74 = vector.load %arg3[%c0_63, %c0_64, %c0_65, %c0_66] : memref<1x8x8x128xf32, #tpu.memory_space<vmem>>, vector<1x8x8x128xf32>
    tpu.vector_store %arg3[%c0_63, %c0_64, %c0_65, %c0_66], %73 {strides = array<i32>} : memref<1x8x8x128xf32, #tpu.memory_space<vmem>>, vector<1x8x8x128xf32>,
    %cst_67 = arith.constant dense<0.000000e+00> : vector<128xf32>
    %75 = vector.multi_reduction <add>, %72, %cst_67 [0] : vector<64x128xf32> to vector<128xf32>
    %76 = vector.shape_cast %75 : vector<128xf32> to vector<1x128xf32>
    %77 = arith.mulf %72, %72 : vector<64x128xf32>
    %cst_68 = arith.constant dense<0.000000e+00> : vector<128xf32>
    %78 = vector.multi_reduction <add>, %77, %cst_68 [0] : vector<64x128xf32> to vector<128xf32>
    %79 = vector.shape_cast %78 : vector<128xf32> to vector<1x128xf32>
    %80 = tpu.concatenate %76, %79 in 0 : vector<1x128xf32>, vector<1x128xf32> -> vector<2x128xf32>
    %81 = vector.shape_cast %80 : vector<2x128xf32> to vector<1x2x128xf32>
    %c0_69 = arith.constant 0 : index
    %c0_70 = arith.constant 0 : index
    %c0_71 = arith.constant 0 : index
    %82 = vector.load %arg4[%c0_69, %c0_70, %c0_71] : memref<1x2x128xf32, #tpu.memory_space<vmem>>, vector<1x2x128xf32>
    tpu.vector_store %arg4[%c0_69, %c0_70, %c0_71], %81 {strides = array<i32>} : memref<1x2x128xf32, #tpu.memory_space<vmem>>, vector<1x2x128xf32>,
    return
  }
  func.func @transform_0(%arg0: i32) -> (i32, i32, i32, i32) {
    %c0_i32 = arith.constant 0 : i32
    %c0_i32_0 = arith.constant 0 : i32
    %c0_i32_1 = arith.constant 0 : i32
    %c0_i32_2 = arith.constant 0 : i32
    return %arg0, %c0_i32, %c0_i32_0, %c0_i32_1 : i32, i32, i32, i32
  }
  func.func @transform_1(%arg0: i32) -> (i32, i32, i32) {
    %c0_i32 = arith.constant 0 : i32
    %c0_i32_0 = arith.constant 0 : i32
    %c0_i32_1 = arith.constant 0 : i32
    %c0_i32_2 = arith.constant 0 : i32
    return %c0_i32, %c0_i32_0, %c0_i32_1 : i32, i32, i32
  }
  func.func @transform_2(%arg0: i32) -> (i32, i32, i32, i32) {
    %c0_i32 = arith.constant 0 : i32
    %c0_i32_0 = arith.constant 0 : i32
    %c0_i32_1 = arith.constant 0 : i32
    %c0_i32_2 = arith.constant 0 : i32
    return %arg0, %c0_i32, %c0_i32_0, %c0_i32_1 : i32, i32, i32, i32
  }
  func.func @transform_3(%arg0: i32) -> (i32, i32, i32) {
    %c0_i32 = arith.constant 0 : i32
    %c0_i32_0 = arith.constant 0 : i32
    %c0_i32_1 = arith.constant 0 : i32
    return %arg0, %c0_i32, %c0_i32_0 : i32, i32, i32
  }
}

module attributes {stable_mosaic.version = 11 : i64} {
  func.func @_bnrelu_conv_stats_kernel(%arg0: i32, %arg1: memref<1x8x8x128xf32, #tpu.memory_space<vmem>>, %arg2: memref<1x128xf32, #tpu.memory_space<vmem>>, %arg3: memref<1x128xf32, #tpu.memory_space<vmem>>, %arg4: memref<9x128x128xbf16, #tpu.memory_space<vmem>>, %arg5: memref<1x8x8x128xf32, #tpu.memory_space<vmem>>, %arg6: memref<1x2x128xf32, #tpu.memory_space<vmem>>) attributes {dimension_semantics = [#tpu.dimension_semantics<parallel>], iteration_bounds = array<i64: 2>, scalar_prefetch = 0 : i64, scratch_operands = 0 : i64, tpu.core_type = #tpu.core_type<tc>, window_params = [{transform_indices = @transform_0, window_bounds = array<i64: 1, 8, 8, 128>}, {pipeline_mode = #tpu.pipeline_mode<synchronous>, transform_indices = @transform_1, window_bounds = array<i64: 1, 128>}, {pipeline_mode = #tpu.pipeline_mode<synchronous>, transform_indices = @transform_2, window_bounds = array<i64: 1, 128>}, {pipeline_mode = #tpu.pipeline_mode<synchronous>, transform_indices = @transform_3, window_bounds = array<i64: 9, 128, 128>}, {transform_indices = @transform_4, window_bounds = array<i64: 1, 8, 8, 128>}, {transform_indices = @transform_5, window_bounds = array<i64: 1, 2, 128>}]} {
    %c0 = arith.constant 0 : index
    %c0_0 = arith.constant 0 : index
    %c0_1 = arith.constant 0 : index
    %c0_2 = arith.constant 0 : index
    %0 = vector.load %arg1[%c0, %c0_0, %c0_1, %c0_2] : memref<1x8x8x128xf32, #tpu.memory_space<vmem>>, vector<1x8x8x128xf32>
    %1 = vector.shape_cast %0 : vector<1x8x8x128xf32> to vector<8x8x128xf32>
    %c0_3 = arith.constant 0 : index
    %c0_4 = arith.constant 0 : index
    %2 = vector.load %arg2[%c0_3, %c0_4] : memref<1x128xf32, #tpu.memory_space<vmem>>, vector<1x128xf32>
    %3 = vector.shape_cast %2 : vector<1x128xf32> to vector<1x1x128xf32>
    %4 = vector.broadcast %3 : vector<1x1x128xf32> to vector<8x8x128xf32>
    %5 = arith.mulf %1, %4 : vector<8x8x128xf32>
    %c0_5 = arith.constant 0 : index
    %c0_6 = arith.constant 0 : index
    %6 = vector.load %arg3[%c0_5, %c0_6] : memref<1x128xf32, #tpu.memory_space<vmem>>, vector<1x128xf32>
    %7 = vector.shape_cast %6 : vector<1x128xf32> to vector<1x1x128xf32>
    %8 = vector.broadcast %7 : vector<1x1x128xf32> to vector<8x8x128xf32>
    %9 = arith.addf %5, %8 : vector<8x8x128xf32>
    %cst = arith.constant 0.000000e+00 : f32
    %10 = vector.broadcast %cst : f32 to vector<8x8x128xf32>
    %11 = arith.maximumf %9, %10 : vector<8x8x128xf32>
    %cst_7 = arith.constant 0.000000e+00 : f32
    %12 = vector.broadcast %cst_7 : f32 to vector<1x8x128xf32>
    %13 = tpu.concatenate %12, %11, %12 in 0 : vector<1x8x128xf32>, vector<8x8x128xf32>, vector<1x8x128xf32> -> vector<10x8x128xf32>
    %cst_8 = arith.constant 0.000000e+00 : f32
    %14 = vector.broadcast %cst_8 : f32 to vector<10x1x128xf32>
    %15 = tpu.concatenate %14, %13, %14 in 1 : vector<10x1x128xf32>, vector<10x8x128xf32>, vector<10x1x128xf32> -> vector<10x10x128xf32>
    %cst_9 = arith.constant 0.000000e+00 : f32
    %16 = vector.broadcast %cst_9 : f32 to vector<64x128xf32>
    %17 = vector.extract_strided_slice %15 {offsets = [0, 0, 0], sizes = [8, 8, 128], strides = [1, 1, 1]} : vector<10x10x128xf32> to vector<8x8x128xf32>
    %18 = vector.shape_cast %17 : vector<8x8x128xf32> to vector<64x128xf32>
    %19 = arith.truncf %18 : vector<64x128xf32> to vector<64x128xbf16>
    %c0_10 = arith.constant 0 : index
    %c0_11 = arith.constant 0 : index
    %c0_12 = arith.constant 0 : index
    %20 = vector.load %arg4[%c0_10, %c0_11, %c0_12] : memref<9x128x128xbf16, #tpu.memory_space<vmem>>, vector<1x128x128xbf16>
    %21 = vector.shape_cast %20 : vector<1x128x128xbf16> to vector<128x128xbf16>
    %cst_13 = arith.constant dense<0.000000e+00> : vector<64x128xf32>
    %22 = tpu.matmul %19, %21, %cst_13 {dimension_numbers = #tpu.dot_dimension_numbers<[1], [0], [0], [1], [0, 0, 1, 1], [], []>} : vector<64x128xbf16>, vector<128x128xbf16>, vector<64x128xf32> -> vector<64x128xf32>
    %23 = arith.addf %16, %22 : vector<64x128xf32>
    %24 = vector.extract_strided_slice %15 {offsets = [0, 1, 0], sizes = [8, 8, 128], strides = [1, 1, 1]} : vector<10x10x128xf32> to vector<8x8x128xf32>
    %25 = vector.shape_cast %24 : vector<8x8x128xf32> to vector<64x128xf32>
    %26 = arith.truncf %25 : vector<64x128xf32> to vector<64x128xbf16>
    %c1 = arith.constant 1 : index
    %c0_14 = arith.constant 0 : index
    %c0_15 = arith.constant 0 : index
    %27 = vector.load %arg4[%c1, %c0_14, %c0_15] : memref<9x128x128xbf16, #tpu.memory_space<vmem>>, vector<1x128x128xbf16>
    %28 = vector.shape_cast %27 : vector<1x128x128xbf16> to vector<128x128xbf16>
    %cst_16 = arith.constant dense<0.000000e+00> : vector<64x128xf32>
    %29 = tpu.matmul %26, %28, %cst_16 {dimension_numbers = #tpu.dot_dimension_numbers<[1], [0], [0], [1], [0, 0, 1, 1], [], []>} : vector<64x128xbf16>, vector<128x128xbf16>, vector<64x128xf32> -> vector<64x128xf32>
    %30 = arith.addf %23, %29 : vector<64x128xf32>
    %31 = vector.extract_strided_slice %15 {offsets = [0, 2, 0], sizes = [8, 8, 128], strides = [1, 1, 1]} : vector<10x10x128xf32> to vector<8x8x128xf32>
    %32 = vector.shape_cast %31 : vector<8x8x128xf32> to vector<64x128xf32>
    %33 = arith.truncf %32 : vector<64x128xf32> to vector<64x128xbf16>
    %c2 = arith.constant 2 : index
    %c0_17 = arith.constant 0 : index
    %c0_18 = arith.constant 0 : index
    %34 = vector.load %arg4[%c2, %c0_17, %c0_18] : memref<9x128x128xbf16, #tpu.memory_space<vmem>>, vector<1x128x128xbf16>
    %35 = vector.shape_cast %34 : vector<1x128x128xbf16> to vector<128x128xbf16>
    %cst_19 = arith.constant dense<0.000000e+00> : vector<64x128xf32>
    %36 = tpu.matmul %33, %35, %cst_19 {dimension_numbers = #tpu.dot_dimension_numbers<[1], [0], [0], [1], [0, 0, 1, 1], [], []>} : vector<64x128xbf16>, vector<128x128xbf16>, vector<64x128xf32> -> vector<64x128xf32>
    %37 = arith.addf %30, %36 : vector<64x128xf32>
    %38 = vector.extract_strided_slice %15 {offsets = [1, 0, 0], sizes = [8, 8, 128], strides = [1, 1, 1]} : vector<10x10x128xf32> to vector<8x8x128xf32>
    %39 = vector.shape_cast %38 : vector<8x8x128xf32> to vector<64x128xf32>
    %40 = arith.truncf %39 : vector<64x128xf32> to vector<64x128xbf16>
    %c3 = arith.constant 3 : index
    %c0_20 = arith.constant 0 : index
    %c0_21 = arith.constant 0 : index
    %41 = vector.load %arg4[%c3, %c0_20, %c0_21] : memref<9x128x128xbf16, #tpu.memory_space<vmem>>, vector<1x128x128xbf16>
    %42 = vector.shape_cast %41 : vector<1x128x128xbf16> to vector<128x128xbf16>
    %cst_22 = arith.constant dense<0.000000e+00> : vector<64x128xf32>
    %43 = tpu.matmul %40, %42, %cst_22 {dimension_numbers = #tpu.dot_dimension_numbers<[1], [0], [0], [1], [0, 0, 1, 1], [], []>} : vector<64x128xbf16>, vector<128x128xbf16>, vector<64x128xf32> -> vector<64x128xf32>
    %44 = arith.addf %37, %43 : vector<64x128xf32>
    %45 = vector.extract_strided_slice %15 {offsets = [1, 1, 0], sizes = [8, 8, 128], strides = [1, 1, 1]} : vector<10x10x128xf32> to vector<8x8x128xf32>
    %46 = vector.shape_cast %45 : vector<8x8x128xf32> to vector<64x128xf32>
    %47 = arith.truncf %46 : vector<64x128xf32> to vector<64x128xbf16>
    %c4 = arith.constant 4 : index
    %c0_23 = arith.constant 0 : index
    %c0_24 = arith.constant 0 : index
    %48 = vector.load %arg4[%c4, %c0_23, %c0_24] : memref<9x128x128xbf16, #tpu.memory_space<vmem>>, vector<1x128x128xbf16>
    %49 = vector.shape_cast %48 : vector<1x128x128xbf16> to vector<128x128xbf16>
    %cst_25 = arith.constant dense<0.000000e+00> : vector<64x128xf32>
    %50 = tpu.matmul %47, %49, %cst_25 {dimension_numbers = #tpu.dot_dimension_numbers<[1], [0], [0], [1], [0, 0, 1, 1], [], []>} : vector<64x128xbf16>, vector<128x128xbf16>, vector<64x128xf32> -> vector<64x128xf32>
    %51 = arith.addf %44, %50 : vector<64x128xf32>
    %52 = vector.extract_strided_slice %15 {offsets = [1, 2, 0], sizes = [8, 8, 128], strides = [1, 1, 1]} : vector<10x10x128xf32> to vector<8x8x128xf32>
    %53 = vector.shape_cast %52 : vector<8x8x128xf32> to vector<64x128xf32>
    %54 = arith.truncf %53 : vector<64x128xf32> to vector<64x128xbf16>
    %c5 = arith.constant 5 : index
    %c0_26 = arith.constant 0 : index
    %c0_27 = arith.constant 0 : index
    %55 = vector.load %arg4[%c5, %c0_26, %c0_27] : memref<9x128x128xbf16, #tpu.memory_space<vmem>>, vector<1x128x128xbf16>
    %56 = vector.shape_cast %55 : vector<1x128x128xbf16> to vector<128x128xbf16>
    %cst_28 = arith.constant dense<0.000000e+00> : vector<64x128xf32>
    %57 = tpu.matmul %54, %56, %cst_28 {dimension_numbers = #tpu.dot_dimension_numbers<[1], [0], [0], [1], [0, 0, 1, 1], [], []>} : vector<64x128xbf16>, vector<128x128xbf16>, vector<64x128xf32> -> vector<64x128xf32>
    %58 = arith.addf %51, %57 : vector<64x128xf32>
    %59 = vector.extract_strided_slice %15 {offsets = [2, 0, 0], sizes = [8, 8, 128], strides = [1, 1, 1]} : vector<10x10x128xf32> to vector<8x8x128xf32>
    %60 = vector.shape_cast %59 : vector<8x8x128xf32> to vector<64x128xf32>
    %61 = arith.truncf %60 : vector<64x128xf32> to vector<64x128xbf16>
    %c6 = arith.constant 6 : index
    %c0_29 = arith.constant 0 : index
    %c0_30 = arith.constant 0 : index
    %62 = vector.load %arg4[%c6, %c0_29, %c0_30] : memref<9x128x128xbf16, #tpu.memory_space<vmem>>, vector<1x128x128xbf16>
    %63 = vector.shape_cast %62 : vector<1x128x128xbf16> to vector<128x128xbf16>
    %cst_31 = arith.constant dense<0.000000e+00> : vector<64x128xf32>
    %64 = tpu.matmul %61, %63, %cst_31 {dimension_numbers = #tpu.dot_dimension_numbers<[1], [0], [0], [1], [0, 0, 1, 1], [], []>} : vector<64x128xbf16>, vector<128x128xbf16>, vector<64x128xf32> -> vector<64x128xf32>
    %65 = arith.addf %58, %64 : vector<64x128xf32>
    %66 = vector.extract_strided_slice %15 {offsets = [2, 1, 0], sizes = [8, 8, 128], strides = [1, 1, 1]} : vector<10x10x128xf32> to vector<8x8x128xf32>
    %67 = vector.shape_cast %66 : vector<8x8x128xf32> to vector<64x128xf32>
    %68 = arith.truncf %67 : vector<64x128xf32> to vector<64x128xbf16>
    %c7 = arith.constant 7 : index
    %c0_32 = arith.constant 0 : index
    %c0_33 = arith.constant 0 : index
    %69 = vector.load %arg4[%c7, %c0_32, %c0_33] : memref<9x128x128xbf16, #tpu.memory_space<vmem>>, vector<1x128x128xbf16>
    %70 = vector.shape_cast %69 : vector<1x128x128xbf16> to vector<128x128xbf16>
    %cst_34 = arith.constant dense<0.000000e+00> : vector<64x128xf32>
    %71 = tpu.matmul %68, %70, %cst_34 {dimension_numbers = #tpu.dot_dimension_numbers<[1], [0], [0], [1], [0, 0, 1, 1], [], []>} : vector<64x128xbf16>, vector<128x128xbf16>, vector<64x128xf32> -> vector<64x128xf32>
    %72 = arith.addf %65, %71 : vector<64x128xf32>
    %73 = vector.extract_strided_slice %15 {offsets = [2, 2, 0], sizes = [8, 8, 128], strides = [1, 1, 1]} : vector<10x10x128xf32> to vector<8x8x128xf32>
    %74 = vector.shape_cast %73 : vector<8x8x128xf32> to vector<64x128xf32>
    %75 = arith.truncf %74 : vector<64x128xf32> to vector<64x128xbf16>
    %c8 = arith.constant 8 : index
    %c0_35 = arith.constant 0 : index
    %c0_36 = arith.constant 0 : index
    %76 = vector.load %arg4[%c8, %c0_35, %c0_36] : memref<9x128x128xbf16, #tpu.memory_space<vmem>>, vector<1x128x128xbf16>
    %77 = vector.shape_cast %76 : vector<1x128x128xbf16> to vector<128x128xbf16>
    %cst_37 = arith.constant dense<0.000000e+00> : vector<64x128xf32>
    %78 = tpu.matmul %75, %77, %cst_37 {dimension_numbers = #tpu.dot_dimension_numbers<[1], [0], [0], [1], [0, 0, 1, 1], [], []>} : vector<64x128xbf16>, vector<128x128xbf16>, vector<64x128xf32> -> vector<64x128xf32>
    %79 = arith.addf %72, %78 : vector<64x128xf32>
    %80 = vector.shape_cast %79 : vector<64x128xf32> to vector<1x8x8x128xf32>
    %c0_38 = arith.constant 0 : index
    %c0_39 = arith.constant 0 : index
    %c0_40 = arith.constant 0 : index
    %c0_41 = arith.constant 0 : index
    %81 = vector.load %arg5[%c0_38, %c0_39, %c0_40, %c0_41] : memref<1x8x8x128xf32, #tpu.memory_space<vmem>>, vector<1x8x8x128xf32>
    tpu.vector_store %arg5[%c0_38, %c0_39, %c0_40, %c0_41], %80 {strides = array<i32>} : memref<1x8x8x128xf32, #tpu.memory_space<vmem>>, vector<1x8x8x128xf32>,
    %cst_42 = arith.constant dense<0.000000e+00> : vector<128xf32>
    %82 = vector.multi_reduction <add>, %79, %cst_42 [0] : vector<64x128xf32> to vector<128xf32>
    %83 = vector.shape_cast %82 : vector<128xf32> to vector<1x128xf32>
    %84 = arith.mulf %79, %79 : vector<64x128xf32>
    %cst_43 = arith.constant dense<0.000000e+00> : vector<128xf32>
    %85 = vector.multi_reduction <add>, %84, %cst_43 [0] : vector<64x128xf32> to vector<128xf32>
    %86 = vector.shape_cast %85 : vector<128xf32> to vector<1x128xf32>
    %87 = tpu.concatenate %83, %86 in 0 : vector<1x128xf32>, vector<1x128xf32> -> vector<2x128xf32>
    %88 = vector.shape_cast %87 : vector<2x128xf32> to vector<1x2x128xf32>
    %c0_44 = arith.constant 0 : index
    %c0_45 = arith.constant 0 : index
    %c0_46 = arith.constant 0 : index
    %89 = vector.load %arg6[%c0_44, %c0_45, %c0_46] : memref<1x2x128xf32, #tpu.memory_space<vmem>>, vector<1x2x128xf32>
    tpu.vector_store %arg6[%c0_44, %c0_45, %c0_46], %88 {strides = array<i32>} : memref<1x2x128xf32, #tpu.memory_space<vmem>>, vector<1x2x128xf32>,
    return
  }
  func.func @transform_0(%arg0: i32) -> (i32, i32, i32, i32) {
    %c0_i32 = arith.constant 0 : i32
    %c0_i32_0 = arith.constant 0 : i32
    %c0_i32_1 = arith.constant 0 : i32
    %c0_i32_2 = arith.constant 0 : i32
    return %arg0, %c0_i32, %c0_i32_0, %c0_i32_1 : i32, i32, i32, i32
  }
  func.func @transform_1(%arg0: i32) -> (i32, i32) {
    %c0_i32 = arith.constant 0 : i32
    %c0_i32_0 = arith.constant 0 : i32
    %c0_i32_1 = arith.constant 0 : i32
    return %c0_i32, %c0_i32_0 : i32, i32
  }
  func.func @transform_2(%arg0: i32) -> (i32, i32) {
    %c0_i32 = arith.constant 0 : i32
    %c0_i32_0 = arith.constant 0 : i32
    %c0_i32_1 = arith.constant 0 : i32
    return %c0_i32, %c0_i32_0 : i32, i32
  }
  func.func @transform_3(%arg0: i32) -> (i32, i32, i32) {
    %c0_i32 = arith.constant 0 : i32
    %c0_i32_0 = arith.constant 0 : i32
    %c0_i32_1 = arith.constant 0 : i32
    %c0_i32_2 = arith.constant 0 : i32
    return %c0_i32, %c0_i32_0, %c0_i32_1 : i32, i32, i32
  }
  func.func @transform_4(%arg0: i32) -> (i32, i32, i32, i32) {
    %c0_i32 = arith.constant 0 : i32
    %c0_i32_0 = arith.constant 0 : i32
    %c0_i32_1 = arith.constant 0 : i32
    %c0_i32_2 = arith.constant 0 : i32
    return %arg0, %c0_i32, %c0_i32_0, %c0_i32_1 : i32, i32, i32, i32
  }
  func.func @transform_5(%arg0: i32) -> (i32, i32, i32) {
    %c0_i32 = arith.constant 0 : i32
    %c0_i32_0 = arith.constant 0 : i32
    %c0_i32_1 = arith.constant 0 : i32
    return %arg0, %c0_i32, %c0_i32_0 : i32, i32, i32
  }
}

module attributes {stable_mosaic.version = 11 : i64} {
  func.func @_bn_add_relu_kernel(%arg0: i32, %arg1: memref<1x8x8x128xf32, #tpu.memory_space<vmem>>, %arg2: memref<1x128xf32, #tpu.memory_space<vmem>>, %arg3: memref<1x128xf32, #tpu.memory_space<vmem>>, %arg4: memref<1x8x8x128xf32, #tpu.memory_space<vmem>>, %arg5: memref<1x128xf32, #tpu.memory_space<vmem>>, %arg6: memref<1x128xf32, #tpu.memory_space<vmem>>, %arg7: memref<1x8x8x128xf32, #tpu.memory_space<vmem>>) attributes {dimension_semantics = [#tpu.dimension_semantics<parallel>], iteration_bounds = array<i64: 2>, scalar_prefetch = 0 : i64, scratch_operands = 0 : i64, tpu.core_type = #tpu.core_type<tc>, window_params = [{transform_indices = @transform_0, window_bounds = array<i64: 1, 8, 8, 128>}, {pipeline_mode = #tpu.pipeline_mode<synchronous>, transform_indices = @transform_1, window_bounds = array<i64: 1, 128>}, {pipeline_mode = #tpu.pipeline_mode<synchronous>, transform_indices = @transform_2, window_bounds = array<i64: 1, 128>}, {transform_indices = @transform_3, window_bounds = array<i64: 1, 8, 8, 128>}, {pipeline_mode = #tpu.pipeline_mode<synchronous>, transform_indices = @transform_4, window_bounds = array<i64: 1, 128>}, {pipeline_mode = #tpu.pipeline_mode<synchronous>, transform_indices = @transform_5, window_bounds = array<i64: 1, 128>}, {transform_indices = @transform_6, window_bounds = array<i64: 1, 8, 8, 128>}]} {
    %c0 = arith.constant 0 : index
    %c0_0 = arith.constant 0 : index
    %c0_1 = arith.constant 0 : index
    %c0_2 = arith.constant 0 : index
    %0 = vector.load %arg1[%c0, %c0_0, %c0_1, %c0_2] : memref<1x8x8x128xf32, #tpu.memory_space<vmem>>, vector<1x8x8x128xf32>
    %c0_3 = arith.constant 0 : index
    %c0_4 = arith.constant 0 : index
    %1 = vector.load %arg2[%c0_3, %c0_4] : memref<1x128xf32, #tpu.memory_space<vmem>>, vector<1x128xf32>
    %2 = vector.shape_cast %1 : vector<1x128xf32> to vector<1x1x1x128xf32>
    %3 = vector.broadcast %2 : vector<1x1x1x128xf32> to vector<1x8x8x128xf32>
    %4 = arith.mulf %0, %3 : vector<1x8x8x128xf32>
    %c0_5 = arith.constant 0 : index
    %c0_6 = arith.constant 0 : index
    %5 = vector.load %arg3[%c0_5, %c0_6] : memref<1x128xf32, #tpu.memory_space<vmem>>, vector<1x128xf32>
    %6 = vector.shape_cast %5 : vector<1x128xf32> to vector<1x1x1x128xf32>
    %7 = vector.broadcast %6 : vector<1x1x1x128xf32> to vector<1x8x8x128xf32>
    %8 = arith.addf %4, %7 : vector<1x8x8x128xf32>
    %c0_7 = arith.constant 0 : index
    %c0_8 = arith.constant 0 : index
    %c0_9 = arith.constant 0 : index
    %c0_10 = arith.constant 0 : index
    %9 = vector.load %arg4[%c0_7, %c0_8, %c0_9, %c0_10] : memref<1x8x8x128xf32, #tpu.memory_space<vmem>>, vector<1x8x8x128xf32>
    %c0_11 = arith.constant 0 : index
    %c0_12 = arith.constant 0 : index
    %10 = vector.load %arg5[%c0_11, %c0_12] : memref<1x128xf32, #tpu.memory_space<vmem>>, vector<1x128xf32>
    %11 = vector.shape_cast %10 : vector<1x128xf32> to vector<1x1x1x128xf32>
    %12 = vector.broadcast %11 : vector<1x1x1x128xf32> to vector<1x8x8x128xf32>
    %13 = arith.mulf %9, %12 : vector<1x8x8x128xf32>
    %14 = arith.addf %8, %13 : vector<1x8x8x128xf32>
    %c0_13 = arith.constant 0 : index
    %c0_14 = arith.constant 0 : index
    %15 = vector.load %arg6[%c0_13, %c0_14] : memref<1x128xf32, #tpu.memory_space<vmem>>, vector<1x128xf32>
    %16 = vector.shape_cast %15 : vector<1x128xf32> to vector<1x1x1x128xf32>
    %17 = vector.broadcast %16 : vector<1x1x1x128xf32> to vector<1x8x8x128xf32>
    %18 = arith.addf %14, %17 : vector<1x8x8x128xf32>
    %cst = arith.constant 0.000000e+00 : f32
    %19 = vector.broadcast %cst : f32 to vector<1x8x8x128xf32>
    %20 = arith.maximumf %18, %19 : vector<1x8x8x128xf32>
    %c0_15 = arith.constant 0 : index
    %c0_16 = arith.constant 0 : index
    %c0_17 = arith.constant 0 : index
    %c0_18 = arith.constant 0 : index
    %21 = vector.load %arg7[%c0_15, %c0_16, %c0_17, %c0_18] : memref<1x8x8x128xf32, #tpu.memory_space<vmem>>, vector<1x8x8x128xf32>
    tpu.vector_store %arg7[%c0_15, %c0_16, %c0_17, %c0_18], %20 {strides = array<i32>} : memref<1x8x8x128xf32, #tpu.memory_space<vmem>>, vector<1x8x8x128xf32>,
    return
  }
  func.func @transform_0(%arg0: i32) -> (i32, i32, i32, i32) {
    %c0_i32 = arith.constant 0 : i32
    %c0_i32_0 = arith.constant 0 : i32
    %c0_i32_1 = arith.constant 0 : i32
    %c0_i32_2 = arith.constant 0 : i32
    return %arg0, %c0_i32, %c0_i32_0, %c0_i32_1 : i32, i32, i32, i32
  }
  func.func @transform_1(%arg0: i32) -> (i32, i32) {
    %c0_i32 = arith.constant 0 : i32
    %c0_i32_0 = arith.constant 0 : i32
    %c0_i32_1 = arith.constant 0 : i32
    return %c0_i32, %c0_i32_0 : i32, i32
  }
  func.func @transform_2(%arg0: i32) -> (i32, i32) {
    %c0_i32 = arith.constant 0 : i32
    %c0_i32_0 = arith.constant 0 : i32
    %c0_i32_1 = arith.constant 0 : i32
    return %c0_i32, %c0_i32_0 : i32, i32
  }
  func.func @transform_3(%arg0: i32) -> (i32, i32, i32, i32) {
    %c0_i32 = arith.constant 0 : i32
    %c0_i32_0 = arith.constant 0 : i32
    %c0_i32_1 = arith.constant 0 : i32
    %c0_i32_2 = arith.constant 0 : i32
    return %arg0, %c0_i32, %c0_i32_0, %c0_i32_1 : i32, i32, i32, i32
  }
  func.func @transform_4(%arg0: i32) -> (i32, i32) {
    %c0_i32 = arith.constant 0 : i32
    %c0_i32_0 = arith.constant 0 : i32
    %c0_i32_1 = arith.constant 0 : i32
    return %c0_i32, %c0_i32_0 : i32, i32
  }
  func.func @transform_5(%arg0: i32) -> (i32, i32) {
    %c0_i32 = arith.constant 0 : i32
    %c0_i32_0 = arith.constant 0 : i32
    %c0_i32_1 = arith.constant 0 : i32
    return %c0_i32, %c0_i32_0 : i32, i32
  }
  func.func @transform_6(%arg0: i32) -> (i32, i32, i32, i32) {
    %c0_i32 = arith.constant 0 : i32
    %c0_i32_0 = arith.constant 0 : i32
    %c0_i32_1 = arith.constant 0 : i32
    %c0_i32_2 = arith.constant 0 : i32
    return %arg0, %c0_i32, %c0_i32_0, %c0_i32_1 : i32, i32, i32, i32
  }
}

</mosaic_0001>

<llo_original>
// kernel: residual_block_forward.6
$region0: #{residual_block_forward.6}
  #allocation0 [shape = 'u32[]', space=smem, size = 0x4, offset = 0x4, fixed_abs, tag = 'smem constant byte address 0x4 - core index']
  #allocation1 [shape = 'u32[144,128]{1,0:T(1,128)}', space=vmem, size = 0x12000, scoped, tag = 'internal scratch']
  %s0 = inlined_call_operand.vmem [shape: f32[2,8,8,4], index: 0, kind: input, shape index: {}]
  %s1 = inlined_call_operand.vmem [shape: bf16[1,4,128], index: 1, kind: input, shape index: {}]
  %s2 = inlined_call_operand.vmem [shape: f32[2,8,8,128], index: 2, kind: output, shape index: {0}]
  %s3 = inlined_call_operand.vmem [shape: f32[2,2,128], index: 3, kind: output, shape index: {1}]
  %4 = xla_tuple %s2, %s3
  %s5 = sld [smem:[#allocation0]]
  $region49: #{residual_block_forward.6} parent=0
    _
  %s7 = ssub.s32 1, %s5
  %s8 = scalar_select 0, %s7, %s5
  loop: start=0, step=1, limit=4
  $region2: #{residual_block_forward.6} parent=0 // loop_pre_header
    _
  $region3: #{residual_block_forward.6} parent=0 // loop_header
    %s10 = sphi 0, %s14
    %p11 = scmp.ge.s32.totalorder %s10, 4
    %s20 = sphi 0, %s22
    %s23 = sphi 0, %s20
    %s24 = sphi 0, %s23
    %s40 = sphi 0, %s24
    %s44 = sphi 0, %s44
    %s46 = sphi 0, %s44
    %s47 = sphi 0, %s46
    %s61 = sphi 0, %s47
    %s67 = sphi 0, %s69
    %s70 = sphi 0, %s67
    %s71 = sphi 0, %s70
    %s87 = sphi 0, %s71
    %s93 = sphi 0, %s95
    %s96 = sphi 0, %s93
    %s97 = sphi 0, %s96
    %s113 = sphi 0, %s97
  $region4: #{residual_block_forward.6} parent=0 // loop_header_branch
    %13 = sbr.rel (%p11) target = $region8
  $region5: #{residual_block_forward.6} parent=0 // loop_body
    %s15 = ssub.s32 %s10, 1
    %s16 = ssub.s32 %s10, 2
    %s17 = sadd.s32 %s10, 1
    %s18 = ssub.s32 %s10, %s17
    %p19 = scmp.eq.s32.totalorder %s18, 0
    %s21 = sadd.s32 %s20, 1
    %s22 = scalar_select %p19, %s20, %s21
    %p25 = pneg %p19
    %p26 = scmp.eq.s32.totalorder %s10, 1
    %p27 = por %p25, %p26
    %p28 = scmp.ne.s32.totalorder %s20, %s23
    %p29 = scmp.eq.s32.totalorder %s10, 0
    %p30 = por %p28, %p29
    %p31 = scmp.ne.s32.totalorder %s20, %s23
    %p32 = scmp.eq.s32.totalorder %s15, 1
    %p33 = por %p31, %p32
    %p34 = scmp.ne.s32.totalorder %s23, %s24
    %p35 = scmp.eq.s32.totalorder %s15, 0
    %p36 = por %p34, %p35
    %p37 = scmp.ne.s32.totalorder %s23, %s24
    %p38 = scmp.eq.s32.totalorder %s16, 1
    %p39 = por %p37, %p38
    %p41 = scmp.ne.s32.totalorder %s24, %s40
    %p42 = scmp.eq.s32.totalorder %s16, 0
    %p43 = por %p41, %p42
    %s45 = sadd.s32 %s44, 1
    %p48 = scmp.eq.s32.totalorder %s10, 1
    %p49 = scmp.ne.s32.totalorder %s44, %s46
    %p50 = scmp.eq.s32.totalorder %s10, 0
    %p51 = por %p49, %p50
    %p52 = scmp.ne.s32.totalorder %s44, %s46
    %p53 = scmp.eq.s32.totalorder %s15, 1
    %p54 = por %p52, %p53
    %p55 = scmp.ne.s32.totalorder %s46, %s47
    %p56 = scmp.eq.s32.totalorder %s15, 0
    %p57 = por %p55, %p56
    %p58 = scmp.ne.s32.totalorder %s46, %s47
    %p59 = scmp.eq.s32.totalorder %s16, 1
    %p60 = por %p58, %p59
    %p62 = scmp.ne.s32.totalorder %s47, %s61
    %p63 = scmp.eq.s32.totalorder %s16, 0
    %p64 = por %p62, %p63
    %s65 = ssub.s32 %s10, %s17
    %p66 = scmp.eq.s32.totalorder %s65, 0
    %s68 = sadd.s32 %s67, 1
    %s69 = scalar_select %p66, %s67, %s68
    %p72 = pneg %p66
    %p73 = scmp.eq.s32.totalorder %s10, 1
    %p74 = por %p72, %p73
    %p75 = scmp.ne.s32.totalorder %s67, %s70
    %p76 = scmp.eq.s32.totalorder %s10, 0
    %p77 = por %p75, %p76
    %p78 = scmp.ne.s32.totalorder %s67, %s70
    %p79 = scmp.eq.s32.totalorder %s15, 1
    %p80 = por %p78, %p79
    %p81 = scmp.ne.s32.totalorder %s70, %s71
    %p82 = scmp.eq.s32.totalorder %s15, 0
    %p83 = por %p81, %p82
    %p84 = scmp.ne.s32.totalorder %s70, %s71
    %p85 = scmp.eq.s32.totalorder %s16, 1
    %p86 = por %p84, %p85
    %p88 = scmp.ne.s32.totalorder %s71, %s87
    %p89 = scmp.eq.s32.totalorder %s16, 0
    %p90 = por %p88, %p89
    %s91 = ssub.s32 %s10, %s17
    %p92 = scmp.eq.s32.totalorder %s91, 0
    %s94 = sadd.s32 %s93, 1
    %s95 = scalar_select %p92, %s93, %s94
    %p98 = pneg %p92
    %p99 = scmp.eq.s32.totalorder %s10, 1
    %p100 = por %p98, %p99
    %p101 = scmp.ne.s32.totalorder %s93, %s96
    %p102 = scmp.eq.s32.totalorder %s10, 0
    %p103 = por %p101, %p102
    %p104 = scmp.ne.s32.totalorder %s93, %s96
    %p105 = scmp.eq.s32.totalorder %s15, 1
    %p106 = por %p104, %p105
    %p107 = scmp.ne.s32.totalorder %s96, %s97
    %p108 = scmp.eq.s32.totalorder %s15, 0
    %p109 = por %p107, %p108
    %p110 = scmp.ne.s32.totalorder %s96, %s97
    %p111 = scmp.eq.s32.totalorder %s16, 1
    %p112 = por %p110, %p111
    %p114 = scmp.ne.s32.totalorder %s97, %s113
    %p115 = scmp.eq.s32.totalorder %s16, 0
    %p116 = por %p114, %p115
    %p117 = scmp.le.s32.totalorder 1, %s10
    %p118 = scmp.lt.s32.totalorder %s10, 3
    %p119 = pnand %p117, %p118
    %p120 = pneg %p119
    // Predicated region
    $region9: #{residual_block_forward.6} parent=5 // pred_check
      _
    $region10: #{residual_block_forward.6} parent=5 // pred_check_branch
      %122 = sbr.rel (%p119) target = $region12
    $region11: #{residual_block_forward.6} parent=5 // pred_region
      %s123 = ssub.s32 %s10, 1
      // Predicated region
      $region13: #{residual_block_forward.6} parent=11 // pred_check
        %p124 = pneg %p57
      $region14: #{residual_block_forward.6} parent=11 // pred_check_branch
        %126 = sbr.rel (%p124) target = $region16
      $region15: #{residual_block_forward.6} parent=11 // pred_region
        _
      $region16: #{residual_block_forward.6} parent=11 // pred_fallthru
        _
    $region12: #{residual_block_forward.6} parent=5 // pred_fallthru
      _
    %p127 = scmp.lt.s32.totalorder %s10, 2
    // Predicated region
    $region17: #{residual_block_forward.6} parent=5 // pred_check
      %p128 = pneg %p127
    $region18: #{residual_block_forward.6} parent=5 // pred_check_branch
      %130 = sbr.rel (%p128) target = $region20
    $region19: #{residual_block_forward.6} parent=5 // pred_region
      // Predicated region
      $region21: #{residual_block_forward.6} parent=19 // pred_check
        %p131 = pneg %p30
      $region22: #{residual_block_forward.6} parent=19 // pred_check_branch
        %133 = sbr.rel (%p131) target = $region24
      $region23: #{residual_block_forward.6} parent=19 // pred_region
        %p134 = scmp.lt.s32.totalorder %s10, 1
        %s135 = scalar_select %p134, %s10, 1
        %s136 = smul.addr %s135, 8
        %s137 = smul.addr %s136, 8
        %s138 = scalar_lea.vmem %s0, %s137
      $region24: #{residual_block_forward.6} parent=19 // pred_fallthru
        _
    $region20: #{residual_block_forward.6} parent=5 // pred_fallthru
      _
    %p139 = scmp.le.s32.totalorder 1, %s10
    %p140 = scmp.lt.s32.totalorder %s10, 3
    %p141 = pnand %p139, %p140
    %p142 = pneg %p141
    // Predicated region
    $region25: #{residual_block_forward.6} parent=5 // pred_check
      _
    $region26: #{residual_block_forward.6} parent=5 // pred_check_branch
      %144 = sbr.rel (%p141) target = $region28
    $region27: #{residual_block_forward.6} parent=5 // pred_region
      %s145 = ssub.s32 %s10, 1
      %p146 = scmp.lt.s32.totalorder %s15, 1
      %s147 = scalar_select %p146, %s15, 1
      %s148 = smul.addr %s147, 8
      %s149 = smul.addr %s148, 8
      %s150 = scalar_lea.vmem %s0, %s149
      %p151 = pneg %p36
      %p152 = pneg %p33
      %p153 = pneg %p57
      %p154 = pneg %p54
      %p155 = pneg %p83
      %p156 = pneg %p80
      %p157 = scmp.lt.s32.totalorder %s15, 1
      %s158 = scalar_select %p157, %s15, 1
      %s159 = smul.addr %s158, 8
      %s160 = smul.addr %s159, 8
      %s161 = scalar_lea.vmem %s2, %s160
      %p162 = pneg %p109
      %p163 = pneg %p106
      %p164 = scmp.lt.s32.totalorder %s15, 1
      %s165 = scalar_select %p164, %s15, 1
      %s166 = smul.addr %s165, 2
      %s167 = scalar_lea.vmem %s3, %s166
      %p168 = scmp.lt.s32.totalorder %s15, 1
      %s169 = scalar_select %p168, %s15, 1
      %s170 = smul.addr %s169, 8
      %s171 = smul.addr %s170, 8
      %s172 = scalar_lea.vmem %s0, %s171
      %p173 = scmp.lt.s32.totalorder %s15, 1
      %s174 = scalar_select %p173, %s15, 1
      %s175 = smul.addr %s174, 8
      %s176 = smul.addr %s175, 8
      %s177 = scalar_lea.vmem %s2, %s176
      %p178 = scmp.lt.s32.totalorder %s15, 1
      %s179 = scalar_select %p178, %s15, 1
      %s180 = smul.addr %s179, 2
      %s181 = scalar_lea.vmem %s3, %s180
      %v183 = vld [vmem:[%s172] sm:$0xff]
      %v184 = vld [vmem:[%s172 + $0x8] sm:$0xff]
      %v185 = vld [vmem:[%s172 + $0x10] sm:$0xff]
      %v186 = vld [vmem:[%s172 + $0x18] sm:$0xff]
      %v187 = vld [vmem:[%s172 + $0x20] sm:$0xff]
      %v188 = vld [vmem:[%s172 + $0x28] sm:$0xff]
      %v189 = vld [vmem:[%s172 + $0x30] sm:$0xff]
      %v190 = vld [vmem:[%s172 + $0x38] sm:$0xff]
      %v191 = vpack.c.bf16 %v184, %v183
      %v192 = vpack.c.bf16 %v186, %v185
      %v193 = vpack.c.bf16 %v188, %v187
      %v194 = vpack.c.bf16 %v190, %v189
      %v195 = vld [vmem:[%s1] sm:$0x3]
      %vm196 = vcmask 31744
      %v198 = vsel %vm196, %v191, 0
      %v201 = vsel %vm196, %v192, 0
      %v204 = vsel %vm196, %v193, 0
      %v207 = vsel %vm196, %v194, 0
      %vm209 = vcmask 1041408
      %v211 = vsel %vm209, %v195, 0
      %213 = vmatprep.subr.bf16.mxu0 0
      %214 = vmatpush1.bf16.msra.mxu0 0
      %215 = vmatprep.subr.bf16.mxu0 0
      %216 = vmatpush1.bf16.msra.mxu0 0
      %217 = vmatprep.subr.bf16.mxu0 0
      %218 = vmatpush1.bf16.msra.mxu0 0
      %219 = vmatprep.subr.bf16.mxu0 0
      %220 = vmatpush1.bf16.msra.mxu0 0
      %221 = vmatprep.subr.bf16.mxu0 0
      %222 = vmatpush1.bf16.msra.mxu0 0
      %223 = vmatprep.subr.bf16.mxu0 0
      %224 = vmatpush1.bf16.msra.mxu0 0
      %225 = vmatprep.subr.bf16.mxu0 0
      %226 = vmatpush1.bf16.msra.mxu0 0
      %227 = vmatprep.subr.bf16.mxu0 0
      %228 = vmatpush1.bf16.msra.mxu0 %v211
      %229 = vmatprep.subr.bf16.mxu0 0
      %230 = vmatpush2.bf16.msra.mxu0 0
      %231 = vmatprep.subr.bf16.mxu0 0
      %232 = vmatpush2.bf16.msra.mxu0 0
      %233 = vmatprep.subr.bf16.mxu0 0
      %234 = vmatpush2.bf16.msra.mxu0 0
      %235 = vmatprep.subr.bf16.mxu0 0
      %236 = vmatpush2.bf16.msra.mxu0 0
      %237 = vmatprep.subr.bf16.mxu0 0
      %238 = vmatpush2.bf16.msra.mxu0 0
      %239 = vmatprep.subr.bf16.mxu0 0
      %240 = vmatpush2.bf16.msra.mxu0 0
      %241 = vmatprep.subr.bf16.mxu0 0
      %242 = vmatpush2.bf16.msra.mxu0 0
      %243 = vmatprep.subr.bf16.mxu0 0
      %244 = vmatpush2.bf16.msra.mxu0 0
      %245 = vmatprep.mubr.bf16.mxu0 0
      %246 = vmatmul.mubr.bf16.gmra.mxu0 %v198
      %v247 = vpop.f32.mrf.mxu0
      %v248 = vadd.f32 0.0, %v247
      %v249 = vpop.f32.mrf.mxu0
      %v250 = vpop.f32.mrf.mxu0
      %v251 = vadd.f32 0.0, %v250
      %v252 = vpop.f32.mrf.mxu0
      %253 = vmatprep.mubr.bf16.mxu0 0
      %254 = vmatmul.mubr.bf16.gmra.mxu0 %v201
      %v255 = vpop.f32.mrf.mxu0
      %v256 = vadd.f32 0.0, %v255
      %v257 = vpop.f32.mrf.mxu0
      %v258 = vpop.f32.mrf.mxu0
      %v259 = vadd.f32 0.0, %v258
      %v260 = vpop.f32.mrf.mxu0
      %261 = vmatprep.mubr.bf16.mxu0 0
      %262 = vmatmul.mubr.bf16.gmra.mxu0 %v204
      %v263 = vpop.f32.mrf.mxu0
      %v264 = vadd.f32 0.0, %v263
      %v265 = vpop.f32.mrf.mxu0
      %v266 = vpop.f32.mrf.mxu0
      %v267 = vadd.f32 0.0, %v266
      %v268 = vpop.f32.mrf.mxu0
      %269 = vmatprep.mubr.bf16.mxu0 0
      %270 = vmatmul.mubr.bf16.gmra.mxu0 %v207
      %v271 = vpop.f32.mrf.mxu0
      %v272 = vadd.f32 0.0, %v271
      %v273 = vpop.f32.mrf.mxu0
      %v274 = vpop.f32.mrf.mxu0
      %v275 = vadd.f32 0.0, %v274
      %v276 = vpop.f32.mrf.mxu0
      %277 = vdwg.mxu0
      %278 = vst [vmem:[%s177] sm:$0xff] %v248
      %279 = vst [vmem:[%s177 + $0x8] sm:$0xff] %v251
      %280 = vst [vmem:[%s177 + $0x10] sm:$0xff] %v256
      %281 = vst [vmem:[%s177 + $0x18] sm:$0xff] %v259
      %282 = vst [vmem:[%s177 + $0x20] sm:$0xff] %v264
      %283 = vst [vmem:[%s177 + $0x28] sm:$0xff] %v267
      %284 = vst [vmem:[%s177 + $0x30] sm:$0xff] %v272
      %285 = vst [vmem:[%s177 + $0x38] sm:$0xff] %v275
      %v286 = vadd.f32 %v248, %v251
      %v287 = vadd.f32 %v286, %v256
      %v288 = vadd.f32 %v287, %v259
      %v289 = vadd.f32 %v288, %v264
      %v290 = vadd.f32 %v289, %v267
      %v291 = vadd.f32 %v290, %v272
      %v292 = vadd.f32 %v291, %v275
      %v293 = vrot.slane %v292, 4
      %v294 = vadd.f32 %v292, %v293
      %v295 = vrot.slane %v294, 2
      %v296 = vadd.f32 %v294, %v295
      %v297 = vrot.slane %v296, 1
      %v298 = vadd.f32 %v296, %v297
      %v299 = vmul.f32 %v248, %v248
      %v300 = vmul.f32 %v251, %v251
      %v301 = vmul.f32 %v256, %v256
      %v302 = vmul.f32 %v259, %v259
      %v303 = vmul.f32 %v264, %v264
      %v304 = vmul.f32 %v267, %v267
      %v305 = vmul.f32 %v272, %v272
      %v306 = vmul.f32 %v275, %v275
      %v307 = vadd.f32 %v299, %v300
      %v308 = vadd.f32 %v307, %v301
      %v309 = vadd.f32 %v308, %v302
      %v310 = vadd.f32 %v309, %v303
      %v311 = vadd.f32 %v310, %v304
      %v312 = vadd.f32 %v311, %v305
      %v313 = vadd.f32 %v312, %v306
      %v314 = vrot.slane %v313, 4
      %v315 = vadd.f32 %v313, %v314
      %v316 = vrot.slane %v315, 2
      %v317 = vadd.f32 %v315, %v316
      %v318 = vrot.slane %v317, 1
      %v319 = vadd.f32 %v317, %v318
      %vm320 = vcmask 1040384
      %v321 = vsel %vm320, %v298, %v319
      %322 = vst [vmem:[%s181] sm:$0x3] %v321
      %p323 = scmp.lt.s32.totalorder %s15, 1
      %s324 = scalar_select %p323, %s15, 1
      %s325 = smul.addr %s324, 8
      %s326 = smul.addr %s325, 8
      %s327 = scalar_lea.vmem %s2, %s326
      %p328 = scmp.lt.s32.totalorder %s15, 1
      %s329 = scalar_select %p328, %s15, 1
      %s330 = smul.addr %s329, 2
      %s331 = scalar_lea.vmem %s3, %s330
      // Predicated region
      $region29: #{residual_block_forward.6} parent=27 // pred_check
        %p332 = pneg %p80
      $region30: #{residual_block_forward.6} parent=27 // pred_check_branch
        %334 = sbr.rel (%p332) target = $region32
      $region31: #{residual_block_forward.6} parent=27 // pred_region
        _
      $region32: #{residual_block_forward.6} parent=27 // pred_fallthru
        _
      // Predicated region
      $region33: #{residual_block_forward.6} parent=27 // pred_check
        %p335 = pneg %p106
      $region34: #{residual_block_forward.6} parent=27 // pred_check_branch
        %337 = sbr.rel (%p335) target = $region36
      $region35: #{residual_block_forward.6} parent=27 // pred_region
        _
      $region36: #{residual_block_forward.6} parent=27 // pred_fallthru
        _
    $region28: #{residual_block_forward.6} parent=5 // pred_fallthru
      _
    %p338 = scmp.le.s32.totalorder 2, %s10
    // Predicated region
    $region37: #{residual_block_forward.6} parent=5 // pred_check
      %p339 = pneg %p338
    $region38: #{residual_block_forward.6} parent=5 // pred_check_branch
      %341 = sbr.rel (%p339) target = $region40
    $region39: #{residual_block_forward.6} parent=5 // pred_region
      %s342 = ssub.s32 %s10, 2
      // Predicated region
      $region41: #{residual_block_forward.6} parent=39 // pred_check
        %p343 = pneg %p86
      $region42: #{residual_block_forward.6} parent=39 // pred_check_branch
        %345 = sbr.rel (%p343) target = $region44
      $region43: #{residual_block_forward.6} parent=39 // pred_region
        %p346 = scmp.lt.s32.totalorder %s16, 1
        %s347 = scalar_select %p346, %s16, 1
        %s348 = smul.addr %s347, 8
        %s349 = smul.addr %s348, 8
        %s350 = scalar_lea.vmem %s2, %s349
      $region44: #{residual_block_forward.6} parent=39 // pred_fallthru
        _
      // Predicated region
      $region45: #{residual_block_forward.6} parent=39 // pred_check
        %p351 = pneg %p112
      $region46: #{residual_block_forward.6} parent=39 // pred_check_branch
        %353 = sbr.rel (%p351) target = $region48
      $region47: #{residual_block_forward.6} parent=39 // pred_region
        %p354 = scmp.lt.s32.totalorder %s16, 1
        %s355 = scalar_select %p354, %s16, 1
        %s356 = smul.addr %s355, 2
        %s357 = scalar_lea.vmem %s3, %s356
      $region48: #{residual_block_forward.6} parent=39 // pred_fallthru
        _
    $region40: #{residual_block_forward.6} parent=5 // pred_fallthru
      _
  $region6: #{residual_block_forward.6} parent=0 // loop_footer
    %s14 = sadd.s32 1, %s10
  $region7: #{residual_block_forward.6} parent=0 // loop_footer_branch
    %9 = sbr.rel target = $region3
  $region8: #{residual_block_forward.6} parent=0 // loop_exit
    _

// kernel: residual_block_forward.7
$region0: #{residual_block_forward.7}
  #allocation0 [shape = 'u32[]', space=smem, size = 0x4, offset = 0x4, fixed_abs, tag = 'smem constant byte address 0x4 - core index']
  #allocation1 [shape = 'u32[144,128]{1,0:T(1,128)}', space=vmem, size = 0x12000, scoped, tag = 'internal scratch']
  %s0 = inlined_call_operand.vmem [shape: f32[2,8,8,128], index: 0, kind: input, shape index: {}]
  %s1 = inlined_call_operand.vmem [shape: f32[1,128], index: 1, kind: input, shape index: {}]
  %s2 = inlined_call_operand.vmem [shape: f32[1,128], index: 2, kind: input, shape index: {}]
  %s3 = inlined_call_operand.vmem [shape: f32[2,8,8,128], index: 3, kind: input, shape index: {}]
  %s4 = inlined_call_operand.vmem [shape: f32[1,128], index: 4, kind: input, shape index: {}]
  %s5 = inlined_call_operand.vmem [shape: f32[1,128], index: 5, kind: input, shape index: {}]
  %s6 = inlined_call_operand.vmem [shape: f32[2,8,8,128], index: 6, kind: output, shape index: {}]
  %s7 = sld [smem:[#allocation0]]
  $region57: #{residual_block_forward.7} parent=0
    _
  %s9 = ssub.s32 1, %s7
  %s10 = scalar_select 0, %s9, %s7
  loop: start=0, step=1, limit=4
  $region2: #{residual_block_forward.7} parent=0 // loop_pre_header
    _
  $region3: #{residual_block_forward.7} parent=0 // loop_header
    %s12 = sphi 0, %s16
    %p13 = scmp.ge.s32.totalorder %s12, 4
    %s22 = sphi 0, %s24
    %s25 = sphi 0, %s22
    %s26 = sphi 0, %s25
    %s42 = sphi 0, %s26
    %s46 = sphi 0, %s46
    %s48 = sphi 0, %s46
    %s49 = sphi 0, %s48
    %s63 = sphi 0, %s49
    %s67 = sphi 0, %s67
    %s69 = sphi 0, %s67
    %s70 = sphi 0, %s69
    %s84 = sphi 0, %s70
    %s90 = sphi 0, %s92
    %s93 = sphi 0, %s90
    %s94 = sphi 0, %s93
    %s110 = sphi 0, %s94
    %s114 = sphi 0, %s114
    %s116 = sphi 0, %s114
    %s117 = sphi 0, %s116
    %s131 = sphi 0, %s117
    %s135 = sphi 0, %s135
    %s137 = sphi 0, %s135
    %s138 = sphi 0, %s137
    %s152 = sphi 0, %s138
    %s158 = sphi 0, %s160
    %s161 = sphi 0, %s158
    %s162 = sphi 0, %s161
    %s178 = sphi 0, %s162
  $region4: #{residual_block_forward.7} parent=0 // loop_header_branch
    %15 = sbr.rel (%p13) target = $region8
  $region5: #{residual_block_forward.7} parent=0 // loop_body
    %s17 = ssub.s32 %s12, 1
    %s18 = ssub.s32 %s12, 2
    %s19 = sadd.s32 %s12, 1
    %s20 = ssub.s32 %s12, %s19
    %p21 = scmp.eq.s32.totalorder %s20, 0
    %s23 = sadd.s32 %s22, 1
    %s24 = scalar_select %p21, %s22, %s23
    %p27 = pneg %p21
    %p28 = scmp.eq.s32.totalorder %s12, 1
    %p29 = por %p27, %p28
    %p30 = scmp.ne.s32.totalorder %s22, %s25
    %p31 = scmp.eq.s32.totalorder %s12, 0
    %p32 = por %p30, %p31
    %p33 = scmp.ne.s32.totalorder %s22, %s25
    %p34 = scmp.eq.s32.totalorder %s17, 1
    %p35 = por %p33, %p34
    %p36 = scmp.ne.s32.totalorder %s25, %s26
    %p37 = scmp.eq.s32.totalorder %s17, 0
    %p38 = por %p36, %p37
    %p39 = scmp.ne.s32.totalorder %s25, %s26
    %p40 = scmp.eq.s32.totalorder %s18, 1
    %p41 = por %p39, %p40
    %p43 = scmp.ne.s32.totalorder %s26, %s42
    %p44 = scmp.eq.s32.totalorder %s18, 0
    %p45 = por %p43, %p44
    %s47 = sadd.s32 %s46, 1
    %p50 = scmp.eq.s32.totalorder %s12, 1
    %p51 = scmp.ne.s32.totalorder %s46, %s48
    %p52 = scmp.eq.s32.totalorder %s12, 0
    %p53 = por %p51, %p52
    %p54 = scmp.ne.s32.totalorder %s46, %s48
    %p55 = scmp.eq.s32.totalorder %s17, 1
    %p56 = por %p54, %p55
    %p57 = scmp.ne.s32.totalorder %s48, %s49
    %p58 = scmp.eq.s32.totalorder %s17, 0
    %p59 = por %p57, %p58
    %p60 = scmp.ne.s32.totalorder %s48, %s49
    %p61 = scmp.eq.s32.totalorder %s18, 1
    %p62 = por %p60, %p61
    %p64 = scmp.ne.s32.totalorder %s49, %s63
    %p65 = scmp.eq.s32.totalorder %s18, 0
    %p66 = por %p64, %p65
    %s68 = sadd.s32 %s67, 1
    %p71 = scmp.eq.s32.totalorder %s12, 1
    %p72 = scmp.ne.s32.totalorder %s67, %s69
    %p73 = scmp.eq.s32.totalorder %s12, 0
    %p74 = por %p72, %p73
    %p75 = scmp.ne.s32.totalorder %s67, %s69
    %p76 = scmp.eq.s32.totalorder %s17, 1
    %p77 = por %p75, %p76
    %p78 = scmp.ne.s32.totalorder %s69, %s70
    %p79 = scmp.eq.s32.totalorder %s17, 0
    %p80 = por %p78, %p79
    %p81 = scmp.ne.s32.totalorder %s69, %s70
    %p82 = scmp.eq.s32.totalorder %s18, 1
    %p83 = por %p81, %p82
    %p85 = scmp.ne.s32.totalorder %s70, %s84
    %p86 = scmp.eq.s32.totalorder %s18, 0
    %p87 = por %p85, %p86
    %s88 = ssub.s32 %s12, %s19
    %p89 = scmp.eq.s32.totalorder %s88, 0
    %s91 = sadd.s32 %s90, 1
    %s92 = scalar_select %p89, %s90, %s91
    %p95 = pneg %p89
    %p96 = scmp.eq.s32.totalorder %s12, 1
    %p97 = por %p95, %p96
    %p98 = scmp.ne.s32.totalorder %s90, %s93
    %p99 = scmp.eq.s32.totalorder %s12, 0
    %p100 = por %p98, %p99
    %p101 = scmp.ne.s32.totalorder %s90, %s93
    %p102 = scmp.eq.s32.totalorder %s17, 1
    %p103 = por %p101, %p102
    %p104 = scmp.ne.s32.totalorder %s93, %s94
    %p105 = scmp.eq.s32.totalorder %s17, 0
    %p106 = por %p104, %p105
    %p107 = scmp.ne.s32.totalorder %s93, %s94
    %p108 = scmp.eq.s32.totalorder %s18, 1
    %p109 = por %p107, %p108
    %p111 = scmp.ne.s32.totalorder %s94, %s110
    %p112 = scmp.eq.s32.totalorder %s18, 0
    %p113 = por %p111, %p112
    %s115 = sadd.s32 %s114, 1
    %p118 = scmp.eq.s32.totalorder %s12, 1
    %p119 = scmp.ne.s32.totalorder %s114, %s116
    %p120 = scmp.eq.s32.totalorder %s12, 0
    %p121 = por %p119, %p120
    %p122 = scmp.ne.s32.totalorder %s114, %s116
    %p123 = scmp.eq.s32.totalorder %s17, 1
    %p124 = por %p122, %p123
    %p125 = scmp.ne.s32.totalorder %s116, %s117
    %p126 = scmp.eq.s32.totalorder %s17, 0
    %p127 = por %p125, %p126
    %p128 = scmp.ne.s32.totalorder %s116, %s117
    %p129 = scmp.eq.s32.totalorder %s18, 1
    %p130 = por %p128, %p129
    %p132 = scmp.ne.s32.totalorder %s117, %s131
    %p133 = scmp.eq.s32.totalorder %s18, 0
    %p134 = por %p132, %p133
    %s136 = sadd.s32 %s135, 1
    %p139 = scmp.eq.s32.totalorder %s12, 1
    %p140 = scmp.ne.s32.totalorder %s135, %s137
    %p141 = scmp.eq.s32.totalorder %s12, 0
    %p142 = por %p140, %p141
    %p143 = scmp.ne.s32.totalorder %s135, %s137
    %p144 = scmp.eq.s32.totalorder %s17, 1
    %p145 = por %p143, %p144
    %p146 = scmp.ne.s32.totalorder %s137, %s138
    %p147 = scmp.eq.s32.totalorder %s17, 0
    %p148 = por %p146, %p147
    %p149 = scmp.ne.s32.totalorder %s137, %s138
    %p150 = scmp.eq.s32.totalorder %s18, 1
    %p151 = por %p149, %p150
    %p153 = scmp.ne.s32.totalorder %s138, %s152
    %p154 = scmp.eq.s32.totalorder %s18, 0
    %p155 = por %p153, %p154
    %s156 = ssub.s32 %s12, %s19
    %p157 = scmp.eq.s32.totalorder %s156, 0
    %s159 = sadd.s32 %s158, 1
    %s160 = scalar_select %p157, %s158, %s159
    %p163 = pneg %p157
    %p164 = scmp.eq.s32.totalorder %s12, 1
    %p165 = por %p163, %p164
    %p166 = scmp.ne.s32.totalorder %s158, %s161
    %p167 = scmp.eq.s32.totalorder %s12, 0
    %p168 = por %p166, %p167
    %p169 = scmp.ne.s32.totalorder %s158, %s161
    %p170 = scmp.eq.s32.totalorder %s17, 1
    %p171 = por %p169, %p170
    %p172 = scmp.ne.s32.totalorder %s161, %s162
    %p173 = scmp.eq.s32.totalorder %s17, 0
    %p174 = por %p172, %p173
    %p175 = scmp.ne.s32.totalorder %s161, %s162
    %p176 = scmp.eq.s32.totalorder %s18, 1
    %p177 = por %p175, %p176
    %p179 = scmp.ne.s32.totalorder %s162, %s178
    %p180 = scmp.eq.s32.totalorder %s18, 0
    %p181 = por %p179, %p180
    %p182 = scmp.le.s32.totalorder 1, %s12
    %p183 = scmp.lt.s32.totalorder %s12, 3
    %p184 = pnand %p182, %p183
    %p185 = pneg %p184
    // Predicated region
    $region9: #{residual_block_forward.7} parent=5 // pred_check
      _
    $region10: #{residual_block_forward.7} parent=5 // pred_check_branch
      %187 = sbr.rel (%p184) target = $region12
    $region11: #{residual_block_forward.7} parent=5 // pred_region
      %s188 = ssub.s32 %s12, 1
      // Predicated region
      $region13: #{residual_block_forward.7} parent=11 // pred_check
        %p189 = pneg %p59
      $region14: #{residual_block_forward.7} parent=11 // pred_check_branch
        %191 = sbr.rel (%p189) target = $region16
      $region15: #{residual_block_forward.7} parent=11 // pred_region
        _
      $region16: #{residual_block_forward.7} parent=11 // pred_fallthru
        _
      // Predicated region
      $region17: #{residual_block_forward.7} parent=11 // pred_check
        %p192 = pneg %p80
      $region18: #{residual_block_forward.7} parent=11 // pred_check_branch
        %194 = sbr.rel (%p192) target = $region20
      $region19: #{residual_block_forward.7} parent=11 // pred_region
        _
      $region20: #{residual_block_forward.7} parent=11 // pred_fallthru
        _
      // Predicated region
      $region21: #{residual_block_forward.7} parent=11 // pred_check
        %p195 = pneg %p127
      $region22: #{residual_block_forward.7} parent=11 // pred_check_branch
        %197 = sbr.rel (%p195) target = $region24
      $region23: #{residual_block_forward.7} parent=11 // pred_region
        _
      $region24: #{residual_block_forward.7} parent=11 // pred_fallthru
        _
      // Predicated region
      $region25: #{residual_block_forward.7} parent=11 // pred_check
        %p198 = pneg %p148
      $region26: #{residual_block_forward.7} parent=11 // pred_check_branch
        %200 = sbr.rel (%p198) target = $region28
      $region27: #{residual_block_forward.7} parent=11 // pred_region
        _
      $region28: #{residual_block_forward.7} parent=11 // pred_fallthru
        _
    $region12: #{residual_block_forward.7} parent=5 // pred_fallthru
      _
    %p201 = scmp.lt.s32.totalorder %s12, 2
    // Predicated region
    $region29: #{residual_block_forward.7} parent=5 // pred_check
      %p202 = pneg %p201
    $region30: #{residual_block_forward.7} parent=5 // pred_check_branch
      %204 = sbr.rel (%p202) target = $region32
    $region31: #{residual_block_forward.7} parent=5 // pred_region
      // Predicated region
      $region33: #{residual_block_forward.7} parent=31 // pred_check
        %p205 = pneg %p32
      $region34: #{residual_block_forward.7} parent=31 // pred_check_branch
        %207 = sbr.rel (%p205) target = $region36
      $region35: #{residual_block_forward.7} parent=31 // pred_region
        %p208 = scmp.lt.s32.totalorder %s12, 1
        %s209 = scalar_select %p208, %s12, 1
        %s210 = smul.addr %s209, 8
        %s211 = smul.addr %s210, 8
        %s212 = scalar_lea.vmem %s0, %s211
      $region36: #{residual_block_forward.7} parent=31 // pred_fallthru
        _
      // Predicated region
      $region37: #{residual_block_forward.7} parent=31 // pred_check
        %p213 = pneg %p100
      $region38: #{residual_block_forward.7} parent=31 // pred_check_branch
        %215 = sbr.rel (%p213) target = $region40
      $region39: #{residual_block_forward.7} parent=31 // pred_region
        %p216 = scmp.lt.s32.totalorder %s12, 1
        %s217 = scalar_select %p216, %s12, 1
        %s218 = smul.addr %s217, 8
        %s219 = smul.addr %s218, 8
        %s220 = scalar_lea.vmem %s3, %s219
      $region40: #{residual_block_forward.7} parent=31 // pred_fallthru
        _
    $region32: #{residual_block_forward.7} parent=5 // pred_fallthru
      _
    %p221 = scmp.le.s32.totalorder 1, %s12
    %p222 = scmp.lt.s32.totalorder %s12, 3
    %p223 = pnand %p221, %p222
    %p224 = pneg %p223
    // Predicated region
    $region41: #{residual_block_forward.7} parent=5 // pred_check
      _
    $region42: #{residual_block_forward.7} parent=5 // pred_check_branch
      %226 = sbr.rel (%p223) target = $region44
    $region43: #{residual_block_forward.7} parent=5 // pred_region
      %s227 = ssub.s32 %s12, 1
      %p228 = scmp.lt.s32.totalorder %s17, 1
      %s229 = scalar_select %p228, %s17, 1
      %s230 = smul.addr %s229, 8
      %s231 = smul.addr %s230, 8
      %s232 = scalar_lea.vmem %s0, %s231
      %p233 = pneg %p38
      %p234 = pneg %p35
      %p235 = pneg %p59
      %p236 = pneg %p56
      %p237 = pneg %p80
      %p238 = pneg %p77
      %p239 = scmp.lt.s32.totalorder %s17, 1
      %s240 = scalar_select %p239, %s17, 1
      %s241 = smul.addr %s240, 8
      %s242 = smul.addr %s241, 8
      %s243 = scalar_lea.vmem %s3, %s242
      %p244 = pneg %p106
      %p245 = pneg %p103
      %p246 = pneg %p127
      %p247 = pneg %p124
      %p248 = pneg %p148
      %p249 = pneg %p145
      %p250 = pneg %p174
      %p251 = pneg %p171
      %p252 = scmp.lt.s32.totalorder %s17, 1
      %s253 = scalar_select %p252, %s17, 1
      %s254 = smul.addr %s253, 8
      %s255 = smul.addr %s254, 8
      %s256 = scalar_lea.vmem %s6, %s255
      %p257 = scmp.lt.s32.totalorder %s17, 1
      %s258 = scalar_select %p257, %s17, 1
      %s259 = smul.addr %s258, 8
      %s260 = smul.addr %s259, 8
      %s261 = scalar_lea.vmem %s0, %s260
      %p262 = scmp.lt.s32.totalorder %s17, 1
      %s263 = scalar_select %p262, %s17, 1
      %s264 = smul.addr %s263, 8
      %s265 = smul.addr %s264, 8
      %s266 = scalar_lea.vmem %s3, %s265
      %p267 = scmp.lt.s32.totalorder %s17, 1
      %s268 = scalar_select %p267, %s17, 1
      %s269 = smul.addr %s268, 8
      %s270 = smul.addr %s269, 8
      %s271 = scalar_lea.vmem %s6, %s270
      %v272 = vld [vmem:[%s261] sm:$0xff]
      %v273 = vld [vmem:[%s261 + $0x8] sm:$0xff]
      %v274 = vld [vmem:[%s261 + $0x10] sm:$0xff]
      %v275 = vld [vmem:[%s261 + $0x18] sm:$0xff]
      %v276 = vld [vmem:[%s261 + $0x20] sm:$0xff]
      %v277 = vld [vmem:[%s261 + $0x28] sm:$0xff]
      %v278 = vld [vmem:[%s261 + $0x30] sm:$0xff]
      %v279 = vld [vmem:[%s261 + $0x38] sm:$0xff]
      %v280 = vld [vmem:[%s1] sm:$0x1]
      %v282 = vlaneseq
      %v283 = vshrl.u32 %v282, 7
      %v284 = vsub.s32 0, %v283
      %v285 = vrot.slane %v280, %v284
      %v287 = vmul.f32 %v272, %v285
      %v288 = vmul.f32 %v273, %v285
      %v289 = vmul.f32 %v274, %v285
      %v290 = vmul.f32 %v275, %v285
      %v291 = vmul.f32 %v276, %v285
      %v292 = vmul.f32 %v277, %v285
      %v293 = vmul.f32 %v278, %v285
      %v294 = vmul.f32 %v279, %v285
      %v295 = vld [vmem:[%s2] sm:$0x1]
      %v297 = vlaneseq
      %v298 = vshrl.u32 %v297, 7
      %v299 = vsub.s32 0, %v298
      %v300 = vrot.slane %v295, %v299
      %v302 = vadd.f32 %v287, %v300
      %v303 = vadd.f32 %v288, %v300
      %v304 = vadd.f32 %v289, %v300
      %v305 = vadd.f32 %v290, %v300
      %v306 = vadd.f32 %v291, %v300
      %v307 = vadd.f32 %v292, %v300
      %v308 = vadd.f32 %v293, %v300
      %v309 = vadd.f32 %v294, %v300
      %v310 = vld [vmem:[%s266] sm:$0xff]
      %v311 = vld [vmem:[%s266 + $0x8] sm:$0xff]
      %v312 = vld [vmem:[%s266 + $0x10] sm:$0xff]
      %v313 = vld [vmem:[%s266 + $0x18] sm:$0xff]
      %v314 = vld [vmem:[%s266 + $0x20] sm:$0xff]
      %v315 = vld [vmem:[%s266 + $0x28] sm:$0xff]
      %v316 = vld [vmem:[%s266 + $0x30] sm:$0xff]
      %v317 = vld [vmem:[%s266 + $0x38] sm:$0xff]
      %v318 = vld [vmem:[%s4] sm:$0x1]
      %v320 = vlaneseq
      %v321 = vshrl.u32 %v320, 7
      %v322 = vsub.s32 0, %v321
      %v323 = vrot.slane %v318, %v322
      %v325 = vmul.f32 %v310, %v323
      %v326 = vmul.f32 %v311, %v323
      %v327 = vmul.f32 %v312, %v323
      %v328 = vmul.f32 %v313, %v323
      %v329 = vmul.f32 %v314, %v323
      %v330 = vmul.f32 %v315, %v323
      %v331 = vmul.f32 %v316, %v323
      %v332 = vmul.f32 %v317, %v323
      %v333 = vadd.f32 %v302, %v325
      %v334 = vadd.f32 %v303, %v326
      %v335 = vadd.f32 %v304, %v327
      %v336 = vadd.f32 %v305, %v328
      %v337 = vadd.f32 %v306, %v329
      %v338 = vadd.f32 %v307, %v330
      %v339 = vadd.f32 %v308, %v331
      %v340 = vadd.f32 %v309, %v332
      %v341 = vld [vmem:[%s5] sm:$0x1]
      %v343 = vlaneseq
      %v344 = vshrl.u32 %v343, 7
      %v345 = vsub.s32 0, %v344
      %v346 = vrot.slane %v341, %v345
      %v348 = vadd.f32 %v333, %v346
      %v349 = vadd.f32 %v334, %v346
      %v350 = vadd.f32 %v335, %v346
      %v351 = vadd.f32 %v336, %v346
      %v352 = vadd.f32 %v337, %v346
      %v353 = vadd.f32 %v338, %v346
      %v354 = vadd.f32 %v339, %v346
      %v355 = vadd.f32 %v340, %v346
      %v356 = vmax.f32 %v348, 0.0
      %v357 = vmax.f32 %v349, 0.0
      %v358 = vmax.f32 %v350, 0.0
      %v359 = vmax.f32 %v351, 0.0
      %v360 = vmax.f32 %v352, 0.0
      %v361 = vmax.f32 %v353, 0.0
      %v362 = vmax.f32 %v354, 0.0
      %v363 = vmax.f32 %v355, 0.0
      %364 = vst [vmem:[%s271] sm:$0xff] %v356
      %365 = vst [vmem:[%s271 + $0x8] sm:$0xff] %v357
      %366 = vst [vmem:[%s271 + $0x10] sm:$0xff] %v358
      %367 = vst [vmem:[%s271 + $0x18] sm:$0xff] %v359
      %368 = vst [vmem:[%s271 + $0x20] sm:$0xff] %v360
      %369 = vst [vmem:[%s271 + $0x28] sm:$0xff] %v361
      %370 = vst [vmem:[%s271 + $0x30] sm:$0xff] %v362
      %371 = vst [vmem:[%s271 + $0x38] sm:$0xff] %v363
      %p372 = scmp.lt.s32.totalorder %s17, 1
      %s373 = scalar_select %p372, %s17, 1
      %s374 = smul.addr %s373, 8
      %s375 = smul.addr %s374, 8
      %s376 = scalar_lea.vmem %s6, %s375
      // Predicated region
      $region45: #{residual_block_forward.7} parent=43 // pred_check
        %p377 = pneg %p171
      $region46: #{residual_block_forward.7} parent=43 // pred_check_branch
        %379 = sbr.rel (%p377) target = $region48
      $region47: #{residual_block_forward.7} parent=43 // pred_region
        _
      $region48: #{residual_block_forward.7} parent=43 // pred_fallthru
        _
    $region44: #{residual_block_forward.7} parent=5 // pred_fallthru
      _
    %p380 = scmp.le.s32.totalorder 2, %s12
    // Predicated region
    $region49: #{residual_block_forward.7} parent=5 // pred_check
      %p381 = pneg %p380
    $region50: #{residual_block_forward.7} parent=5 // pred_check_branch
      %383 = sbr.rel (%p381) target = $region52
    $region51: #{residual_block_forward.7} parent=5 // pred_region
      %s384 = ssub.s32 %s12, 2
      // Predicated region
      $region53: #{residual_block_forward.7} parent=51 // pred_check
        %p385 = pneg %p177
      $region54: #{residual_block_forward.7} parent=51 // pred_check_branch
        %387 = sbr.rel (%p385) target = $region56
      $region55: #{residual_block_forward.7} parent=51 // pred_region
        %p388 = scmp.lt.s32.totalorder %s18, 1
        %s389 = scalar_select %p388, %s18, 1
        %s390 = smul.addr %s389, 8
        %s391 = smul.addr %s390, 8
        %s392 = scalar_lea.vmem %s6, %s391
      $region56: #{residual_block_forward.7} parent=51 // pred_fallthru
        _
    $region52: #{residual_block_forward.7} parent=5 // pred_fallthru
      _
  $region6: #{residual_block_forward.7} parent=0 // loop_footer
    %s16 = sadd.s32 1, %s12
  $region7: #{residual_block_forward.7} parent=0 // loop_footer_branch
    %11 = sbr.rel target = $region3
  $region8: #{residual_block_forward.7} parent=0 // loop_exit
    _

// kernel: residual_block_forward.4
$region0: #{residual_block_forward.4}
  #allocation0 [shape = 'u32[]', space=smem, size = 0x4, offset = 0x4, fixed_abs, tag = 'smem constant byte address 0x4 - core index']
  #allocation1 [shape = 'u32[144,128]{1,0:T(1,128)}', space=vmem, size = 0x12000, scoped, tag = 'internal scratch']
  %s0 = inlined_call_operand.vmem [shape: f32[8,9,9,4], index: 0, kind: input, shape index: {}]
  %s1 = inlined_call_operand.vmem [shape: bf16[9,4,128], index: 1, kind: input, shape index: {}]
  %s2 = inlined_call_operand.vmem [shape: f32[2,8,8,128], index: 2, kind: output, shape index: {0}]
  %s3 = inlined_call_operand.vmem [shape: f32[2,2,128], index: 3, kind: output, shape index: {1}]
  %4 = xla_tuple %s2, %s3
  %s5 = sld [smem:[#allocation0]]
  $region49: #{residual_block_forward.4} parent=0
    _
  %s7 = ssub.s32 1, %s5
  %s8 = scalar_select 0, %s7, %s5
  loop: start=0, step=1, limit=4
  $region2: #{residual_block_forward.4} parent=0 // loop_pre_header
    _
  $region3: #{residual_block_forward.4} parent=0 // loop_header
    %s10 = sphi 0, %s14
    %p11 = scmp.ge.s32.totalorder %s10, 4
    %s20 = sphi 0, %s22
    %s23 = sphi 0, %s20
    %s24 = sphi 0, %s23
    %s40 = sphi 0, %s24
    %s44 = sphi 0, %s44
    %s46 = sphi 0, %s44
    %s47 = sphi 0, %s46
    %s61 = sphi 0, %s47
    %s67 = sphi 0, %s69
    %s70 = sphi 0, %s67
    %s71 = sphi 0, %s70
    %s87 = sphi 0, %s71
    %s93 = sphi 0, %s95
    %s96 = sphi 0, %s93
    %s97 = sphi 0, %s96
    %s113 = sphi 0, %s97
  $region4: #{residual_block_forward.4} parent=0 // loop_header_branch
    %13 = sbr.rel (%p11) target = $region8
  $region5: #{residual_block_forward.4} parent=0 // loop_body
    %s15 = ssub.s32 %s10, 1
    %s16 = ssub.s32 %s10, 2
    %s17 = sadd.s32 %s10, 1
    %s18 = ssub.s32 %s10, %s17
    %p19 = scmp.eq.s32.totalorder %s18, 0
    %s21 = sadd.s32 %s20, 1
    %s22 = scalar_select %p19, %s20, %s21
    %p25 = pneg %p19
    %p26 = scmp.eq.s32.totalorder %s10, 1
    %p27 = por %p25, %p26
    %p28 = scmp.ne.s32.totalorder %s20, %s23
    %p29 = scmp.eq.s32.totalorder %s10, 0
    %p30 = por %p28, %p29
    %p31 = scmp.ne.s32.totalorder %s20, %s23
    %p32 = scmp.eq.s32.totalorder %s15, 1
    %p33 = por %p31, %p32
    %p34 = scmp.ne.s32.totalorder %s23, %s24
    %p35 = scmp.eq.s32.totalorder %s15, 0
    %p36 = por %p34, %p35
    %p37 = scmp.ne.s32.totalorder %s23, %s24
    %p38 = scmp.eq.s32.totalorder %s16, 1
    %p39 = por %p37, %p38
    %p41 = scmp.ne.s32.totalorder %s24, %s40
    %p42 = scmp.eq.s32.totalorder %s16, 0
    %p43 = por %p41, %p42
    %s45 = sadd.s32 %s44, 1
    %p48 = scmp.eq.s32.totalorder %s10, 1
    %p49 = scmp.ne.s32.totalorder %s44, %s46
    %p50 = scmp.eq.s32.totalorder %s10, 0
    %p51 = por %p49, %p50
    %p52 = scmp.ne.s32.totalorder %s44, %s46
    %p53 = scmp.eq.s32.totalorder %s15, 1
    %p54 = por %p52, %p53
    %p55 = scmp.ne.s32.totalorder %s46, %s47
    %p56 = scmp.eq.s32.totalorder %s15, 0
    %p57 = por %p55, %p56
    %p58 = scmp.ne.s32.totalorder %s46, %s47
    %p59 = scmp.eq.s32.totalorder %s16, 1
    %p60 = por %p58, %p59
    %p62 = scmp.ne.s32.totalorder %s47, %s61
    %p63 = scmp.eq.s32.totalorder %s16, 0
    %p64 = por %p62, %p63
    %s65 = ssub.s32 %s10, %s17
    %p66 = scmp.eq.s32.totalorder %s65, 0
    %s68 = sadd.s32 %s67, 1
    %s69 = scalar_select %p66, %s67, %s68
    %p72 = pneg %p66
    %p73 = scmp.eq.s32.totalorder %s10, 1
    %p74 = por %p72, %p73
    %p75 = scmp.ne.s32.totalorder %s67, %s70
    %p76 = scmp.eq.s32.totalorder %s10, 0
    %p77 = por %p75, %p76
    %p78 = scmp.ne.s32.totalorder %s67, %s70
    %p79 = scmp.eq.s32.totalorder %s15, 1
    %p80 = por %p78, %p79
    %p81 = scmp.ne.s32.totalorder %s70, %s71
    %p82 = scmp.eq.s32.totalorder %s15, 0
    %p83 = por %p81, %p82
    %p84 = scmp.ne.s32.totalorder %s70, %s71
    %p85 = scmp.eq.s32.totalorder %s16, 1
    %p86 = por %p84, %p85
    %p88 = scmp.ne.s32.totalorder %s71, %s87
    %p89 = scmp.eq.s32.totalorder %s16, 0
    %p90 = por %p88, %p89
    %s91 = ssub.s32 %s10, %s17
    %p92 = scmp.eq.s32.totalorder %s91, 0
    %s94 = sadd.s32 %s93, 1
    %s95 = scalar_select %p92, %s93, %s94
    %p98 = pneg %p92
    %p99 = scmp.eq.s32.totalorder %s10, 1
    %p100 = por %p98, %p99
    %p101 = scmp.ne.s32.totalorder %s93, %s96
    %p102 = scmp.eq.s32.totalorder %s10, 0
    %p103 = por %p101, %p102
    %p104 = scmp.ne.s32.totalorder %s93, %s96
    %p105 = scmp.eq.s32.totalorder %s15, 1
    %p106 = por %p104, %p105
    %p107 = scmp.ne.s32.totalorder %s96, %s97
    %p108 = scmp.eq.s32.totalorder %s15, 0
    %p109 = por %p107, %p108
    %p110 = scmp.ne.s32.totalorder %s96, %s97
    %p111 = scmp.eq.s32.totalorder %s16, 1
    %p112 = por %p110, %p111
    %p114 = scmp.ne.s32.totalorder %s97, %s113
    %p115 = scmp.eq.s32.totalorder %s16, 0
    %p116 = por %p114, %p115
    %p117 = scmp.le.s32.totalorder 1, %s10
    %p118 = scmp.lt.s32.totalorder %s10, 3
    %p119 = pnand %p117, %p118
    %p120 = pneg %p119
    // Predicated region
    $region9: #{residual_block_forward.4} parent=5 // pred_check
      _
    $region10: #{residual_block_forward.4} parent=5 // pred_check_branch
      %122 = sbr.rel (%p119) target = $region12
    $region11: #{residual_block_forward.4} parent=5 // pred_region
      %s123 = ssub.s32 %s10, 1
      // Predicated region
      $region13: #{residual_block_forward.4} parent=11 // pred_check
        %p124 = pneg %p57
      $region14: #{residual_block_forward.4} parent=11 // pred_check_branch
        %126 = sbr.rel (%p124) target = $region16
      $region15: #{residual_block_forward.4} parent=11 // pred_region
        _
      $region16: #{residual_block_forward.4} parent=11 // pred_fallthru
        _
    $region12: #{residual_block_forward.4} parent=5 // pred_fallthru
      _
    %p127 = scmp.lt.s32.totalorder %s10, 2
    // Predicated region
    $region17: #{residual_block_forward.4} parent=5 // pred_check
      %p128 = pneg %p127
    $region18: #{residual_block_forward.4} parent=5 // pred_check_branch
      %130 = sbr.rel (%p128) target = $region20
    $region19: #{residual_block_forward.4} parent=5 // pred_region
      // Predicated region
      $region21: #{residual_block_forward.4} parent=19 // pred_check
        %p131 = pneg %p30
      $region22: #{residual_block_forward.4} parent=19 // pred_check_branch
        %133 = sbr.rel (%p131) target = $region24
      $region23: #{residual_block_forward.4} parent=19 // pred_region
        %s134 = smul.u32 4, %s10
        %p135 = scmp.lt.s32.totalorder %s134, 7
        %s136 = scalar_select %p135, %s134, 7
        %s137 = smul.addr %s136, 18
        %s138 = smul.addr %s137, 8
        %s139 = scalar_lea.vmem %s0, %s138
        %s140 = smul.u32 4, %s10
      $region24: #{residual_block_forward.4} parent=19 // pred_fallthru
        _
    $region20: #{residual_block_forward.4} parent=5 // pred_fallthru
      _
    %p141 = scmp.le.s32.totalorder 1, %s10
    %p142 = scmp.lt.s32.totalorder %s10, 3
    %p143 = pnand %p141, %p142
    %p144 = pneg %p143
    // Predicated region
    $region25: #{residual_block_forward.4} parent=5 // pred_check
      _
    $region26: #{residual_block_forward.4} parent=5 // pred_check_branch
      %146 = sbr.rel (%p143) target = $region28
    $region27: #{residual_block_forward.4} parent=5 // pred_region
      %s147 = ssub.s32 %s10, 1
      %s148 = smul.u32 4, %s15
      %p149 = scmp.lt.s32.totalorder %s148, 7
      %s150 = scalar_select %p149, %s148, 7
      %s151 = smul.addr %s150, 18
      %s152 = smul.addr %s151, 8
      %s153 = scalar_lea.vmem %s0, %s152
      %p154 = pneg %p36
      %p155 = pneg %p33
      %p156 = pneg %p57
      %p157 = pneg %p54
      %p158 = pneg %p83
      %p159 = pneg %p80
      %p160 = scmp.lt.s32.totalorder %s15, 1
      %s161 = scalar_select %p160, %s15, 1
      %s162 = smul.addr %s161, 8
      %s163 = smul.addr %s162, 8
      %s164 = scalar_lea.vmem %s2, %s163
      %p165 = pneg %p109
      %p166 = pneg %p106
      %p167 = scmp.lt.s32.totalorder %s15, 1
      %s168 = scalar_select %p167, %s15, 1
      %s169 = smul.addr %s168, 2
      %s170 = scalar_lea.vmem %s3, %s169
      %s171 = smul.u32 4, %s15
      %p172 = scmp.lt.s32.totalorder %s171, 7
      %s173 = scalar_select %p172, %s171, 7
      %s174 = smul.addr %s173, 18
      %s175 = smul.addr %s174, 8
      %s176 = scalar_lea.vmem %s0, %s175
      %s177 = smul.u32 4, %s15
      %p178 = scmp.lt.s32.totalorder %s15, 1
      %s179 = scalar_select %p178, %s15, 1
      %s180 = smul.addr %s179, 8
      %s181 = smul.addr %s180, 8
      %s182 = scalar_lea.vmem %s2, %s181
      %p183 = scmp.lt.s32.totalorder %s15, 1
      %s184 = scalar_select %p183, %s15, 1
      %s185 = smul.addr %s184, 2
      %s186 = scalar_lea.vmem %s3, %s185
      %v188 = vld [vmem:[%s176] sm:$0xff]
      %v189 = vld [vmem:[%s176 + $0x10] sm:$0xff]
      %v190 = vld [vmem:[%s176 + $0x20] sm:$0xff]
      %v191 = vld [vmem:[%s176 + $0x30] sm:$0xff]
      %v192 = vld [vmem:[%s176 + $0x40] sm:$0xff]
      %v193 = vld [vmem:[%s176 + $0x50] sm:$0xff]
      %v194 = vld [vmem:[%s176 + $0x60] sm:$0xff]
      %v195 = vld [vmem:[%s176 + $0x70] sm:$0xff]
      %v196 = vpack.c.bf16 %v189, %v188
      %v197 = vpack.c.bf16 %v191, %v190
      %v198 = vpack.c.bf16 %v193, %v192
      %v199 = vpack.c.bf16 %v195, %v194
      %v200 = vld [vmem:[%s1] sm:$0x3]
      %s201 = scalar_lea.vmem %s176, 144
      %v202 = vld [vmem:[%s201] sm:$0xff]
      %v203 = vld [vmem:[%s201 + $0x10] sm:$0xff]
      %v204 = vld [vmem:[%s201 + $0x20] sm:$0xff]
      %v205 = vld [vmem:[%s201 + $0x30] sm:$0xff]
      %v206 = vld [vmem:[%s201 + $0x40] sm:$0xff]
      %v207 = vld [vmem:[%s201 + $0x50] sm:$0xff]
      %v208 = vld [vmem:[%s201 + $0x60] sm:$0xff]
      %v209 = vld [vmem:[%s201 + $0x70] sm:$0xff]
      %v210 = vpack.c.bf16 %v203, %v202
      %v211 = vpack.c.bf16 %v205, %v204
      %v212 = vpack.c.bf16 %v207, %v206
      %v213 = vpack.c.bf16 %v209, %v208
      %s214 = scalar_lea.vmem %s1, 2
      %v215 = vld [vmem:[%s214] sm:$0x3]
      %vm216 = vcmask 31744
      %v218 = vsel %vm216, %v210, 0
      %v221 = vsel %vm216, %v211, 0
      %v224 = vsel %vm216, %v212, 0
      %v227 = vsel %vm216, %v213, 0
      %vm229 = vcmask 1041408
      %v231 = vsel %vm229, %v215, 0
      %233 = vmatprep.subr.bf16.mxu0 0
      %234 = vmatpush1.bf16.msra.mxu0 0
      %235 = vmatprep.subr.bf16.mxu0 0
      %236 = vmatpush1.bf16.msra.mxu0 0
      %237 = vmatprep.subr.bf16.mxu0 0
      %238 = vmatpush1.bf16.msra.mxu0 0
      %239 = vmatprep.subr.bf16.mxu0 0
      %240 = vmatpush1.bf16.msra.mxu0 0
      %241 = vmatprep.subr.bf16.mxu0 0
      %242 = vmatpush1.bf16.msra.mxu0 0
      %243 = vmatprep.subr.bf16.mxu0 0
      %244 = vmatpush1.bf16.msra.mxu0 0
      %245 = vmatprep.subr.bf16.mxu0 0
      %246 = vmatpush1.bf16.msra.mxu0 0
      %247 = vmatprep.subr.bf16.mxu0 0
      %248 = vmatpush1.bf16.msra.mxu0 %v231
      %249 = vmatprep.subr.bf16.mxu0 0
      %250 = vmatpush2.bf16.msra.mxu0 0
      %251 = vmatprep.subr.bf16.mxu0 0
      %252 = vmatpush2.bf16.msra.mxu0 0
      %253 = vmatprep.subr.bf16.mxu0 0
      %254 = vmatpush2.bf16.msra.mxu0 0
      %255 = vmatprep.subr.bf16.mxu0 0
      %256 = vmatpush2.bf16.msra.mxu0 0
      %257 = vmatprep.subr.bf16.mxu0 0
      %258 = vmatpush2.bf16.msra.mxu0 0
      %259 = vmatprep.subr.bf16.mxu0 0
      %260 = vmatpush2.bf16.msra.mxu0 0
      %261 = vmatprep.subr.bf16.mxu0 0
      %262 = vmatpush2.bf16.msra.mxu0 0
      %263 = vmatprep.subr.bf16.mxu0 0
      %264 = vmatpush2.bf16.msra.mxu0 0
      %265 = vmatprep.mubr.bf16.mxu0 0
      %266 = vmatmul.mubr.bf16.gmra.mxu0 %v218
      %v267 = vpop.f32.mrf.mxu0
      %v268 = vadd.f32 0.0, %v267
      %v269 = vpop.f32.mrf.mxu0
      %v270 = vpop.f32.mrf.mxu0
      %v271 = vadd.f32 0.0, %v270
      %v272 = vpop.f32.mrf.mxu0
      %273 = vmatprep.mubr.bf16.mxu0 0
      %274 = vmatmul.mubr.bf16.gmra.mxu0 %v221
      %v275 = vpop.f32.mrf.mxu0
      %v276 = vadd.f32 0.0, %v275
      %v277 = vpop.f32.mrf.mxu0
      %v278 = vpop.f32.mrf.mxu0
      %v279 = vadd.f32 0.0, %v278
      %v280 = vpop.f32.mrf.mxu0
      %281 = vmatprep.mubr.bf16.mxu0 0
      %282 = vmatmul.mubr.bf16.gmra.mxu0 %v224
      %v283 = vpop.f32.mrf.mxu0
      %v284 = vadd.f32 0.0, %v283
      %v285 = vpop.f32.mrf.mxu0
      %v286 = vpop.f32.mrf.mxu0
      %v287 = vadd.f32 0.0, %v286
      %v288 = vpop.f32.mrf.mxu0
      %289 = vmatprep.mubr.bf16.mxu0 0
      %290 = vmatmul.mubr.bf16.gmra.mxu0 %v227
      %v291 = vpop.f32.mrf.mxu0
      %v292 = vadd.f32 0.0, %v291
      %v293 = vpop.f32.mrf.mxu0
      %v294 = vpop.f32.mrf.mxu0
      %v295 = vadd.f32 0.0, %v294
      %v296 = vpop.f32.mrf.mxu0
      %297 = vdwg.mxu0
      %v299 = vsel %vm216, %v196, 0
      %v302 = vsel %vm216, %v197, 0
      %v305 = vsel %vm216, %v198, 0
      %v308 = vsel %vm216, %v199, 0
      %v311 = vsel %vm229, %v200, 0
      %313 = vmatprep.subr.bf16.mxu0 0
      %314 = vmatpush1.bf16.msra.mxu0 0
      %315 = vmatprep.subr.bf16.mxu0 0
      %316 = vmatpush1.bf16.msra.mxu0 0
      %317 = vmatprep.subr.bf16.mxu0 0
      %318 = vmatpush1.bf16.msra.mxu0 0
      %319 = vmatprep.subr.bf16.mxu0 0
      %320 = vmatpush1.bf16.msra.mxu0 0
      %321 = vmatprep.subr.bf16.mxu0 0
      %322 = vmatpush1.bf16.msra.mxu0 0
      %323 = vmatprep.subr.bf16.mxu0 0
      %324 = vmatpush1.bf16.msra.mxu0 0
      %325 = vmatprep.subr.bf16.mxu0 0
      %326 = vmatpush1.bf16.msra.mxu0 0
      %327 = vmatprep.subr.bf16.mxu0 0
      %328 = vmatpush1.bf16.msra.mxu0 %v311
      %329 = vmatprep.subr.bf16.mxu0 0
      %330 = vmatpush2.bf16.msra.mxu0 0
      %331 = vmatprep.subr.bf16.mxu0 0
      %332 = vmatpush2.bf16.msra.mxu0 0
      %333 = vmatprep.subr.bf16.mxu0 0
      %334 = vmatpush2.bf16.msra.mxu0 0
      %335 = vmatprep.subr.bf16.mxu0 0
      %336 = vmatpush2.bf16.msra.mxu0 0
      %337 = vmatprep.subr.bf16.mxu0 0
      %338 = vmatpush2.bf16.msra.mxu0 0
      %339 = vmatprep.subr.bf16.mxu0 0
      %340 = vmatpush2.bf16.msra.mxu0 0
      %341 = vmatprep.subr.bf16.mxu0 0
      %342 = vmatpush2.bf16.msra.mxu0 0
      %343 = vmatprep.subr.bf16.mxu0 0
      %344 = vmatpush2.bf16.msra.mxu0 0
      %345 = vmatprep.mubr.bf16.mxu0 0
      %346 = vmatmul.mubr.bf16.gmra.mxu0 %v299
      %v347 = vpop.f32.mrf.mxu0
      %v348 = vadd.f32 %v268, %v347
      %v349 = vpop.f32.mrf.mxu0
      %v350 = vpop.f32.mrf.mxu0
      %v351 = vadd.f32 %v271, %v350
      %v352 = vpop.f32.mrf.mxu0
      %353 = vmatprep.mubr.bf16.mxu0 0
      %354 = vmatmul.mubr.bf16.gmra.mxu0 %v302
      %v355 = vpop.f32.mrf.mxu0
      %v356 = vadd.f32 %v276, %v355
      %v357 = vpop.f32.mrf.mxu0
      %v358 = vpop.f32.mrf.mxu0
      %v359 = vadd.f32 %v279, %v358
      %v360 = vpop.f32.mrf.mxu0
      %361 = vmatprep.mubr.bf16.mxu0 0
      %362 = vmatmul.mubr.bf16.gmra.mxu0 %v305
      %v363 = vpop.f32.mrf.mxu0
      %v364 = vadd.f32 %v284, %v363
      %v365 = vpop.f32.mrf.mxu0
      %v366 = vpop.f32.mrf.mxu0
      %v367 = vadd.f32 %v287, %v366
      %v368 = vpop.f32.mrf.mxu0
      %369 = vmatprep.mubr.bf16.mxu0 0
      %370 = vmatmul.mubr.bf16.gmra.mxu0 %v308
      %v371 = vpop.f32.mrf.mxu0
      %v372 = vadd.f32 %v292, %v371
      %v373 = vpop.f32.mrf.mxu0
      %v374 = vpop.f32.mrf.mxu0
      %v375 = vadd.f32 %v295, %v374
      %v376 = vpop.f32.mrf.mxu0
      %377 = vdwg.mxu0
      %v378 = vld [vmem:[%s176 + $0x1] sm:$0xff]
      %v379 = vld [vmem:[%s176 + $0x11] sm:$0xff]
      %v380 = vld [vmem:[%s176 + $0x21] sm:$0xff]
      %v381 = vld [vmem:[%s176 + $0x31] sm:$0xff]
      %v382 = vld [vmem:[%s176 + $0x41] sm:$0xff]
      %v383 = vld [vmem:[%s176 + $0x51] sm:$0xff]
      %v384 = vld [vmem:[%s176 + $0x61] sm:$0xff]
      %v385 = vld [vmem:[%s176 + $0x71] sm:$0xff]
      %v386 = vpack.c.bf16 %v379, %v378
      %v387 = vpack.c.bf16 %v381, %v380
      %v388 = vpack.c.bf16 %v383, %v382
      %v389 = vpack.c.bf16 %v385, %v384
      %s390 = scalar_lea.vmem %s1, 4
      %v391 = vld [vmem:[%s390] sm:$0x3]
      %v393 = vsel %vm216, %v386, 0
      %v396 = vsel %vm216, %v387, 0
      %v399 = vsel %vm216, %v388, 0
      %v402 = vsel %vm216, %v389, 0
      %v405 = vsel %vm229, %v391, 0
      %407 = vmatprep.subr.bf16.mxu0 0
      %408 = vmatpush1.bf16.msra.mxu0 0
      %409 = vmatprep.subr.bf16.mxu0 0
      %410 = vmatpush1.bf16.msra.mxu0 0
      %411 = vmatprep.subr.bf16.mxu0 0
      %412 = vmatpush1.bf16.msra.mxu0 0
      %413 = vmatprep.subr.bf16.mxu0 0
      %414 = vmatpush1.bf16.msra.mxu0 0
      %415 = vmatprep.subr.bf16.mxu0 0
      %416 = vmatpush1.bf16.msra.mxu0 0
      %417 = vmatprep.subr.bf16.mxu0 0
      %418 = vmatpush1.bf16.msra.mxu0 0
      %419 = vmatprep.subr.bf16.mxu0 0
      %420 = vmatpush1.bf16.msra.mxu0 0
      %421 = vmatprep.subr.bf16.mxu0 0
      %422 = vmatpush1.bf16.msra.mxu0 %v405
      %423 = vmatprep.subr.bf16.mxu0 0
      %424 = vmatpush2.bf16.msra.mxu0 0
      %425 = vmatprep.subr.bf16.mxu0 0
      %426 = vmatpush2.bf16.msra.mxu0 0
      %427 = vmatprep.subr.bf16.mxu0 0
      %428 = vmatpush2.bf16.msra.mxu0 0
      %429 = vmatprep.subr.bf16.mxu0 0
      %430 = vmatpush2.bf16.msra.mxu0 0
      %431 = vmatprep.subr.bf16.mxu0 0
      %432 = vmatpush2.bf16.msra.mxu0 0
      %433 = vmatprep.subr.bf16.mxu0 0
      %434 = vmatpush2.bf16.msra.mxu0 0
      %435 = vmatprep.subr.bf16.mxu0 0
      %436 = vmatpush2.bf16.msra.mxu0 0
      %437 = vmatprep.subr.bf16.mxu0 0
      %438 = vmatpush2.bf16.msra.mxu0 0
      %439 = vmatprep.mubr.bf16.mxu0 0
      %440 = vmatmul.mubr.bf16.gmra.mxu0 %v393
      %v441 = vpop.f32.mrf.mxu0
      %v442 = vadd.f32 0.0, %v441
      %v443 = vpop.f32.mrf.mxu0
      %v444 = vpop.f32.mrf.mxu0
      %v445 = vadd.f32 0.0, %v444
      %v446 = vpop.f32.mrf.mxu0
      %447 = vmatprep.mubr.bf16.mxu0 0
      %448 = vmatmul.mubr.bf16.gmra.mxu0 %v396
      %v449 = vpop.f32.mrf.mxu0
      %v450 = vadd.f32 0.0, %v449
      %v451 = vpop.f32.mrf.mxu0
      %v452 = vpop.f32.mrf.mxu0
      %v453 = vadd.f32 0.0, %v452
      %v454 = vpop.f32.mrf.mxu0
      %455 = vmatprep.mubr.bf16.mxu0 0
      %456 = vmatmul.mubr.bf16.gmra.mxu0 %v399
      %v457 = vpop.f32.mrf.mxu0
      %v458 = vadd.f32 0.0, %v457
      %v459 = vpop.f32.mrf.mxu0
      %v460 = vpop.f32.mrf.mxu0
      %v461 = vadd.f32 0.0, %v460
      %v462 = vpop.f32.mrf.mxu0
      %463 = vmatprep.mubr.bf16.mxu0 0
      %464 = vmatmul.mubr.bf16.gmra.mxu0 %v402
      %v465 = vpop.f32.mrf.mxu0
      %v466 = vadd.f32 0.0, %v465
      %v467 = vpop.f32.mrf.mxu0
      %v468 = vpop.f32.mrf.mxu0
      %v469 = vadd.f32 0.0, %v468
      %v470 = vpop.f32.mrf.mxu0
      %471 = vdwg.mxu0
      %v472 = vadd.f32 %v348, %v442
      %v473 = vadd.f32 %v351, %v445
      %v474 = vadd.f32 %v356, %v450
      %v475 = vadd.f32 %v359, %v453
      %v476 = vadd.f32 %v364, %v458
      %v477 = vadd.f32 %v367, %v461
      %v478 = vadd.f32 %v372, %v466
      %v479 = vadd.f32 %v375, %v469
      %s480 = scalar_lea.vmem %s176, 288
      %v481 = vld [vmem:[%s480] sm:$0xff]
      %v482 = vld [vmem:[%s480 + $0x10] sm:$0xff]
      %v483 = vld [vmem:[%s480 + $0x20] sm:$0xff]
      %v484 = vld [vmem:[%s480 + $0x30] sm:$0xff]
      %v485 = vld [vmem:[%s480 + $0x40] sm:$0xff]
      %v486 = vld [vmem:[%s480 + $0x50] sm:$0xff]
      %v487 = vld [vmem:[%s480 + $0x60] sm:$0xff]
      %v488 = vld [vmem:[%s480 + $0x70] sm:$0xff]
      %v489 = vpack.c.bf16 %v482, %v481
      %v490 = vpack.c.bf16 %v484, %v483
      %v491 = vpack.c.bf16 %v486, %v485
      %v492 = vpack.c.bf16 %v488, %v487
      %s493 = scalar_lea.vmem %s1, 6
      %v494 = vld [vmem:[%s493] sm:$0x3]
      %v496 = vsel %vm216, %v489, 0
      %v499 = vsel %vm216, %v490, 0
      %v502 = vsel %vm216, %v491, 0
      %v505 = vsel %vm216, %v492, 0
      %v508 = vsel %vm229, %v494, 0
      %510 = vmatprep.subr.bf16.mxu0 0
      %511 = vmatpush1.bf16.msra.mxu0 0
      %512 = vmatprep.subr.bf16.mxu0 0
      %513 = vmatpush1.bf16.msra.mxu0 0
      %514 = vmatprep.subr.bf16.mxu0 0
      %515 = vmatpush1.bf16.msra.mxu0 0
      %516 = vmatprep.subr.bf16.mxu0 0
      %517 = vmatpush1.bf16.msra.mxu0 0
      %518 = vmatprep.subr.bf16.mxu0 0
      %519 = vmatpush1.bf16.msra.mxu0 0
      %520 = vmatprep.subr.bf16.mxu0 0
      %521 = vmatpush1.bf16.msra.mxu0 0
      %522 = vmatprep.subr.bf16.mxu0 0
      %523 = vmatpush1.bf16.msra.mxu0 0
      %524 = vmatprep.subr.bf16.mxu0 0
      %525 = vmatpush1.bf16.msra.mxu0 %v508
      %526 = vmatprep.subr.bf16.mxu0 0
      %527 = vmatpush2.bf16.msra.mxu0 0
      %528 = vmatprep.subr.bf16.mxu0 0
      %529 = vmatpush2.bf16.msra.mxu0 0
      %530 = vmatprep.subr.bf16.mxu0 0
      %531 = vmatpush2.bf16.msra.mxu0 0
      %532 = vmatprep.subr.bf16.mxu0 0
      %533 = vmatpush2.bf16.msra.mxu0 0
      %534 = vmatprep.subr.bf16.mxu0 0
      %535 = vmatpush2.bf16.msra.mxu0 0
      %536 = vmatprep.subr.bf16.mxu0 0
      %537 = vmatpush2.bf16.msra.mxu0 0
      %538 = vmatprep.subr.bf16.mxu0 0
      %539 = vmatpush2.bf16.msra.mxu0 0
      %540 = vmatprep.subr.bf16.mxu0 0
      %541 = vmatpush2.bf16.msra.mxu0 0
      %542 = vmatprep.mubr.bf16.mxu0 0
      %543 = vmatmul.mubr.bf16.gmra.mxu0 %v496
      %v544 = vpop.f32.mrf.mxu0
      %v545 = vadd.f32 0.0, %v544
      %v546 = vpop.f32.mrf.mxu0
      %v547 = vpop.f32.mrf.mxu0
      %v548 = vadd.f32 0.0, %v547
      %v549 = vpop.f32.mrf.mxu0
      %550 = vmatprep.mubr.bf16.mxu0 0
      %551 = vmatmul.mubr.bf16.gmra.mxu0 %v499
      %v552 = vpop.f32.mrf.mxu0
      %v553 = vadd.f32 0.0, %v552
      %v554 = vpop.f32.mrf.mxu0
      %v555 = vpop.f32.mrf.mxu0
      %v556 = vadd.f32 0.0, %v555
      %v557 = vpop.f32.mrf.mxu0
      %558 = vmatprep.mubr.bf16.mxu0 0
      %559 = vmatmul.mubr.bf16.gmra.mxu0 %v502
      %v560 = vpop.f32.mrf.mxu0
      %v561 = vadd.f32 0.0, %v560
      %v562 = vpop.f32.mrf.mxu0
      %v563 = vpop.f32.mrf.mxu0
      %v564 = vadd.f32 0.0, %v563
      %v565 = vpop.f32.mrf.mxu0
      %566 = vmatprep.mubr.bf16.mxu0 0
      %567 = vmatmul.mubr.bf16.gmra.mxu0 %v505
      %v568 = vpop.f32.mrf.mxu0
      %v569 = vadd.f32 0.0, %v568
      %v570 = vpop.f32.mrf.mxu0
      %v571 = vpop.f32.mrf.mxu0
      %v572 = vadd.f32 0.0, %v571
      %v573 = vpop.f32.mrf.mxu0
      %574 = vdwg.mxu0
      %v575 = vadd.f32 %v472, %v545
      %v576 = vadd.f32 %v473, %v548
      %v577 = vadd.f32 %v474, %v553
      %v578 = vadd.f32 %v475, %v556
      %v579 = vadd.f32 %v476, %v561
      %v580 = vadd.f32 %v477, %v564
      %v581 = vadd.f32 %v478, %v569
      %v582 = vadd.f32 %v479, %v572
      %s583 = scalar_lea.vmem %s176, 432
      %v584 = vld [vmem:[%s583] sm:$0xff]
      %v585 = vld [vmem:[%s583 + $0x10] sm:$0xff]
      %v586 = vld [vmem:[%s583 + $0x20] sm:$0xff]
      %v587 = vld [vmem:[%s583 + $0x30] sm:$0xff]
      %v588 = vld [vmem:[%s583 + $0x40] sm:$0xff]
      %v589 = vld [vmem:[%s583 + $0x50] sm:$0xff]
      %v590 = vld [vmem:[%s583 + $0x60] sm:$0xff]
      %v591 = vld [vmem:[%s583 + $0x70] sm:$0xff]
      %v592 = vpack.c.bf16 %v585, %v584
      %v593 = vpack.c.bf16 %v587, %v586
      %v594 = vpack.c.bf16 %v589, %v588
      %v595 = vpack.c.bf16 %v591, %v590
      %s596 = scalar_lea.vmem %s1, 8
      %v597 = vld [vmem:[%s596] sm:$0x3]
      %v599 = vsel %vm216, %v592, 0
      %v602 = vsel %vm216, %v593, 0
      %v605 = vsel %vm216, %v594, 0
      %v608 = vsel %vm216, %v595, 0
      %v611 = vsel %vm229, %v597, 0
      %613 = vmatprep.subr.bf16.mxu0 0
      %614 = vmatpush1.bf16.msra.mxu0 0
      %615 = vmatprep.subr.bf16.mxu0 0
      %616 = vmatpush1.bf16.msra.mxu0 0
      %617 = vmatprep.subr.bf16.mxu0 0
      %618 = vmatpush1.bf16.msra.mxu0 0
      %619 = vmatprep.subr.bf16.mxu0 0
      %620 = vmatpush1.bf16.msra.mxu0 0
      %621 = vmatprep.subr.bf16.mxu0 0
      %622 = vmatpush1.bf16.msra.mxu0 0
      %623 = vmatprep.subr.bf16.mxu0 0
      %624 = vmatpush1.bf16.msra.mxu0 0
      %625 = vmatprep.subr.bf16.mxu0 0
      %626 = vmatpush1.bf16.msra.mxu0 0
      %627 = vmatprep.subr.bf16.mxu0 0
      %628 = vmatpush1.bf16.msra.mxu0 %v611
      %629 = vmatprep.subr.bf16.mxu0 0
      %630 = vmatpush2.bf16.msra.mxu0 0
      %631 = vmatprep.subr.bf16.mxu0 0
      %632 = vmatpush2.bf16.msra.mxu0 0
      %633 = vmatprep.subr.bf16.mxu0 0
      %634 = vmatpush2.bf16.msra.mxu0 0
      %635 = vmatprep.subr.bf16.mxu0 0
      %636 = vmatpush2.bf16.msra.mxu0 0
      %637 = vmatprep.subr.bf16.mxu0 0
      %638 = vmatpush2.bf16.msra.mxu0 0
      %639 = vmatprep.subr.bf16.mxu0 0
      %640 = vmatpush2.bf16.msra.mxu0 0
      %641 = vmatprep.subr.bf16.mxu0 0
      %642 = vmatpush2.bf16.msra.mxu0 0
      %643 = vmatprep.subr.bf16.mxu0 0
      %644 = vmatpush2.bf16.msra.mxu0 0
      %645 = vmatprep.mubr.bf16.mxu0 0
      %646 = vmatmul.mubr.bf16.gmra.mxu0 %v599
      %v647 = vpop.f32.mrf.mxu0
      %v648 = vadd.f32 0.0, %v647
      %v649 = vpop.f32.mrf.mxu0
      %v650 = vpop.f32.mrf.mxu0
      %v651 = vadd.f32 0.0, %v650
      %v652 = vpop.f32.mrf.mxu0
      %653 = vmatprep.mubr.bf16.mxu0 0
      %654 = vmatmul.mubr.bf16.gmra.mxu0 %v602
      %v655 = vpop.f32.mrf.mxu0
      %v656 = vadd.f32 0.0, %v655
      %v657 = vpop.f32.mrf.mxu0
      %v658 = vpop.f32.mrf.mxu0
      %v659 = vadd.f32 0.0, %v658
      %v660 = vpop.f32.mrf.mxu0
      %661 = vmatprep.mubr.bf16.mxu0 0
      %662 = vmatmul.mubr.bf16.gmra.mxu0 %v605
      %v663 = vpop.f32.mrf.mxu0
      %v664 = vadd.f32 0.0, %v663
      %v665 = vpop.f32.mrf.mxu0
      %v666 = vpop.f32.mrf.mxu0
      %v667 = vadd.f32 0.0, %v666
      %v668 = vpop.f32.mrf.mxu0
      %669 = vmatprep.mubr.bf16.mxu0 0
      %670 = vmatmul.mubr.bf16.gmra.mxu0 %v608
      %v671 = vpop.f32.mrf.mxu0
      %v672 = vadd.f32 0.0, %v671
      %v673 = vpop.f32.mrf.mxu0
      %v674 = vpop.f32.mrf.mxu0
      %v675 = vadd.f32 0.0, %v674
      %v676 = vpop.f32.mrf.mxu0
      %677 = vdwg.mxu0
      %v678 = vadd.f32 %v575, %v648
      %v679 = vadd.f32 %v576, %v651
      %v680 = vadd.f32 %v577, %v656
      %v681 = vadd.f32 %v578, %v659
      %v682 = vadd.f32 %v579, %v664
      %v683 = vadd.f32 %v580, %v667
      %v684 = vadd.f32 %v581, %v672
      %v685 = vadd.f32 %v582, %v675
      %v686 = vld [vmem:[%s480 + $0x1] sm:$0xff]
      %v687 = vld [vmem:[%s480 + $0x11] sm:$0xff]
      %v688 = vld [vmem:[%s480 + $0x21] sm:$0xff]
      %v689 = vld [vmem:[%s480 + $0x31] sm:$0xff]
      %v690 = vld [vmem:[%s480 + $0x41] sm:$0xff]
      %v691 = vld [vmem:[%s480 + $0x51] sm:$0xff]
      %v692 = vld [vmem:[%s480 + $0x61] sm:$0xff]
      %v693 = vld [vmem:[%s480 + $0x71] sm:$0xff]
      %v694 = vpack.c.bf16 %v687, %v686
      %v695 = vpack.c.bf16 %v689, %v688
      %v696 = vpack.c.bf16 %v691, %v690
      %v697 = vpack.c.bf16 %v693, %v692
      %s698 = scalar_lea.vmem %s1, 10
      %v699 = vld [vmem:[%s698] sm:$0x3]
      %v701 = vsel %vm216, %v694, 0
      %v704 = vsel %vm216, %v695, 0
      %v707 = vsel %vm216, %v696, 0
      %v710 = vsel %vm216, %v697, 0
      %v713 = vsel %vm229, %v699, 0
      %715 = vmatprep.subr.bf16.mxu0 0
      %716 = vmatpush1.bf16.msra.mxu0 0
      %717 = vmatprep.subr.bf16.mxu0 0
      %718 = vmatpush1.bf16.msra.mxu0 0
      %719 = vmatprep.subr.bf16.mxu0 0
      %720 = vmatpush1.bf16.msra.mxu0 0
      %721 = vmatprep.subr.bf16.mxu0 0
      %722 = vmatpush1.bf16.msra.mxu0 0
      %723 = vmatprep.subr.bf16.mxu0 0
      %724 = vmatpush1.bf16.msra.mxu0 0
      %725 = vmatprep.subr.bf16.mxu0 0
      %726 = vmatpush1.bf16.msra.mxu0 0
      %727 = vmatprep.subr.bf16.mxu0 0
      %728 = vmatpush1.bf16.msra.mxu0 0
      %729 = vmatprep.subr.bf16.mxu0 0
      %730 = vmatpush1.bf16.msra.mxu0 %v713
      %731 = vmatprep.subr.bf16.mxu0 0
      %732 = vmatpush2.bf16.msra.mxu0 0
      %733 = vmatprep.subr.bf16.mxu0 0
      %734 = vmatpush2.bf16.msra.mxu0 0
      %735 = vmatprep.subr.bf16.mxu0 0
      %736 = vmatpush2.bf16.msra.mxu0 0
      %737 = vmatprep.subr.bf16.mxu0 0
      %738 = vmatpush2.bf16.msra.mxu0 0
      %739 = vmatprep.subr.bf16.mxu0 0
      %740 = vmatpush2.bf16.msra.mxu0 0
      %741 = vmatprep.subr.bf16.mxu0 0
      %742 = vmatpush2.bf16.msra.mxu0 0
      %743 = vmatprep.subr.bf16.mxu0 0
      %744 = vmatpush2.bf16.msra.mxu0 0
      %745 = vmatprep.subr.bf16.mxu0 0
      %746 = vmatpush2.bf16.msra.mxu0 0
      %747 = vmatprep.mubr.bf16.mxu0 0
      %748 = vmatmul.mubr.bf16.gmra.mxu0 %v701
      %v749 = vpop.f32.mrf.mxu0
      %v750 = vadd.f32 0.0, %v749
      %v751 = vpop.f32.mrf.mxu0
      %v752 = vpop.f32.mrf.mxu0
      %v753 = vadd.f32 0.0, %v752
      %v754 = vpop.f32.mrf.mxu0
      %755 = vmatprep.mubr.bf16.mxu0 0
      %756 = vmatmul.mubr.bf16.gmra.mxu0 %v704
      %v757 = vpop.f32.mrf.mxu0
      %v758 = vadd.f32 0.0, %v757
      %v759 = vpop.f32.mrf.mxu0
      %v760 = vpop.f32.mrf.mxu0
      %v761 = vadd.f32 0.0, %v760
      %v762 = vpop.f32.mrf.mxu0
      %763 = vmatprep.mubr.bf16.mxu0 0
      %764 = vmatmul.mubr.bf16.gmra.mxu0 %v707
      %v765 = vpop.f32.mrf.mxu0
      %v766 = vadd.f32 0.0, %v765
      %v767 = vpop.f32.mrf.mxu0
      %v768 = vpop.f32.mrf.mxu0
      %v769 = vadd.f32 0.0, %v768
      %v770 = vpop.f32.mrf.mxu0
      %771 = vmatprep.mubr.bf16.mxu0 0
      %772 = vmatmul.mubr.bf16.gmra.mxu0 %v710
      %v773 = vpop.f32.mrf.mxu0
      %v774 = vadd.f32 0.0, %v773
      %v775 = vpop.f32.mrf.mxu0
      %v776 = vpop.f32.mrf.mxu0
      %v777 = vadd.f32 0.0, %v776
      %v778 = vpop.f32.mrf.mxu0
      %779 = vdwg.mxu0
      %v780 = vadd.f32 %v678, %v750
      %v781 = vadd.f32 %v679, %v753
      %v782 = vadd.f32 %v680, %v758
      %v783 = vadd.f32 %v681, %v761
      %v784 = vadd.f32 %v682, %v766
      %v785 = vadd.f32 %v683, %v769
      %v786 = vadd.f32 %v684, %v774
      %v787 = vadd.f32 %v685, %v777
      %s788 = scalar_lea.vmem %s176, 16
      %v789 = vld [vmem:[%s788] sm:$0xff]
      %v790 = vld [vmem:[%s788 + $0x10] sm:$0xff]
      %v791 = vld [vmem:[%s788 + $0x20] sm:$0xff]
      %v792 = vld [vmem:[%s788 + $0x30] sm:$0xff]
      %v793 = vld [vmem:[%s788 + $0x40] sm:$0xff]
      %v794 = vld [vmem:[%s788 + $0x50] sm:$0xff]
      %v795 = vld [vmem:[%s788 + $0x60] sm:$0xff]
      %v796 = vld [vmem:[%s788 + $0x70] sm:$0xff]
      %v797 = vpack.c.bf16 %v790, %v789
      %v798 = vpack.c.bf16 %v792, %v791
      %v799 = vpack.c.bf16 %v794, %v793
      %v800 = vpack.c.bf16 %v796, %v795
      %s801 = scalar_lea.vmem %s1, 12
      %v802 = vld [vmem:[%s801] sm:$0x3]
      %v804 = vsel %vm216, %v797, 0
      %v807 = vsel %vm216, %v798, 0
      %v810 = vsel %vm216, %v799, 0
      %v813 = vsel %vm216, %v800, 0
      %v816 = vsel %vm229, %v802, 0
      %818 = vmatprep.subr.bf16.mxu0 0
      %819 = vmatpush1.bf16.msra.mxu0 0
      %820 = vmatprep.subr.bf16.mxu0 0
      %821 = vmatpush1.bf16.msra.mxu0 0
      %822 = vmatprep.subr.bf16.mxu0 0
      %823 = vmatpush1.bf16.msra.mxu0 0
      %824 = vmatprep.subr.bf16.mxu0 0
      %825 = vmatpush1.bf16.msra.mxu0 0
      %826 = vmatprep.subr.bf16.mxu0 0
      %827 = vmatpush1.bf16.msra.mxu0 0
      %828 = vmatprep.subr.bf16.mxu0 0
      %829 = vmatpush1.bf16.msra.mxu0 0
      %830 = vmatprep.subr.bf16.mxu0 0
      %831 = vmatpush1.bf16.msra.mxu0 0
      %832 = vmatprep.subr.bf16.mxu0 0
      %833 = vmatpush1.bf16.msra.mxu0 %v816
      %834 = vmatprep.subr.bf16.mxu0 0
      %835 = vmatpush2.bf16.msra.mxu0 0
      %836 = vmatprep.subr.bf16.mxu0 0
      %837 = vmatpush2.bf16.msra.mxu0 0
      %838 = vmatprep.subr.bf16.mxu0 0
      %839 = vmatpush2.bf16.msra.mxu0 0
      %840 = vmatprep.subr.bf16.mxu0 0
      %841 = vmatpush2.bf16.msra.mxu0 0
      %842 = vmatprep.subr.bf16.mxu0 0
      %843 = vmatpush2.bf16.msra.mxu0 0
      %844 = vmatprep.subr.bf16.mxu0 0
      %845 = vmatpush2.bf16.msra.mxu0 0
      %846 = vmatprep.subr.bf16.mxu0 0
      %847 = vmatpush2.bf16.msra.mxu0 0
      %848 = vmatprep.subr.bf16.mxu0 0
      %849 = vmatpush2.bf16.msra.mxu0 0
      %850 = vmatprep.mubr.bf16.mxu0 0
      %851 = vmatmul.mubr.bf16.gmra.mxu0 %v804
      %v852 = vpop.f32.mrf.mxu0
      %v853 = vadd.f32 0.0, %v852
      %v854 = vpop.f32.mrf.mxu0
      %v855 = vpop.f32.mrf.mxu0
      %v856 = vadd.f32 0.0, %v855
      %v857 = vpop.f32.mrf.mxu0
      %858 = vmatprep.mubr.bf16.mxu0 0
      %859 = vmatmul.mubr.bf16.gmra.mxu0 %v807
      %v860 = vpop.f32.mrf.mxu0
      %v861 = vadd.f32 0.0, %v860
      %v862 = vpop.f32.mrf.mxu0
      %v863 = vpop.f32.mrf.mxu0
      %v864 = vadd.f32 0.0, %v863
      %v865 = vpop.f32.mrf.mxu0
      %866 = vmatprep.mubr.bf16.mxu0 0
      %867 = vmatmul.mubr.bf16.gmra.mxu0 %v810
      %v868 = vpop.f32.mrf.mxu0
      %v869 = vadd.f32 0.0, %v868
      %v870 = vpop.f32.mrf.mxu0
      %v871 = vpop.f32.mrf.mxu0
      %v872 = vadd.f32 0.0, %v871
      %v873 = vpop.f32.mrf.mxu0
      %874 = vmatprep.mubr.bf16.mxu0 0
      %875 = vmatmul.mubr.bf16.gmra.mxu0 %v813
      %v876 = vpop.f32.mrf.mxu0
      %v877 = vadd.f32 0.0, %v876
      %v878 = vpop.f32.mrf.mxu0
      %v879 = vpop.f32.mrf.mxu0
      %v880 = vadd.f32 0.0, %v879
      %v881 = vpop.f32.mrf.mxu0
      %882 = vdwg.mxu0
      %v883 = vadd.f32 %v780, %v853
      %v884 = vadd.f32 %v781, %v856
      %v885 = vadd.f32 %v782, %v861
      %v886 = vadd.f32 %v783, %v864
      %v887 = vadd.f32 %v784, %v869
      %v888 = vadd.f32 %v785, %v872
      %v889 = vadd.f32 %v786, %v877
      %v890 = vadd.f32 %v787, %v880
      %s891 = scalar_lea.vmem %s176, 160
      %v892 = vld [vmem:[%s891] sm:$0xff]
      %v893 = vld [vmem:[%s891 + $0x10] sm:$0xff]
      %v894 = vld [vmem:[%s891 + $0x20] sm:$0xff]
      %v895 = vld [vmem:[%s891 + $0x30] sm:$0xff]
      %v896 = vld [vmem:[%s891 + $0x40] sm:$0xff]
      %v897 = vld [vmem:[%s891 + $0x50] sm:$0xff]
      %v898 = vld [vmem:[%s891 + $0x60] sm:$0xff]
      %v899 = vld [vmem:[%s891 + $0x70] sm:$0xff]
      %v900 = vpack.c.bf16 %v893, %v892
      %v901 = vpack.c.bf16 %v895, %v894
      %v902 = vpack.c.bf16 %v897, %v896
      %v903 = vpack.c.bf16 %v899, %v898
      %s904 = scalar_lea.vmem %s1, 14
      %v905 = vld [vmem:[%s904] sm:$0x3]
      %v907 = vsel %vm216, %v900, 0
      %v910 = vsel %vm216, %v901, 0
      %v913 = vsel %vm216, %v902, 0
      %v916 = vsel %vm216, %v903, 0
      %v919 = vsel %vm229, %v905, 0
      %921 = vmatprep.subr.bf16.mxu0 0
      %922 = vmatpush1.bf16.msra.mxu0 0
      %923 = vmatprep.subr.bf16.mxu0 0
      %924 = vmatpush1.bf16.msra.mxu0 0
      %925 = vmatprep.subr.bf16.mxu0 0
      %926 = vmatpush1.bf16.msra.mxu0 0
      %927 = vmatprep.subr.bf16.mxu0 0
      %928 = vmatpush1.bf16.msra.mxu0 0
      %929 = vmatprep.subr.bf16.mxu0 0
      %930 = vmatpush1.bf16.msra.mxu0 0
      %931 = vmatprep.subr.bf16.mxu0 0
      %932 = vmatpush1.bf16.msra.mxu0 0
      %933 = vmatprep.subr.bf16.mxu0 0
      %934 = vmatpush1.bf16.msra.mxu0 0
      %935 = vmatprep.subr.bf16.mxu0 0
      %936 = vmatpush1.bf16.msra.mxu0 %v919
      %937 = vmatprep.subr.bf16.mxu0 0
      %938 = vmatpush2.bf16.msra.mxu0 0
      %939 = vmatprep.subr.bf16.mxu0 0
      %940 = vmatpush2.bf16.msra.mxu0 0
      %941 = vmatprep.subr.bf16.mxu0 0
      %942 = vmatpush2.bf16.msra.mxu0 0
      %943 = vmatprep.subr.bf16.mxu0 0
      %944 = vmatpush2.bf16.msra.mxu0 0
      %945 = vmatprep.subr.bf16.mxu0 0
      %946 = vmatpush2.bf16.msra.mxu0 0
      %947 = vmatprep.subr.bf16.mxu0 0
      %948 = vmatpush2.bf16.msra.mxu0 0
      %949 = vmatprep.subr.bf16.mxu0 0
      %950 = vmatpush2.bf16.msra.mxu0 0
      %951 = vmatprep.subr.bf16.mxu0 0
      %952 = vmatpush2.bf16.msra.mxu0 0
      %953 = vmatprep.mubr.bf16.mxu0 0
      %954 = vmatmul.mubr.bf16.gmra.mxu0 %v907
      %v955 = vpop.f32.mrf.mxu0
      %v956 = vadd.f32 0.0, %v955
      %v957 = vpop.f32.mrf.mxu0
      %v958 = vpop.f32.mrf.mxu0
      %v959 = vadd.f32 0.0, %v958
      %v960 = vpop.f32.mrf.mxu0
      %961 = vmatprep.mubr.bf16.mxu0 0
      %962 = vmatmul.mubr.bf16.gmra.mxu0 %v910
      %v963 = vpop.f32.mrf.mxu0
      %v964 = vadd.f32 0.0, %v963
      %v965 = vpop.f32.mrf.mxu0
      %v966 = vpop.f32.mrf.mxu0
      %v967 = vadd.f32 0.0, %v966
      %v968 = vpop.f32.mrf.mxu0
      %969 = vmatprep.mubr.bf16.mxu0 0
      %970 = vmatmul.mubr.bf16.gmra.mxu0 %v913
      %v971 = vpop.f32.mrf.mxu0
      %v972 = vadd.f32 0.0, %v971
      %v973 = vpop.f32.mrf.mxu0
      %v974 = vpop.f32.mrf.mxu0
      %v975 = vadd.f32 0.0, %v974
      %v976 = vpop.f32.mrf.mxu0
      %977 = vmatprep.mubr.bf16.mxu0 0
      %978 = vmatmul.mubr.bf16.gmra.mxu0 %v916
      %v979 = vpop.f32.mrf.mxu0
      %v980 = vadd.f32 0.0, %v979
      %v981 = vpop.f32.mrf.mxu0
      %v982 = vpop.f32.mrf.mxu0
      %v983 = vadd.f32 0.0, %v982
      %v984 = vpop.f32.mrf.mxu0
      %985 = vdwg.mxu0
      %v986 = vadd.f32 %v883, %v956
      %v987 = vadd.f32 %v884, %v959
      %v988 = vadd.f32 %v885, %v964
      %v989 = vadd.f32 %v886, %v967
      %v990 = vadd.f32 %v887, %v972
      %v991 = vadd.f32 %v888, %v975
      %v992 = vadd.f32 %v889, %v980
      %v993 = vadd.f32 %v890, %v983
      %v994 = vld [vmem:[%s788 + $0x1] sm:$0xff]
      %v995 = vld [vmem:[%s788 + $0x11] sm:$0xff]
      %v996 = vld [vmem:[%s788 + $0x21] sm:$0xff]
      %v997 = vld [vmem:[%s788 + $0x31] sm:$0xff]
      %v998 = vld [vmem:[%s788 + $0x41] sm:$0xff]
      %v999 = vld [vmem:[%s788 + $0x51] sm:$0xff]
      %v1000 = vld [vmem:[%s788 + $0x61] sm:$0xff]
      %v1001 = vld [vmem:[%s788 + $0x71] sm:$0xff]
      %v1002 = vpack.c.bf16 %v995, %v994
      %v1003 = vpack.c.bf16 %v997, %v996
      %v1004 = vpack.c.bf16 %v999, %v998
      %v1005 = vpack.c.bf16 %v1001, %v1000
      %s1006 = scalar_lea.vmem %s1, 16
      %v1007 = vld [vmem:[%s1006] sm:$0x3]
      %v1009 = vsel %vm216, %v1002, 0
      %v1012 = vsel %vm216, %v1003, 0
      %v1015 = vsel %vm216, %v1004, 0
      %v1018 = vsel %vm216, %v1005, 0
      %v1021 = vsel %vm229, %v1007, 0
      %1023 = vmatprep.subr.bf16.mxu0 0
      %1024 = vmatpush1.bf16.msra.mxu0 0
      %1025 = vmatprep.subr.bf16.mxu0 0
      %1026 = vmatpush1.bf16.msra.mxu0 0
      %1027 = vmatprep.subr.bf16.mxu0 0
      %1028 = vmatpush1.bf16.msra.mxu0 0
      %1029 = vmatprep.subr.bf16.mxu0 0
      %1030 = vmatpush1.bf16.msra.mxu0 0
      %1031 = vmatprep.subr.bf16.mxu0 0
      %1032 = vmatpush1.bf16.msra.mxu0 0
      %1033 = vmatprep.subr.bf16.mxu0 0
      %1034 = vmatpush1.bf16.msra.mxu0 0
      %1035 = vmatprep.subr.bf16.mxu0 0
      %1036 = vmatpush1.bf16.msra.mxu0 0
      %1037 = vmatprep.subr.bf16.mxu0 0
      %1038 = vmatpush1.bf16.msra.mxu0 %v1021
      %1039 = vmatprep.subr.bf16.mxu0 0
      %1040 = vmatpush2.bf16.msra.mxu0 0
      %1041 = vmatprep.subr.bf16.mxu0 0
      %1042 = vmatpush2.bf16.msra.mxu0 0
      %1043 = vmatprep.subr.bf16.mxu0 0
      %1044 = vmatpush2.bf16.msra.mxu0 0
      %1045 = vmatprep.subr.bf16.mxu0 0
      %1046 = vmatpush2.bf16.msra.mxu0 0
      %1047 = vmatprep.subr.bf16.mxu0 0
      %1048 = vmatpush2.bf16.msra.mxu0 0
      %1049 = vmatprep.subr.bf16.mxu0 0
      %1050 = vmatpush2.bf16.msra.mxu0 0
      %1051 = vmatprep.subr.bf16.mxu0 0
      %1052 = vmatpush2.bf16.msra.mxu0 0
      %1053 = vmatprep.subr.bf16.mxu0 0
      %1054 = vmatpush2.bf16.msra.mxu0 0
      %1055 = vmatprep.mubr.bf16.mxu0 0
      %1056 = vmatmul.mubr.bf16.gmra.mxu0 %v1009
      %v1057 = vpop.f32.mrf.mxu0
      %v1058 = vadd.f32 0.0, %v1057
      %v1059 = vpop.f32.mrf.mxu0
      %v1060 = vpop.f32.mrf.mxu0
      %v1061 = vadd.f32 0.0, %v1060
      %v1062 = vpop.f32.mrf.mxu0
      %1063 = vmatprep.mubr.bf16.mxu0 0
      %1064 = vmatmul.mubr.bf16.gmra.mxu0 %v1012
      %v1065 = vpop.f32.mrf.mxu0
      %v1066 = vadd.f32 0.0, %v1065
      %v1067 = vpop.f32.mrf.mxu0
      %v1068 = vpop.f32.mrf.mxu0
      %v1069 = vadd.f32 0.0, %v1068
      %v1070 = vpop.f32.mrf.mxu0
      %1071 = vmatprep.mubr.bf16.mxu0 0
      %1072 = vmatmul.mubr.bf16.gmra.mxu0 %v1015
      %v1073 = vpop.f32.mrf.mxu0
      %v1074 = vadd.f32 0.0, %v1073
      %v1075 = vpop.f32.mrf.mxu0
      %v1076 = vpop.f32.mrf.mxu0
      %v1077 = vadd.f32 0.0, %v1076
      %v1078 = vpop.f32.mrf.mxu0
      %1079 = vmatprep.mubr.bf16.mxu0 0
      %1080 = vmatmul.mubr.bf16.gmra.mxu0 %v1018
      %v1081 = vpop.f32.mrf.mxu0
      %v1082 = vadd.f32 0.0, %v1081
      %v1083 = vpop.f32.mrf.mxu0
      %v1084 = vpop.f32.mrf.mxu0
      %v1085 = vadd.f32 0.0, %v1084
      %v1086 = vpop.f32.mrf.mxu0
      %1087 = vdwg.mxu0
      %v1088 = vadd.f32 %v986, %v1058
      %v1089 = vadd.f32 %v987, %v1061
      %v1090 = vadd.f32 %v988, %v1066
      %v1091 = vadd.f32 %v989, %v1069
      %v1092 = vadd.f32 %v990, %v1074
      %v1093 = vadd.f32 %v991, %v1077
      %v1094 = vadd.f32 %v992, %v1082
      %v1095 = vadd.f32 %v993, %v1085
      %1096 = vst [vmem:[%s182] sm:$0xff] %v1088
      %1097 = vst [vmem:[%s182 + $0x8] sm:$0xff] %v1089
      %1098 = vst [vmem:[%s182 + $0x10] sm:$0xff] %v1090
      %1099 = vst [vmem:[%s182 + $0x18] sm:$0xff] %v1091
      %1100 = vst [vmem:[%s182 + $0x20] sm:$0xff] %v1092
      %1101 = vst [vmem:[%s182 + $0x28] sm:$0xff] %v1093
      %1102 = vst [vmem:[%s182 + $0x30] sm:$0xff] %v1094
      %1103 = vst [vmem:[%s182 + $0x38] sm:$0xff] %v1095
      %v1104 = vadd.f32 %v1088, %v1089
      %v1105 = vadd.f32 %v1104, %v1090
      %v1106 = vadd.f32 %v1105, %v1091
      %v1107 = vadd.f32 %v1106, %v1092
      %v1108 = vadd.f32 %v1107, %v1093
      %v1109 = vadd.f32 %v1108, %v1094
      %v1110 = vadd.f32 %v1109, %v1095
      %v1111 = vrot.slane %v1110, 4
      %v1112 = vadd.f32 %v1110, %v1111
      %v1113 = vrot.slane %v1112, 2
      %v1114 = vadd.f32 %v1112, %v1113
      %v1115 = vrot.slane %v1114, 1
      %v1116 = vadd.f32 %v1114, %v1115
      %v1117 = vmul.f32 %v1088, %v1088
      %v1118 = vmul.f32 %v1089, %v1089
      %v1119 = vmul.f32 %v1090, %v1090
      %v1120 = vmul.f32 %v1091, %v1091
      %v1121 = vmul.f32 %v1092, %v1092
      %v1122 = vmul.f32 %v1093, %v1093
      %v1123 = vmul.f32 %v1094, %v1094
      %v1124 = vmul.f32 %v1095, %v1095
      %v1125 = vadd.f32 %v1117, %v1118
      %v1126 = vadd.f32 %v1125, %v1119
      %v1127 = vadd.f32 %v1126, %v1120
      %v1128 = vadd.f32 %v1127, %v1121
      %v1129 = vadd.f32 %v1128, %v1122
      %v1130 = vadd.f32 %v1129, %v1123
      %v1131 = vadd.f32 %v1130, %v1124
      %v1132 = vrot.slane %v1131, 4
      %v1133 = vadd.f32 %v1131, %v1132
      %v1134 = vrot.slane %v1133, 2
      %v1135 = vadd.f32 %v1133, %v1134
      %v1136 = vrot.slane %v1135, 1
      %v1137 = vadd.f32 %v1135, %v1136
      %vm1138 = vcmask 1040384
      %v1139 = vsel %vm1138, %v1116, %v1137
      %1140 = vst [vmem:[%s186] sm:$0x3] %v1139
      %p1141 = scmp.lt.s32.totalorder %s15, 1
      %s1142 = scalar_select %p1141, %s15, 1
      %s1143 = smul.addr %s1142, 8
      %s1144 = smul.addr %s1143, 8
      %s1145 = scalar_lea.vmem %s2, %s1144
      %p1146 = scmp.lt.s32.totalorder %s15, 1
      %s1147 = scalar_select %p1146, %s15, 1
      %s1148 = smul.addr %s1147, 2
      %s1149 = scalar_lea.vmem %s3, %s1148
      // Predicated region
      $region29: #{residual_block_forward.4} parent=27 // pred_check
        %p1150 = pneg %p80
      $region30: #{residual_block_forward.4} parent=27 // pred_check_branch
        %1152 = sbr.rel (%p1150) target = $region32
      $region31: #{residual_block_forward.4} parent=27 // pred_region
        _
      $region32: #{residual_block_forward.4} parent=27 // pred_fallthru
        _
      // Predicated region
      $region33: #{residual_block_forward.4} parent=27 // pred_check
        %p1153 = pneg %p106
      $region34: #{residual_block_forward.4} parent=27 // pred_check_branch
        %1155 = sbr.rel (%p1153) target = $region36
      $region35: #{residual_block_forward.4} parent=27 // pred_region
        _
      $region36: #{residual_block_forward.4} parent=27 // pred_fallthru
        _
    $region28: #{residual_block_forward.4} parent=5 // pred_fallthru
      _
    %p1156 = scmp.le.s32.totalorder 2, %s10
    // Predicated region
    $region37: #{residual_block_forward.4} parent=5 // pred_check
      %p1157 = pneg %p1156
    $region38: #{residual_block_forward.4} parent=5 // pred_check_branch
      %1159 = sbr.rel (%p1157) target = $region40
    $region39: #{residual_block_forward.4} parent=5 // pred_region
      %s1160 = ssub.s32 %s10, 2
      // Predicated region
      $region41: #{residual_block_forward.4} parent=39 // pred_check
        %p1161 = pneg %p86
      $region42: #{residual_block_forward.4} parent=39 // pred_check_branch
        %1163 = sbr.rel (%p1161) target = $region44
      $region43: #{residual_block_forward.4} parent=39 // pred_region
        %p1164 = scmp.lt.s32.totalorder %s16, 1
        %s1165 = scalar_select %p1164, %s16, 1
        %s1166 = smul.addr %s1165, 8
        %s1167 = smul.addr %s1166, 8
        %s1168 = scalar_lea.vmem %s2, %s1167
      $region44: #{residual_block_forward.4} parent=39 // pred_fallthru
        _
      // Predicated region
      $region45: #{residual_block_forward.4} parent=39 // pred_check
        %p1169 = pneg %p112
      $region46: #{residual_block_forward.4} parent=39 // pred_check_branch
        %1171 = sbr.rel (%p1169) target = $region48
      $region47: #{residual_block_forward.4} parent=39 // pred_region
        %p1172 = scmp.lt.s32.totalorder %s16, 1
        %s1173 = scalar_select %p1172, %s16, 1
        %s1174 = smul.addr %s1173, 2
        %s1175 = scalar_lea.vmem %s3, %s1174
      $region48: #{residual_block_forward.4} parent=39 // pred_fallthru
        _
    $region40: #{residual_block_forward.4} parent=5 // pred_fallthru
      _
  $region6: #{residual_block_forward.4} parent=0 // loop_footer
    %s14 = sadd.s32 1, %s10
  $region7: #{residual_block_forward.4} parent=0 // loop_footer_branch
    %9 = sbr.rel target = $region3
  $region8: #{residual_block_forward.4} parent=0 // loop_exit
    _

// kernel: residual_block_forward.5
$region0: #{residual_block_forward.5}
  #allocation0 [shape = 'u32[]', space=smem, size = 0x4, offset = 0x4, fixed_abs, tag = 'smem constant byte address 0x4 - core index']
  #allocation1 [shape = 'u32[144,128]{1,0:T(1,128)}', space=vmem, size = 0x12000, scoped, tag = 'internal scratch']
  %s0 = inlined_call_operand.vmem [shape: f32[2,8,8,128], index: 0, kind: input, shape index: {}]
  %s1 = inlined_call_operand.vmem [shape: f32[1,128], index: 1, kind: input, shape index: {}]
  %s2 = inlined_call_operand.vmem [shape: f32[1,128], index: 2, kind: input, shape index: {}]
  %s3 = inlined_call_operand.vmem [shape: bf16[9,128,128], index: 3, kind: input, shape index: {}]
  %s4 = inlined_call_operand.vmem [shape: f32[2,8,8,128], index: 4, kind: output, shape index: {0}]
  %s5 = inlined_call_operand.vmem [shape: f32[2,2,128], index: 5, kind: output, shape index: {1}]
  %6 = xla_tuple %s4, %s5
  %s7 = sld [smem:[#allocation0]]
  $region57: #{residual_block_forward.5} parent=0
    _
  %s9 = ssub.s32 1, %s7
  %s10 = scalar_select 0, %s9, %s7
  loop: start=0, step=1, limit=4
  $region2: #{residual_block_forward.5} parent=0 // loop_pre_header
    _
  $region3: #{residual_block_forward.5} parent=0 // loop_header
    %s12 = sphi 0, %s16
    %p13 = scmp.ge.s32.totalorder %s12, 4
    %s22 = sphi 0, %s24
    %s25 = sphi 0, %s22
    %s26 = sphi 0, %s25
    %s42 = sphi 0, %s26
    %s46 = sphi 0, %s46
    %s48 = sphi 0, %s46
    %s49 = sphi 0, %s48
    %s63 = sphi 0, %s49
    %s67 = sphi 0, %s67
    %s69 = sphi 0, %s67
    %s70 = sphi 0, %s69
    %s84 = sphi 0, %s70
    %s88 = sphi 0, %s88
    %s90 = sphi 0, %s88
    %s91 = sphi 0, %s90
    %s105 = sphi 0, %s91
    %s111 = sphi 0, %s113
    %s114 = sphi 0, %s111
    %s115 = sphi 0, %s114
    %s131 = sphi 0, %s115
    %s137 = sphi 0, %s139
    %s140 = sphi 0, %s137
    %s141 = sphi 0, %s140
    %s157 = sphi 0, %s141
  $region4: #{residual_block_forward.5} parent=0 // loop_header_branch
    %15 = sbr.rel (%p13) target = $region8
  $region5: #{residual_block_forward.5} parent=0 // loop_body
    %s17 = ssub.s32 %s12, 1
    %s18 = ssub.s32 %s12, 2
    %s19 = sadd.s32 %s12, 1
    %s20 = ssub.s32 %s12, %s19
    %p21 = scmp.eq.s32.totalorder %s20, 0
    %s23 = sadd.s32 %s22, 1
    %s24 = scalar_select %p21, %s22, %s23
    %p27 = pneg %p21
    %p28 = scmp.eq.s32.totalorder %s12, 1
    %p29 = por %p27, %p28
    %p30 = scmp.ne.s32.totalorder %s22, %s25
    %p31 = scmp.eq.s32.totalorder %s12, 0
    %p32 = por %p30, %p31
    %p33 = scmp.ne.s32.totalorder %s22, %s25
    %p34 = scmp.eq.s32.totalorder %s17, 1
    %p35 = por %p33, %p34
    %p36 = scmp.ne.s32.totalorder %s25, %s26
    %p37 = scmp.eq.s32.totalorder %s17, 0
    %p38 = por %p36, %p37
    %p39 = scmp.ne.s32.totalorder %s25, %s26
    %p40 = scmp.eq.s32.totalorder %s18, 1
    %p41 = por %p39, %p40
    %p43 = scmp.ne.s32.totalorder %s26, %s42
    %p44 = scmp.eq.s32.totalorder %s18, 0
    %p45 = por %p43, %p44
    %s47 = sadd.s32 %s46, 1
    %p50 = scmp.eq.s32.totalorder %s12, 1
    %p51 = scmp.ne.s32.totalorder %s46, %s48
    %p52 = scmp.eq.s32.totalorder %s12, 0
    %p53 = por %p51, %p52
    %p54 = scmp.ne.s32.totalorder %s46, %s48
    %p55 = scmp.eq.s32.totalorder %s17, 1
    %p56 = por %p54, %p55
    %p57 = scmp.ne.s32.totalorder %s48, %s49
    %p58 = scmp.eq.s32.totalorder %s17, 0
    %p59 = por %p57, %p58
    %p60 = scmp.ne.s32.totalorder %s48, %s49
    %p61 = scmp.eq.s32.totalorder %s18, 1
    %p62 = por %p60, %p61
    %p64 = scmp.ne.s32.totalorder %s49, %s63
    %p65 = scmp.eq.s32.totalorder %s18, 0
    %p66 = por %p64, %p65
    %s68 = sadd.s32 %s67, 1
    %p71 = scmp.eq.s32.totalorder %s12, 1
    %p72 = scmp.ne.s32.totalorder %s67, %s69
    %p73 = scmp.eq.s32.totalorder %s12, 0
    %p74 = por %p72, %p73
    %p75 = scmp.ne.s32.totalorder %s67, %s69
    %p76 = scmp.eq.s32.totalorder %s17, 1
    %p77 = por %p75, %p76
    %p78 = scmp.ne.s32.totalorder %s69, %s70
    %p79 = scmp.eq.s32.totalorder %s17, 0
    %p80 = por %p78, %p79
    %p81 = scmp.ne.s32.totalorder %s69, %s70
    %p82 = scmp.eq.s32.totalorder %s18, 1
    %p83 = por %p81, %p82
    %p85 = scmp.ne.s32.totalorder %s70, %s84
    %p86 = scmp.eq.s32.totalorder %s18, 0
    %p87 = por %p85, %p86
    %s89 = sadd.s32 %s88, 1
    %p92 = scmp.eq.s32.totalorder %s12, 1
    %p93 = scmp.ne.s32.totalorder %s88, %s90
    %p94 = scmp.eq.s32.totalorder %s12, 0
    %p95 = por %p93, %p94
    %p96 = scmp.ne.s32.totalorder %s88, %s90
    %p97 = scmp.eq.s32.totalorder %s17, 1
    %p98 = por %p96, %p97
    %p99 = scmp.ne.s32.totalorder %s90, %s91
    %p100 = scmp.eq.s32.totalorder %s17, 0
    %p101 = por %p99, %p100
    %p102 = scmp.ne.s32.totalorder %s90, %s91
    %p103 = scmp.eq.s32.totalorder %s18, 1
    %p104 = por %p102, %p103
    %p106 = scmp.ne.s32.totalorder %s91, %s105
    %p107 = scmp.eq.s32.totalorder %s18, 0
    %p108 = por %p106, %p107
    %s109 = ssub.s32 %s12, %s19
    %p110 = scmp.eq.s32.totalorder %s109, 0
    %s112 = sadd.s32 %s111, 1
    %s113 = scalar_select %p110, %s111, %s112
    %p116 = pneg %p110
    %p117 = scmp.eq.s32.totalorder %s12, 1
    %p118 = por %p116, %p117
    %p119 = scmp.ne.s32.totalorder %s111, %s114
    %p120 = scmp.eq.s32.totalorder %s12, 0
    %p121 = por %p119, %p120
    %p122 = scmp.ne.s32.totalorder %s111, %s114
    %p123 = scmp.eq.s32.totalorder %s17, 1
    %p124 = por %p122, %p123
    %p125 = scmp.ne.s32.totalorder %s114, %s115
    %p126 = scmp.eq.s32.totalorder %s17, 0
    %p127 = por %p125, %p126
    %p128 = scmp.ne.s32.totalorder %s114, %s115
    %p129 = scmp.eq.s32.totalorder %s18, 1
    %p130 = por %p128, %p129
    %p132 = scmp.ne.s32.totalorder %s115, %s131
    %p133 = scmp.eq.s32.totalorder %s18, 0
    %p134 = por %p132, %p133
    %s135 = ssub.s32 %s12, %s19
    %p136 = scmp.eq.s32.totalorder %s135, 0
    %s138 = sadd.s32 %s137, 1
    %s139 = scalar_select %p136, %s137, %s138
    %p142 = pneg %p136
    %p143 = scmp.eq.s32.totalorder %s12, 1
    %p144 = por %p142, %p143
    %p145 = scmp.ne.s32.totalorder %s137, %s140
    %p146 = scmp.eq.s32.totalorder %s12, 0
    %p147 = por %p145, %p146
    %p148 = scmp.ne.s32.totalorder %s137, %s140
    %p149 = scmp.eq.s32.totalorder %s17, 1
    %p150 = por %p148, %p149
    %p151 = scmp.ne.s32.totalorder %s140, %s141
    %p152 = scmp.eq.s32.totalorder %s17, 0
    %p153 = por %p151, %p152
    %p154 = scmp.ne.s32.totalorder %s140, %s141
    %p155 = scmp.eq.s32.totalorder %s18, 1
    %p156 = por %p154, %p155
    %p158 = scmp.ne.s32.totalorder %s141, %s157
    %p159 = scmp.eq.s32.totalorder %s18, 0
    %p160 = por %p158, %p159
    %p161 = scmp.le.s32.totalorder 1, %s12
    %p162 = scmp.lt.s32.totalorder %s12, 3
    %p163 = pnand %p161, %p162
    %p164 = pneg %p163
    // Predicated region
    $region9: #{residual_block_forward.5} parent=5 // pred_check
      _
    $region10: #{residual_block_forward.5} parent=5 // pred_check_branch
      %166 = sbr.rel (%p163) target = $region12
    $region11: #{residual_block_forward.5} parent=5 // pred_region
      %s167 = ssub.s32 %s12, 1
      // Predicated region
      $region13: #{residual_block_forward.5} parent=11 // pred_check
        %p168 = pneg %p59
      $region14: #{residual_block_forward.5} parent=11 // pred_check_branch
        %170 = sbr.rel (%p168) target = $region16
      $region15: #{residual_block_forward.5} parent=11 // pred_region
        _
      $region16: #{residual_block_forward.5} parent=11 // pred_fallthru
        _
      // Predicated region
      $region17: #{residual_block_forward.5} parent=11 // pred_check
        %p171 = pneg %p80
      $region18: #{residual_block_forward.5} parent=11 // pred_check_branch
        %173 = sbr.rel (%p171) target = $region20
      $region19: #{residual_block_forward.5} parent=11 // pred_region
        _
      $region20: #{residual_block_forward.5} parent=11 // pred_fallthru
        _
      // Predicated region
      $region21: #{residual_block_forward.5} parent=11 // pred_check
        %p174 = pneg %p101
      $region22: #{residual_block_forward.5} parent=11 // pred_check_branch
        %176 = sbr.rel (%p174) target = $region24
      $region23: #{residual_block_forward.5} parent=11 // pred_region
        _
      $region24: #{residual_block_forward.5} parent=11 // pred_fallthru
        _
    $region12: #{residual_block_forward.5} parent=5 // pred_fallthru
      _
    %p177 = scmp.lt.s32.totalorder %s12, 2
    // Predicated region
    $region25: #{residual_block_forward.5} parent=5 // pred_check
      %p178 = pneg %p177
    $region26: #{residual_block_forward.5} parent=5 // pred_check_branch
      %180 = sbr.rel (%p178) target = $region28
    $region27: #{residual_block_forward.5} parent=5 // pred_region
      // Predicated region
      $region29: #{residual_block_forward.5} parent=27 // pred_check
        %p181 = pneg %p32
      $region30: #{residual_block_forward.5} parent=27 // pred_check_branch
        %183 = sbr.rel (%p181) target = $region32
      $region31: #{residual_block_forward.5} parent=27 // pred_region
        %p184 = scmp.lt.s32.totalorder %s12, 1
        %s185 = scalar_select %p184, %s12, 1
        %s186 = smul.addr %s185, 8
        %s187 = smul.addr %s186, 8
        %s188 = scalar_lea.vmem %s0, %s187
      $region32: #{residual_block_forward.5} parent=27 // pred_fallthru
        _
    $region28: #{residual_block_forward.5} parent=5 // pred_fallthru
      _
    %p189 = scmp.le.s32.totalorder 1, %s12
    %p190 = scmp.lt.s32.totalorder %s12, 3
    %p191 = pnand %p189, %p190
    %p192 = pneg %p191
    // Predicated region
    $region33: #{residual_block_forward.5} parent=5 // pred_check
      _
    $region34: #{residual_block_forward.5} parent=5 // pred_check_branch
      %194 = sbr.rel (%p191) target = $region36
    $region35: #{residual_block_forward.5} parent=5 // pred_region
      %s195 = ssub.s32 %s12, 1
      %p196 = scmp.lt.s32.totalorder %s17, 1
      %s197 = scalar_select %p196, %s17, 1
      %s198 = smul.addr %s197, 8
      %s199 = smul.addr %s198, 8
      %s200 = scalar_lea.vmem %s0, %s199
      %p201 = pneg %p38
      %p202 = pneg %p35
      %p203 = pneg %p59
      %p204 = pneg %p56
      %p205 = pneg %p80
      %p206 = pneg %p77
      %p207 = pneg %p101
      %p208 = pneg %p98
      %p209 = pneg %p127
      %p210 = pneg %p124
      %p211 = scmp.lt.s32.totalorder %s17, 1
      %s212 = scalar_select %p211, %s17, 1
      %s213 = smul.addr %s212, 8
      %s214 = smul.addr %s213, 8
      %s215 = scalar_lea.vmem %s4, %s214
      %p216 = pneg %p153
      %p217 = pneg %p150
      %p218 = scmp.lt.s32.totalorder %s17, 1
      %s219 = scalar_select %p218, %s17, 1
      %s220 = smul.addr %s219, 2
      %s221 = scalar_lea.vmem %s5, %s220
      %p222 = scmp.lt.s32.totalorder %s17, 1
      %s223 = scalar_select %p222, %s17, 1
      %s224 = smul.addr %s223, 8
      %s225 = smul.addr %s224, 8
      %s226 = scalar_lea.vmem %s0, %s225
      %p227 = scmp.lt.s32.totalorder %s17, 1
      %s228 = scalar_select %p227, %s17, 1
      %s229 = smul.addr %s228, 8
      %s230 = smul.addr %s229, 8
      %s231 = scalar_lea.vmem %s4, %s230
      %p232 = scmp.lt.s32.totalorder %s17, 1
      %s233 = scalar_select %p232, %s17, 1
      %s234 = smul.addr %s233, 2
      %s235 = scalar_lea.vmem %s5, %s234
      %v237 = vld [vmem:[%s226] sm:$0xff]
      %v238 = vld [vmem:[%s226 + $0x8] sm:$0xff]
      %v239 = vld [vmem:[%s226 + $0x10] sm:$0xff]
      %v240 = vld [vmem:[%s226 + $0x18] sm:$0xff]
      %v241 = vld [vmem:[%s226 + $0x20] sm:$0xff]
      %v242 = vld [vmem:[%s226 + $0x28] sm:$0xff]
      %v243 = vld [vmem:[%s226 + $0x30] sm:$0xff]
      %v244 = vld [vmem:[%s226 + $0x38] sm:$0xff]
      %v245 = vld [vmem:[%s1] sm:$0x1]
      %v247 = vlaneseq
      %v248 = vshrl.u32 %v247, 7
      %v249 = vsub.s32 0, %v248
      %v250 = vrot.slane %v245, %v249
      %v252 = vmul.f32 %v237, %v250
      %v253 = vmul.f32 %v238, %v250
      %v254 = vmul.f32 %v239, %v250
      %v255 = vmul.f32 %v240, %v250
      %v256 = vmul.f32 %v241, %v250
      %v257 = vmul.f32 %v242, %v250
      %v258 = vmul.f32 %v243, %v250
      %v259 = vmul.f32 %v244, %v250
      %v260 = vld [vmem:[%s2] sm:$0x1]
      %v262 = vlaneseq
      %v263 = vshrl.u32 %v262, 7
      %v264 = vsub.s32 0, %v263
      %v265 = vrot.slane %v260, %v264
      %v267 = vadd.f32 %v252, %v265
      %v268 = vadd.f32 %v253, %v265
      %v269 = vadd.f32 %v254, %v265
      %v270 = vadd.f32 %v255, %v265
      %v271 = vadd.f32 %v256, %v265
      %v272 = vadd.f32 %v257, %v265
      %v273 = vadd.f32 %v258, %v265
      %v274 = vadd.f32 %v259, %v265
      %v275 = vmax.f32 %v267, 0.0
      %v276 = vmax.f32 %v268, 0.0
      %v277 = vmax.f32 %v269, 0.0
      %v278 = vmax.f32 %v270, 0.0
      %v279 = vmax.f32 %v271, 0.0
      %v280 = vmax.f32 %v272, 0.0
      %v281 = vmax.f32 %v273, 0.0
      %v282 = vmax.f32 %v274, 0.0
      %v292 = vrot.slane 0.0, 7
      %v293 = vrot.slane %v275, 7
      %v294 = vrot.slane %v276, 7
      %v295 = vrot.slane %v277, 7
      %v296 = vrot.slane %v278, 7
      %v297 = vrot.slane %v279, 7
      %v298 = vrot.slane %v280, 7
      %v299 = vrot.slane %v281, 7
      %v300 = vrot.slane %v282, 7
      %vm310 = vcmask 1040384
      %v311 = vsel %vm310, 0.0, %v292
      %v312 = vsel %vm310, 0.0, %v293
      %v313 = vsel %vm310, 0.0, %v294
      %v314 = vsel %vm310, 0.0, %v295
      %v315 = vsel %vm310, 0.0, %v296
      %v316 = vsel %vm310, 0.0, %v297
      %v317 = vsel %vm310, 0.0, %v298
      %v318 = vsel %vm310, 0.0, %v299
      %v319 = vsel %vm310, 0.0, %v300
      %v320 = vsel %vm310, %v292, 0.0
      %v321 = vsel %vm310, %v293, 0.0
      %v322 = vsel %vm310, %v294, 0.0
      %v323 = vsel %vm310, %v295, 0.0
      %v324 = vsel %vm310, %v296, 0.0
      %v325 = vsel %vm310, %v297, 0.0
      %v326 = vsel %vm310, %v298, 0.0
      %v327 = vsel %vm310, %v299, 0.0
      %v328 = vsel %vm310, %v300, 0.0
      %v329 = vpack.c.bf16 %v312, %v311
      %v330 = vpack.c.bf16 %v314, %v313
      %v331 = vpack.c.bf16 %v316, %v315
      %v332 = vpack.c.bf16 %v318, %v317
      %v333 = vld [vmem:[%s3] sm:$0xf]
      %v334 = vld [vmem:[%s3 + $0x4] sm:$0xf]
      %v335 = vld [vmem:[%s3 + $0x8] sm:$0xf]
      %v336 = vld [vmem:[%s3 + $0xc] sm:$0xf]
      %v337 = vld [vmem:[%s3 + $0x10] sm:$0xf]
      %v338 = vld [vmem:[%s3 + $0x14] sm:$0xf]
      %v339 = vld [vmem:[%s3 + $0x18] sm:$0xf]
      %v340 = vld [vmem:[%s3 + $0x1c] sm:$0xf]
      %v341 = vld [vmem:[%s3 + $0x20] sm:$0xf]
      %v342 = vld [vmem:[%s3 + $0x24] sm:$0xf]
      %v343 = vld [vmem:[%s3 + $0x28] sm:$0xf]
      %v344 = vld [vmem:[%s3 + $0x2c] sm:$0xf]
      %v345 = vld [vmem:[%s3 + $0x30] sm:$0xf]
      %v346 = vld [vmem:[%s3 + $0x34] sm:$0xf]
      %v347 = vld [vmem:[%s3 + $0x38] sm:$0xf]
      %v348 = vld [vmem:[%s3 + $0x3c] sm:$0xf]
      %vm365 = vcmask 1046528
      %v366 = vrot.slane %v311, 1
      %v367 = vrot.slane %v320, 1
      %v368 = vsel %vm365, %v366, %v367
      %v369 = vrot.slane %v312, 1
      %v370 = vrot.slane %v321, 1
      %v371 = vsel %vm365, %v369, %v370
      %v372 = vrot.slane %v313, 1
      %v373 = vrot.slane %v322, 1
      %v374 = vsel %vm365, %v372, %v373
      %v375 = vrot.slane %v314, 1
      %v376 = vrot.slane %v323, 1
      %v377 = vsel %vm365, %v375, %v376
      %v378 = vrot.slane %v315, 1
      %v379 = vrot.slane %v324, 1
      %v380 = vsel %vm365, %v378, %v379
      %v381 = vrot.slane %v316, 1
      %v382 = vrot.slane %v325, 1
      %v383 = vsel %vm365, %v381, %v382
      %v384 = vrot.slane %v317, 1
      %v385 = vrot.slane %v326, 1
      %v386 = vsel %vm365, %v384, %v385
      %v387 = vrot.slane %v318, 1
      %v388 = vrot.slane %v327, 1
      %v389 = vsel %vm365, %v387, %v388
      %v398 = vpack.c.bf16 %v371, %v368
      %v399 = vpack.c.bf16 %v377, %v374
      %v400 = vpack.c.bf16 %v383, %v380
      %v401 = vpack.c.bf16 %v389, %v386
      %s402 = scalar_lea.vmem %s3, 64
      %v403 = vld [vmem:[%s402] sm:$0xf]
      %v404 = vld [vmem:[%s402 + $0x4] sm:$0xf]
      %v405 = vld [vmem:[%s402 + $0x8] sm:$0xf]
      %v406 = vld [vmem:[%s402 + $0xc] sm:$0xf]
      %v407 = vld [vmem:[%s402 + $0x10] sm:$0xf]
      %v408 = vld [vmem:[%s402 + $0x14] sm:$0xf]
      %v409 = vld [vmem:[%s402 + $0x18] sm:$0xf]
      %v410 = vld [vmem:[%s402 + $0x1c] sm:$0xf]
      %v411 = vld [vmem:[%s402 + $0x20] sm:$0xf]
      %v412 = vld [vmem:[%s402 + $0x24] sm:$0xf]
      %v413 = vld [vmem:[%s402 + $0x28] sm:$0xf]
      %v414 = vld [vmem:[%s402 + $0x2c] sm:$0xf]
      %v415 = vld [vmem:[%s402 + $0x30] sm:$0xf]
      %v416 = vld [vmem:[%s402 + $0x34] sm:$0xf]
      %v417 = vld [vmem:[%s402 + $0x38] sm:$0xf]
      %v418 = vld [vmem:[%s402 + $0x3c] sm:$0xf]
      %v435 = vunpack.c.l.b16 %v403
      %v436 = vunpack.c.l.b16 %v404
      %v437 = vunpack.c.l.b16 %v405
      %v438 = vunpack.c.l.b16 %v406
      %v439 = vunpack.c.l.b16 %v407
      %v440 = vunpack.c.l.b16 %v408
      %v441 = vunpack.c.l.b16 %v409
      %v442 = vunpack.c.l.b16 %v410
      %v443 = vunpack.c.l.b16 %v411
      %v444 = vunpack.c.l.b16 %v412
      %v445 = vunpack.c.l.b16 %v413
      %v446 = vunpack.c.l.b16 %v414
      %v447 = vunpack.c.l.b16 %v415
      %v448 = vunpack.c.l.b16 %v416
      %v449 = vunpack.c.l.b16 %v417
      %v450 = vunpack.c.l.b16 %v418
      %v451 = vpack.c.b16 %v436, %v435
      %v452 = vpack.c.b16 %v438, %v437
      %v453 = vpack.c.b16 %v440, %v439
      %v454 = vpack.c.b16 %v442, %v441
      %v455 = vpack.c.b16 %v444, %v443
      %v456 = vpack.c.b16 %v446, %v445
      %v457 = vpack.c.b16 %v448, %v447
      %v458 = vpack.c.b16 %v450, %v449
      %467 = vmatprep.subr.bf16.mxu0 0
      %468 = vmatpush1.bf16.msra.mxu0 %v458
      %469 = vmatprep.subr.bf16.mxu0 0
      %470 = vmatpush1.bf16.msra.mxu0 %v457
      %471 = vmatprep.subr.bf16.mxu0 0
      %472 = vmatpush1.bf16.msra.mxu0 %v456
      %473 = vmatprep.subr.bf16.mxu0 0
      %474 = vmatpush1.bf16.msra.mxu0 %v455
      %475 = vmatprep.subr.bf16.mxu0 0
      %476 = vmatpush1.bf16.msra.mxu0 %v454
      %477 = vmatprep.subr.bf16.mxu0 0
      %478 = vmatpush1.bf16.msra.mxu0 %v453
      %479 = vmatprep.subr.bf16.mxu0 0
      %480 = vmatpush1.bf16.msra.mxu0 %v452
      %481 = vmatprep.subr.bf16.mxu0 0
      %482 = vmatpush1.bf16.msra.mxu0 %v451
      %483 = vmatprep.subr.bf16.mxu0 0
      %484 = vmatpush2.bf16.msra.mxu0 0
      %485 = vmatprep.subr.bf16.mxu0 0
      %486 = vmatpush2.bf16.msra.mxu0 0
      %487 = vmatprep.subr.bf16.mxu0 0
      %488 = vmatpush2.bf16.msra.mxu0 0
      %489 = vmatprep.subr.bf16.mxu0 0
      %490 = vmatpush2.bf16.msra.mxu0 0
      %491 = vmatprep.subr.bf16.mxu0 0
      %492 = vmatpush2.bf16.msra.mxu0 0
      %493 = vmatprep.subr.bf16.mxu0 0
      %494 = vmatpush2.bf16.msra.mxu0 0
      %495 = vmatprep.subr.bf16.mxu0 0
      %496 = vmatpush2.bf16.msra.mxu0 0
      %497 = vmatprep.subr.bf16.mxu0 0
      %498 = vmatpush2.bf16.msra.mxu0 0
      %499 = vmatprep.mubr.bf16.mxu0 0
      %500 = vmatmul.mubr.bf16.gmra.mxu0 %v398
      %v501 = vpop.f32.mrf.mxu0
      %v502 = vadd.f32 0.0, %v501
      %v503 = vpop.f32.mrf.mxu0
      %v504 = vpop.f32.mrf.mxu0
      %v505 = vadd.f32 0.0, %v504
      %v506 = vpop.f32.mrf.mxu0
      %507 = vmatprep.mubr.bf16.mxu0 0
      %508 = vmatmul.mubr.bf16.gmra.mxu0 %v399
      %v509 = vpop.f32.mrf.mxu0
      %v510 = vadd.f32 0.0, %v509
      %v511 = vpop.f32.mrf.mxu0
      %v512 = vpop.f32.mrf.mxu0
      %v513 = vadd.f32 0.0, %v512
      %v514 = vpop.f32.mrf.mxu0
      %515 = vmatprep.mubr.bf16.mxu0 0
      %516 = vmatmul.mubr.bf16.gmra.mxu0 %v400
      %v517 = vpop.f32.mrf.mxu0
      %v518 = vadd.f32 0.0, %v517
      %v519 = vpop.f32.mrf.mxu0
      %v520 = vpop.f32.mrf.mxu0
      %v521 = vadd.f32 0.0, %v520
      %v522 = vpop.f32.mrf.mxu0
      %523 = vmatprep.mubr.bf16.mxu0 0
      %524 = vmatmul.mubr.bf16.gmra.mxu0 %v401
      %v525 = vpop.f32.mrf.mxu0
      %v526 = vadd.f32 0.0, %v525
      %v527 = vpop.f32.mrf.mxu0
      %v528 = vpop.f32.mrf.mxu0
      %v529 = vadd.f32 0.0, %v528
      %v530 = vpop.f32.mrf.mxu0
      %531 = vdwg.mxu0
      %v548 = vunpack.c.l.b16 %v333
      %v549 = vunpack.c.l.b16 %v334
      %v550 = vunpack.c.l.b16 %v335
      %v551 = vunpack.c.l.b16 %v336
      %v552 = vunpack.c.l.b16 %v337
      %v553 = vunpack.c.l.b16 %v338
      %v554 = vunpack.c.l.b16 %v339
      %v555 = vunpack.c.l.b16 %v340
      %v556 = vunpack.c.l.b16 %v341
      %v557 = vunpack.c.l.b16 %v342
      %v558 = vunpack.c.l.b16 %v343
      %v559 = vunpack.c.l.b16 %v344
      %v560 = vunpack.c.l.b16 %v345
      %v561 = vunpack.c.l.b16 %v346
      %v562 = vunpack.c.l.b16 %v347
      %v563 = vunpack.c.l.b16 %v348
      %v564 = vpack.c.b16 %v549, %v548
      %v565 = vpack.c.b16 %v551, %v550
      %v566 = vpack.c.b16 %v553, %v552
      %v567 = vpack.c.b16 %v555, %v554
      %v568 = vpack.c.b16 %v557, %v556
      %v569 = vpack.c.b16 %v559, %v558
      %v570 = vpack.c.b16 %v561, %v560
      %v571 = vpack.c.b16 %v563, %v562
      %580 = vmatprep.subr.bf16.mxu0 0
      %581 = vmatpush1.bf16.msra.mxu0 %v571
      %582 = vmatprep.subr.bf16.mxu0 0
      %583 = vmatpush1.bf16.msra.mxu0 %v570
      %584 = vmatprep.subr.bf16.mxu0 0
      %585 = vmatpush1.bf16.msra.mxu0 %v569
      %586 = vmatprep.subr.bf16.mxu0 0
      %587 = vmatpush1.bf16.msra.mxu0 %v568
      %588 = vmatprep.subr.bf16.mxu0 0
      %589 = vmatpush1.bf16.msra.mxu0 %v567
      %590 = vmatprep.subr.bf16.mxu0 0
      %591 = vmatpush1.bf16.msra.mxu0 %v566
      %592 = vmatprep.subr.bf16.mxu0 0
      %593 = vmatpush1.bf16.msra.mxu0 %v565
      %594 = vmatprep.subr.bf16.mxu0 0
      %595 = vmatpush1.bf16.msra.mxu0 %v564
      %596 = vmatprep.subr.bf16.mxu0 0
      %597 = vmatpush2.bf16.msra.mxu0 0
      %598 = vmatprep.subr.bf16.mxu0 0
      %599 = vmatpush2.bf16.msra.mxu0 0
      %600 = vmatprep.subr.bf16.mxu0 0
      %601 = vmatpush2.bf16.msra.mxu0 0
      %602 = vmatprep.subr.bf16.mxu0 0
      %603 = vmatpush2.bf16.msra.mxu0 0
      %604 = vmatprep.subr.bf16.mxu0 0
      %605 = vmatpush2.bf16.msra.mxu0 0
      %606 = vmatprep.subr.bf16.mxu0 0
      %607 = vmatpush2.bf16.msra.mxu0 0
      %608 = vmatprep.subr.bf16.mxu0 0
      %609 = vmatpush2.bf16.msra.mxu0 0
      %610 = vmatprep.subr.bf16.mxu0 0
      %611 = vmatpush2.bf16.msra.mxu0 0
      %612 = vmatprep.mubr.bf16.mxu0 0
      %613 = vmatmul.mubr.bf16.gmra.mxu0 %v329
      %v614 = vpop.f32.mrf.mxu0
      %v615 = vadd.f32 %v502, %v614
      %v616 = vpop.f32.mrf.mxu0
      %v617 = vpop.f32.mrf.mxu0
      %v618 = vadd.f32 %v505, %v617
      %v619 = vpop.f32.mrf.mxu0
      %620 = vmatprep.mubr.bf16.mxu0 0
      %621 = vmatmul.mubr.bf16.gmra.mxu0 %v330
      %v622 = vpop.f32.mrf.mxu0
      %v623 = vadd.f32 %v510, %v622
      %v624 = vpop.f32.mrf.mxu0
      %v625 = vpop.f32.mrf.mxu0
      %v626 = vadd.f32 %v513, %v625
      %v627 = vpop.f32.mrf.mxu0
      %628 = vmatprep.mubr.bf16.mxu0 0
      %629 = vmatmul.mubr.bf16.gmra.mxu0 %v331
      %v630 = vpop.f32.mrf.mxu0
      %v631 = vadd.f32 %v518, %v630
      %v632 = vpop.f32.mrf.mxu0
      %v633 = vpop.f32.mrf.mxu0
      %v634 = vadd.f32 %v521, %v633
      %v635 = vpop.f32.mrf.mxu0
      %636 = vmatprep.mubr.bf16.mxu0 0
      %637 = vmatmul.mubr.bf16.gmra.mxu0 %v332
      %v638 = vpop.f32.mrf.mxu0
      %v639 = vadd.f32 %v526, %v638
      %v640 = vpop.f32.mrf.mxu0
      %v641 = vpop.f32.mrf.mxu0
      %v642 = vadd.f32 %v529, %v641
      %v643 = vpop.f32.mrf.mxu0
      %644 = vdwg.mxu0
      %vm645 = vcmask 1045504
      %v646 = vrot.slane %v311, 2
      %v647 = vrot.slane %v320, 2
      %v648 = vsel %vm645, %v646, %v647
      %v649 = vrot.slane %v312, 2
      %v650 = vrot.slane %v321, 2
      %v651 = vsel %vm645, %v649, %v650
      %v652 = vrot.slane %v313, 2
      %v653 = vrot.slane %v322, 2
      %v654 = vsel %vm645, %v652, %v653
      %v655 = vrot.slane %v314, 2
      %v656 = vrot.slane %v323, 2
      %v657 = vsel %vm645, %v655, %v656
      %v658 = vrot.slane %v315, 2
      %v659 = vrot.slane %v324, 2
      %v660 = vsel %vm645, %v658, %v659
      %v661 = vrot.slane %v316, 2
      %v662 = vrot.slane %v325, 2
      %v663 = vsel %vm645, %v661, %v662
      %v664 = vrot.slane %v317, 2
      %v665 = vrot.slane %v326, 2
      %v666 = vsel %vm645, %v664, %v665
      %v667 = vrot.slane %v318, 2
      %v668 = vrot.slane %v327, 2
      %v669 = vsel %vm645, %v667, %v668
      %v678 = vpack.c.bf16 %v651, %v648
      %v679 = vpack.c.bf16 %v657, %v654
      %v680 = vpack.c.bf16 %v663, %v660
      %v681 = vpack.c.bf16 %v669, %v666
      %s682 = scalar_lea.vmem %s3, 128
      %v683 = vld [vmem:[%s682] sm:$0xf]
      %v684 = vld [vmem:[%s682 + $0x4] sm:$0xf]
      %v685 = vld [vmem:[%s682 + $0x8] sm:$0xf]
      %v686 = vld [vmem:[%s682 + $0xc] sm:$0xf]
      %v687 = vld [vmem:[%s682 + $0x10] sm:$0xf]
      %v688 = vld [vmem:[%s682 + $0x14] sm:$0xf]
      %v689 = vld [vmem:[%s682 + $0x18] sm:$0xf]
      %v690 = vld [vmem:[%s682 + $0x1c] sm:$0xf]
      %v691 = vld [vmem:[%s682 + $0x20] sm:$0xf]
      %v692 = vld [vmem:[%s682 + $0x24] sm:$0xf]
      %v693 = vld [vmem:[%s682 + $0x28] sm:$0xf]
      %v694 = vld [vmem:[%s682 + $0x2c] sm:$0xf]
      %v695 = vld [vmem:[%s682 + $0x30] sm:$0xf]
      %v696 = vld [vmem:[%s682 + $0x34] sm:$0xf]
      %v697 = vld [vmem:[%s682 + $0x38] sm:$0xf]
      %v698 = vld [vmem:[%s682 + $0x3c] sm:$0xf]
      %v715 = vunpack.c.l.b16 %v683
      %v716 = vunpack.c.l.b16 %v684
      %v717 = vunpack.c.l.b16 %v685
      %v718 = vunpack.c.l.b16 %v686
      %v719 = vunpack.c.l.b16 %v687
      %v720 = vunpack.c.l.b16 %v688
      %v721 = vunpack.c.l.b16 %v689
      %v722 = vunpack.c.l.b16 %v690
      %v723 = vunpack.c.l.b16 %v691
      %v724 = vunpack.c.l.b16 %v692
      %v725 = vunpack.c.l.b16 %v693
      %v726 = vunpack.c.l.b16 %v694
      %v727 = vunpack.c.l.b16 %v695
      %v728 = vunpack.c.l.b16 %v696
      %v729 = vunpack.c.l.b16 %v697
      %v730 = vunpack.c.l.b16 %v698
      %v731 = vpack.c.b16 %v716, %v715
      %v732 = vpack.c.b16 %v718, %v717
      %v733 = vpack.c.b16 %v720, %v719
      %v734 = vpack.c.b16 %v722, %v721
      %v735 = vpack.c.b16 %v724, %v723
      %v736 = vpack.c.b16 %v726, %v725
      %v737 = vpack.c.b16 %v728, %v727
      %v738 = vpack.c.b16 %v730, %v729
      %747 = vmatprep.subr.bf16.mxu0 0
      %748 = vmatpush1.bf16.msra.mxu0 %v738
      %749 = vmatprep.subr.bf16.mxu0 0
      %750 = vmatpush1.bf16.msra.mxu0 %v737
      %751 = vmatprep.subr.bf16.mxu0 0
      %752 = vmatpush1.bf16.msra.mxu0 %v736
      %753 = vmatprep.subr.bf16.mxu0 0
      %754 = vmatpush1.bf16.msra.mxu0 %v735
      %755 = vmatprep.subr.bf16.mxu0 0
      %756 = vmatpush1.bf16.msra.mxu0 %v734
      %757 = vmatprep.subr.bf16.mxu0 0
      %758 = vmatpush1.bf16.msra.mxu0 %v733
      %759 = vmatprep.subr.bf16.mxu0 0
      %760 = vmatpush1.bf16.msra.mxu0 %v732
      %761 = vmatprep.subr.bf16.mxu0 0
      %762 = vmatpush1.bf16.msra.mxu0 %v731
      %763 = vmatprep.subr.bf16.mxu0 0
      %764 = vmatpush2.bf16.msra.mxu0 0
      %765 = vmatprep.subr.bf16.mxu0 0
      %766 = vmatpush2.bf16.msra.mxu0 0
      %767 = vmatprep.subr.bf16.mxu0 0
      %768 = vmatpush2.bf16.msra.mxu0 0
      %769 = vmatprep.subr.bf16.mxu0 0
      %770 = vmatpush2.bf16.msra.mxu0 0
      %771 = vmatprep.subr.bf16.mxu0 0
      %772 = vmatpush2.bf16.msra.mxu0 0
      %773 = vmatprep.subr.bf16.mxu0 0
      %774 = vmatpush2.bf16.msra.mxu0 0
      %775 = vmatprep.subr.bf16.mxu0 0
      %776 = vmatpush2.bf16.msra.mxu0 0
      %777 = vmatprep.subr.bf16.mxu0 0
      %778 = vmatpush2.bf16.msra.mxu0 0
      %779 = vmatprep.mubr.bf16.mxu0 0
      %780 = vmatmul.mubr.bf16.gmra.mxu0 %v678
      %v781 = vpop.f32.mrf.mxu0
      %v782 = vadd.f32 0.0, %v781
      %v783 = vpop.f32.mrf.mxu0
      %v784 = vpop.f32.mrf.mxu0
      %v785 = vadd.f32 0.0, %v784
      %v786 = vpop.f32.mrf.mxu0
      %787 = vmatprep.mubr.bf16.mxu0 0
      %788 = vmatmul.mubr.bf16.gmra.mxu0 %v679
      %v789 = vpop.f32.mrf.mxu0
      %v790 = vadd.f32 0.0, %v789
      %v791 = vpop.f32.mrf.mxu0
      %v792 = vpop.f32.mrf.mxu0
      %v793 = vadd.f32 0.0, %v792
      %v794 = vpop.f32.mrf.mxu0
      %795 = vmatprep.mubr.bf16.mxu0 0
      %796 = vmatmul.mubr.bf16.gmra.mxu0 %v680
      %v797 = vpop.f32.mrf.mxu0
      %v798 = vadd.f32 0.0, %v797
      %v799 = vpop.f32.mrf.mxu0
      %v800 = vpop.f32.mrf.mxu0
      %v801 = vadd.f32 0.0, %v800
      %v802 = vpop.f32.mrf.mxu0
      %803 = vmatprep.mubr.bf16.mxu0 0
      %804 = vmatmul.mubr.bf16.gmra.mxu0 %v681
      %v805 = vpop.f32.mrf.mxu0
      %v806 = vadd.f32 0.0, %v805
      %v807 = vpop.f32.mrf.mxu0
      %v808 = vpop.f32.mrf.mxu0
      %v809 = vadd.f32 0.0, %v808
      %v810 = vpop.f32.mrf.mxu0
      %811 = vdwg.mxu0
      %v812 = vadd.f32 %v615, %v782
      %v813 = vadd.f32 %v618, %v785
      %v814 = vadd.f32 %v623, %v790
      %v815 = vadd.f32 %v626, %v793
      %v816 = vadd.f32 %v631, %v798
      %v817 = vadd.f32 %v634, %v801
      %v818 = vadd.f32 %v639, %v806
      %v819 = vadd.f32 %v642, %v809
      %v820 = vpack.c.bf16 %v313, %v312
      %v821 = vpack.c.bf16 %v315, %v314
      %v822 = vpack.c.bf16 %v317, %v316
      %v823 = vpack.c.bf16 %v319, %v318
      %s824 = scalar_lea.vmem %s3, 192
      %v825 = vld [vmem:[%s824] sm:$0xf]
      %v826 = vld [vmem:[%s824 + $0x4] sm:$0xf]
      %v827 = vld [vmem:[%s824 + $0x8] sm:$0xf]
      %v828 = vld [vmem:[%s824 + $0xc] sm:$0xf]
      %v829 = vld [vmem:[%s824 + $0x10] sm:$0xf]
      %v830 = vld [vmem:[%s824 + $0x14] sm:$0xf]
      %v831 = vld [vmem:[%s824 + $0x18] sm:$0xf]
      %v832 = vld [vmem:[%s824 + $0x1c] sm:$0xf]
      %v833 = vld [vmem:[%s824 + $0x20] sm:$0xf]
      %v834 = vld [vmem:[%s824 + $0x24] sm:$0xf]
      %v835 = vld [vmem:[%s824 + $0x28] sm:$0xf]
      %v836 = vld [vmem:[%s824 + $0x2c] sm:$0xf]
      %v837 = vld [vmem:[%s824 + $0x30] sm:$0xf]
      %v838 = vld [vmem:[%s824 + $0x34] sm:$0xf]
      %v839 = vld [vmem:[%s824 + $0x38] sm:$0xf]
      %v840 = vld [vmem:[%s824 + $0x3c] sm:$0xf]
      %v857 = vunpack.c.l.b16 %v825
      %v858 = vunpack.c.l.b16 %v826
      %v859 = vunpack.c.l.b16 %v827
      %v860 = vunpack.c.l.b16 %v828
      %v861 = vunpack.c.l.b16 %v829
      %v862 = vunpack.c.l.b16 %v830
      %v863 = vunpack.c.l.b16 %v831
      %v864 = vunpack.c.l.b16 %v832
      %v865 = vunpack.c.l.b16 %v833
      %v866 = vunpack.c.l.b16 %v834
      %v867 = vunpack.c.l.b16 %v835
      %v868 = vunpack.c.l.b16 %v836
      %v869 = vunpack.c.l.b16 %v837
      %v870 = vunpack.c.l.b16 %v838
      %v871 = vunpack.c.l.b16 %v839
      %v872 = vunpack.c.l.b16 %v840
      %v873 = vpack.c.b16 %v858, %v857
      %v874 = vpack.c.b16 %v860, %v859
      %v875 = vpack.c.b16 %v862, %v861
      %v876 = vpack.c.b16 %v864, %v863
      %v877 = vpack.c.b16 %v866, %v865
      %v878 = vpack.c.b16 %v868, %v867
      %v879 = vpack.c.b16 %v870, %v869
      %v880 = vpack.c.b16 %v872, %v871
      %889 = vmatprep.subr.bf16.mxu0 0
      %890 = vmatpush1.bf16.msra.mxu0 %v880
      %891 = vmatprep.subr.bf16.mxu0 0
      %892 = vmatpush1.bf16.msra.mxu0 %v879
      %893 = vmatprep.subr.bf16.mxu0 0
      %894 = vmatpush1.bf16.msra.mxu0 %v878
      %895 = vmatprep.subr.bf16.mxu0 0
      %896 = vmatpush1.bf16.msra.mxu0 %v877
      %897 = vmatprep.subr.bf16.mxu0 0
      %898 = vmatpush1.bf16.msra.mxu0 %v876
      %899 = vmatprep.subr.bf16.mxu0 0
      %900 = vmatpush1.bf16.msra.mxu0 %v875
      %901 = vmatprep.subr.bf16.mxu0 0
      %902 = vmatpush1.bf16.msra.mxu0 %v874
      %903 = vmatprep.subr.bf16.mxu0 0
      %904 = vmatpush1.bf16.msra.mxu0 %v873
      %905 = vmatprep.subr.bf16.mxu0 0
      %906 = vmatpush2.bf16.msra.mxu0 0
      %907 = vmatprep.subr.bf16.mxu0 0
      %908 = vmatpush2.bf16.msra.mxu0 0
      %909 = vmatprep.subr.bf16.mxu0 0
      %910 = vmatpush2.bf16.msra.mxu0 0
      %911 = vmatprep.subr.bf16.mxu0 0
      %912 = vmatpush2.bf16.msra.mxu0 0
      %913 = vmatprep.subr.bf16.mxu0 0
      %914 = vmatpush2.bf16.msra.mxu0 0
      %915 = vmatprep.subr.bf16.mxu0 0
      %916 = vmatpush2.bf16.msra.mxu0 0
      %917 = vmatprep.subr.bf16.mxu0 0
      %918 = vmatpush2.bf16.msra.mxu0 0
      %919 = vmatprep.subr.bf16.mxu0 0
      %920 = vmatpush2.bf16.msra.mxu0 0
      %921 = vmatprep.mubr.bf16.mxu0 0
      %922 = vmatmul.mubr.bf16.gmra.mxu0 %v820
      %v923 = vpop.f32.mrf.mxu0
      %v924 = vadd.f32 0.0, %v923
      %v925 = vpop.f32.mrf.mxu0
      %v926 = vpop.f32.mrf.mxu0
      %v927 = vadd.f32 0.0, %v926
      %v928 = vpop.f32.mrf.mxu0
      %929 = vmatprep.mubr.bf16.mxu0 0
      %930 = vmatmul.mubr.bf16.gmra.mxu0 %v821
      %v931 = vpop.f32.mrf.mxu0
      %v932 = vadd.f32 0.0, %v931
      %v933 = vpop.f32.mrf.mxu0
      %v934 = vpop.f32.mrf.mxu0
      %v935 = vadd.f32 0.0, %v934
      %v936 = vpop.f32.mrf.mxu0
      %937 = vmatprep.mubr.bf16.mxu0 0
      %938 = vmatmul.mubr.bf16.gmra.mxu0 %v822
      %v939 = vpop.f32.mrf.mxu0
      %v940 = vadd.f32 0.0, %v939
      %v941 = vpop.f32.mrf.mxu0
      %v942 = vpop.f32.mrf.mxu0
      %v943 = vadd.f32 0.0, %v942
      %v944 = vpop.f32.mrf.mxu0
      %945 = vmatprep.mubr.bf16.mxu0 0
      %946 = vmatmul.mubr.bf16.gmra.mxu0 %v823
      %v947 = vpop.f32.mrf.mxu0
      %v948 = vadd.f32 0.0, %v947
      %v949 = vpop.f32.mrf.mxu0
      %v950 = vpop.f32.mrf.mxu0
      %v951 = vadd.f32 0.0, %v950
      %v952 = vpop.f32.mrf.mxu0
      %953 = vdwg.mxu0
      %v954 = vadd.f32 %v812, %v924
      %v955 = vadd.f32 %v813, %v927
      %v956 = vadd.f32 %v814, %v932
      %v957 = vadd.f32 %v815, %v935
      %v958 = vadd.f32 %v816, %v940
      %v959 = vadd.f32 %v817, %v943
      %v960 = vadd.f32 %v818, %v948
      %v961 = vadd.f32 %v819, %v951
      %v964 = vrot.slane %v319, 1
      %v965 = vrot.slane %v328, 1
      %v966 = vsel %vm365, %v964, %v965
      %v968 = vpack.c.bf16 %v374, %v371
      %v969 = vpack.c.bf16 %v380, %v377
      %v970 = vpack.c.bf16 %v386, %v383
      %v971 = vpack.c.bf16 %v966, %v389
      %s972 = scalar_lea.vmem %s3, 256
      %v973 = vld [vmem:[%s972] sm:$0xf]
      %v974 = vld [vmem:[%s972 + $0x4] sm:$0xf]
      %v975 = vld [vmem:[%s972 + $0x8] sm:$0xf]
      %v976 = vld [vmem:[%s972 + $0xc] sm:$0xf]
      %v977 = vld [vmem:[%s972 + $0x10] sm:$0xf]
      %v978 = vld [vmem:[%s972 + $0x14] sm:$0xf]
      %v979 = vld [vmem:[%s972 + $0x18] sm:$0xf]
      %v980 = vld [vmem:[%s972 + $0x1c] sm:$0xf]
      %v981 = vld [vmem:[%s972 + $0x20] sm:$0xf]
      %v982 = vld [vmem:[%s972 + $0x24] sm:$0xf]
      %v983 = vld [vmem:[%s972 + $0x28] sm:$0xf]
      %v984 = vld [vmem:[%s972 + $0x2c] sm:$0xf]
      %v985 = vld [vmem:[%s972 + $0x30] sm:$0xf]
      %v986 = vld [vmem:[%s972 + $0x34] sm:$0xf]
      %v987 = vld [vmem:[%s972 + $0x38] sm:$0xf]
      %v988 = vld [vmem:[%s972 + $0x3c] sm:$0xf]
      %v1005 = vunpack.c.l.b16 %v973
      %v1006 = vunpack.c.l.b16 %v974
      %v1007 = vunpack.c.l.b16 %v975
      %v1008 = vunpack.c.l.b16 %v976
      %v1009 = vunpack.c.l.b16 %v977
      %v1010 = vunpack.c.l.b16 %v978
      %v1011 = vunpack.c.l.b16 %v979
      %v1012 = vunpack.c.l.b16 %v980
      %v1013 = vunpack.c.l.b16 %v981
      %v1014 = vunpack.c.l.b16 %v982
      %v1015 = vunpack.c.l.b16 %v983
      %v1016 = vunpack.c.l.b16 %v984
      %v1017 = vunpack.c.l.b16 %v985
      %v1018 = vunpack.c.l.b16 %v986
      %v1019 = vunpack.c.l.b16 %v987
      %v1020 = vunpack.c.l.b16 %v988
      %v1021 = vpack.c.b16 %v1006, %v1005
      %v1022 = vpack.c.b16 %v1008, %v1007
      %v1023 = vpack.c.b16 %v1010, %v1009
      %v1024 = vpack.c.b16 %v1012, %v1011
      %v1025 = vpack.c.b16 %v1014, %v1013
      %v1026 = vpack.c.b16 %v1016, %v1015
      %v1027 = vpack.c.b16 %v1018, %v1017
      %v1028 = vpack.c.b16 %v1020, %v1019
      %1037 = vmatprep.subr.bf16.mxu0 0
      %1038 = vmatpush1.bf16.msra.mxu0 %v1028
      %1039 = vmatprep.subr.bf16.mxu0 0
      %1040 = vmatpush1.bf16.msra.mxu0 %v1027
      %1041 = vmatprep.subr.bf16.mxu0 0
      %1042 = vmatpush1.bf16.msra.mxu0 %v1026
      %1043 = vmatprep.subr.bf16.mxu0 0
      %1044 = vmatpush1.bf16.msra.mxu0 %v1025
      %1045 = vmatprep.subr.bf16.mxu0 0
      %1046 = vmatpush1.bf16.msra.mxu0 %v1024
      %1047 = vmatprep.subr.bf16.mxu0 0
      %1048 = vmatpush1.bf16.msra.mxu0 %v1023
      %1049 = vmatprep.subr.bf16.mxu0 0
      %1050 = vmatpush1.bf16.msra.mxu0 %v1022
      %1051 = vmatprep.subr.bf16.mxu0 0
      %1052 = vmatpush1.bf16.msra.mxu0 %v1021
      %1053 = vmatprep.subr.bf16.mxu0 0
      %1054 = vmatpush2.bf16.msra.mxu0 0
      %1055 = vmatprep.subr.bf16.mxu0 0
      %1056 = vmatpush2.bf16.msra.mxu0 0
      %1057 = vmatprep.subr.bf16.mxu0 0
      %1058 = vmatpush2.bf16.msra.mxu0 0
      %1059 = vmatprep.subr.bf16.mxu0 0
      %1060 = vmatpush2.bf16.msra.mxu0 0
      %1061 = vmatprep.subr.bf16.mxu0 0
      %1062 = vmatpush2.bf16.msra.mxu0 0
      %1063 = vmatprep.subr.bf16.mxu0 0
      %1064 = vmatpush2.bf16.msra.mxu0 0
      %1065 = vmatprep.subr.bf16.mxu0 0
      %1066 = vmatpush2.bf16.msra.mxu0 0
      %1067 = vmatprep.subr.bf16.mxu0 0
      %1068 = vmatpush2.bf16.msra.mxu0 0
      %1069 = vmatprep.mubr.bf16.mxu0 0
      %1070 = vmatmul.mubr.bf16.gmra.mxu0 %v968
      %v1071 = vpop.f32.mrf.mxu0
      %v1072 = vadd.f32 0.0, %v1071
      %v1073 = vpop.f32.mrf.mxu0
      %v1074 = vpop.f32.mrf.mxu0
      %v1075 = vadd.f32 0.0, %v1074
      %v1076 = vpop.f32.mrf.mxu0
      %1077 = vmatprep.mubr.bf16.mxu0 0
      %1078 = vmatmul.mubr.bf16.gmra.mxu0 %v969
      %v1079 = vpop.f32.mrf.mxu0
      %v1080 = vadd.f32 0.0, %v1079
      %v1081 = vpop.f32.mrf.mxu0
      %v1082 = vpop.f32.mrf.mxu0
      %v1083 = vadd.f32 0.0, %v1082
      %v1084 = vpop.f32.mrf.mxu0
      %1085 = vmatprep.mubr.bf16.mxu0 0
      %1086 = vmatmul.mubr.bf16.gmra.mxu0 %v970
      %v1087 = vpop.f32.mrf.mxu0
      %v1088 = vadd.f32 0.0, %v1087
      %v1089 = vpop.f32.mrf.mxu0
      %v1090 = vpop.f32.mrf.mxu0
      %v1091 = vadd.f32 0.0, %v1090
      %v1092 = vpop.f32.mrf.mxu0
      %1093 = vmatprep.mubr.bf16.mxu0 0
      %1094 = vmatmul.mubr.bf16.gmra.mxu0 %v971
      %v1095 = vpop.f32.mrf.mxu0
      %v1096 = vadd.f32 0.0, %v1095
      %v1097 = vpop.f32.mrf.mxu0
      %v1098 = vpop.f32.mrf.mxu0
      %v1099 = vadd.f32 0.0, %v1098
      %v1100 = vpop.f32.mrf.mxu0
      %1101 = vdwg.mxu0
      %v1102 = vadd.f32 %v954, %v1072
      %v1103 = vadd.f32 %v955, %v1075
      %v1104 = vadd.f32 %v956, %v1080
      %v1105 = vadd.f32 %v957, %v1083
      %v1106 = vadd.f32 %v958, %v1088
      %v1107 = vadd.f32 %v959, %v1091
      %v1108 = vadd.f32 %v960, %v1096
      %v1109 = vadd.f32 %v961, %v1099
      %v1110 = vrot.slane %v319, 2
      %v1111 = vrot.slane %v328, 2
      %v1112 = vsel %vm645, %v1110, %v1111
      %v1114 = vpack.c.bf16 %v654, %v651
      %v1115 = vpack.c.bf16 %v660, %v657
      %v1116 = vpack.c.bf16 %v666, %v663
      %v1117 = vpack.c.bf16 %v1112, %v669
      %s1118 = scalar_lea.vmem %s3, 320
      %v1119 = vld [vmem:[%s1118] sm:$0xf]
      %v1120 = vld [vmem:[%s1118 + $0x4] sm:$0xf]
      %v1121 = vld [vmem:[%s1118 + $0x8] sm:$0xf]
      %v1122 = vld [vmem:[%s1118 + $0xc] sm:$0xf]
      %v1123 = vld [vmem:[%s1118 + $0x10] sm:$0xf]
      %v1124 = vld [vmem:[%s1118 + $0x14] sm:$0xf]
      %v1125 = vld [vmem:[%s1118 + $0x18] sm:$0xf]
      %v1126 = vld [vmem:[%s1118 + $0x1c] sm:$0xf]
      %v1127 = vld [vmem:[%s1118 + $0x20] sm:$0xf]
      %v1128 = vld [vmem:[%s1118 + $0x24] sm:$0xf]
      %v1129 = vld [vmem:[%s1118 + $0x28] sm:$0xf]
      %v1130 = vld [vmem:[%s1118 + $0x2c] sm:$0xf]
      %v1131 = vld [vmem:[%s1118 + $0x30] sm:$0xf]
      %v1132 = vld [vmem:[%s1118 + $0x34] sm:$0xf]
      %v1133 = vld [vmem:[%s1118 + $0x38] sm:$0xf]
      %v1134 = vld [vmem:[%s1118 + $0x3c] sm:$0xf]
      %v1151 = vunpack.c.l.b16 %v1119
      %v1152 = vunpack.c.l.b16 %v1120
      %v1153 = vunpack.c.l.b16 %v1121
      %v1154 = vunpack.c.l.b16 %v1122
      %v1155 = vunpack.c.l.b16 %v1123
      %v1156 = vunpack.c.l.b16 %v1124
      %v1157 = vunpack.c.l.b16 %v1125
      %v1158 = vunpack.c.l.b16 %v1126
      %v1159 = vunpack.c.l.b16 %v1127
      %v1160 = vunpack.c.l.b16 %v1128
      %v1161 = vunpack.c.l.b16 %v1129
      %v1162 = vunpack.c.l.b16 %v1130
      %v1163 = vunpack.c.l.b16 %v1131
      %v1164 = vunpack.c.l.b16 %v1132
      %v1165 = vunpack.c.l.b16 %v1133
      %v1166 = vunpack.c.l.b16 %v1134
      %v1167 = vpack.c.b16 %v1152, %v1151
      %v1168 = vpack.c.b16 %v1154, %v1153
      %v1169 = vpack.c.b16 %v1156, %v1155
      %v1170 = vpack.c.b16 %v1158, %v1157
      %v1171 = vpack.c.b16 %v1160, %v1159
      %v1172 = vpack.c.b16 %v1162, %v1161
      %v1173 = vpack.c.b16 %v1164, %v1163
      %v1174 = vpack.c.b16 %v1166, %v1165
      %1183 = vmatprep.subr.bf16.mxu0 0
      %1184 = vmatpush1.bf16.msra.mxu0 %v1174
      %1185 = vmatprep.subr.bf16.mxu0 0
      %1186 = vmatpush1.bf16.msra.mxu0 %v1173
      %1187 = vmatprep.subr.bf16.mxu0 0
      %1188 = vmatpush1.bf16.msra.mxu0 %v1172
      %1189 = vmatprep.subr.bf16.mxu0 0
      %1190 = vmatpush1.bf16.msra.mxu0 %v1171
      %1191 = vmatprep.subr.bf16.mxu0 0
      %1192 = vmatpush1.bf16.msra.mxu0 %v1170
      %1193 = vmatprep.subr.bf16.mxu0 0
      %1194 = vmatpush1.bf16.msra.mxu0 %v1169
      %1195 = vmatprep.subr.bf16.mxu0 0
      %1196 = vmatpush1.bf16.msra.mxu0 %v1168
      %1197 = vmatprep.subr.bf16.mxu0 0
      %1198 = vmatpush1.bf16.msra.mxu0 %v1167
      %1199 = vmatprep.subr.bf16.mxu0 0
      %1200 = vmatpush2.bf16.msra.mxu0 0
      %1201 = vmatprep.subr.bf16.mxu0 0
      %1202 = vmatpush2.bf16.msra.mxu0 0
      %1203 = vmatprep.subr.bf16.mxu0 0
      %1204 = vmatpush2.bf16.msra.mxu0 0
      %1205 = vmatprep.subr.bf16.mxu0 0
      %1206 = vmatpush2.bf16.msra.mxu0 0
      %1207 = vmatprep.subr.bf16.mxu0 0
      %1208 = vmatpush2.bf16.msra.mxu0 0
      %1209 = vmatprep.subr.bf16.mxu0 0
      %1210 = vmatpush2.bf16.msra.mxu0 0
      %1211 = vmatprep.subr.bf16.mxu0 0
      %1212 = vmatpush2.bf16.msra.mxu0 0
      %1213 = vmatprep.subr.bf16.mxu0 0
      %1214 = vmatpush2.bf16.msra.mxu0 0
      %1215 = vmatprep.mubr.bf16.mxu0 0
      %1216 = vmatmul.mubr.bf16.gmra.mxu0 %v1114
      %v1217 = vpop.f32.mrf.mxu0
      %v1218 = vadd.f32 0.0, %v1217
      %v1219 = vpop.f32.mrf.mxu0
      %v1220 = vpop.f32.mrf.mxu0
      %v1221 = vadd.f32 0.0, %v1220
      %v1222 = vpop.f32.mrf.mxu0
      %1223 = vmatprep.mubr.bf16.mxu0 0
      %1224 = vmatmul.mubr.bf16.gmra.mxu0 %v1115
      %v1225 = vpop.f32.mrf.mxu0
      %v1226 = vadd.f32 0.0, %v1225
      %v1227 = vpop.f32.mrf.mxu0
      %v1228 = vpop.f32.mrf.mxu0
      %v1229 = vadd.f32 0.0, %v1228
      %v1230 = vpop.f32.mrf.mxu0
      %1231 = vmatprep.mubr.bf16.mxu0 0
      %1232 = vmatmul.mubr.bf16.gmra.mxu0 %v1116
      %v1233 = vpop.f32.mrf.mxu0
      %v1234 = vadd.f32 0.0, %v1233
      %v1235 = vpop.f32.mrf.mxu0
      %v1236 = vpop.f32.mrf.mxu0
      %v1237 = vadd.f32 0.0, %v1236
      %v1238 = vpop.f32.mrf.mxu0
      %1239 = vmatprep.mubr.bf16.mxu0 0
      %1240 = vmatmul.mubr.bf16.gmra.mxu0 %v1117
      %v1241 = vpop.f32.mrf.mxu0
      %v1242 = vadd.f32 0.0, %v1241
      %v1243 = vpop.f32.mrf.mxu0
      %v1244 = vpop.f32.mrf.mxu0
      %v1245 = vadd.f32 0.0, %v1244
      %v1246 = vpop.f32.mrf.mxu0
      %1247 = vdwg.mxu0
      %v1248 = vadd.f32 %v1102, %v1218
      %v1249 = vadd.f32 %v1103, %v1221
      %v1250 = vadd.f32 %v1104, %v1226
      %v1251 = vadd.f32 %v1105, %v1229
      %v1252 = vadd.f32 %v1106, %v1234
      %v1253 = vadd.f32 %v1107, %v1237
      %v1254 = vadd.f32 %v1108, %v1242
      %v1255 = vadd.f32 %v1109, %v1245
      %v1256 = vpack.c.bf16 %v311, %v319
      %s1257 = scalar_lea.vmem %s3, 384
      %v1258 = vld [vmem:[%s1257] sm:$0xf]
      %v1259 = vld [vmem:[%s1257 + $0x4] sm:$0xf]
      %v1260 = vld [vmem:[%s1257 + $0x8] sm:$0xf]
      %v1261 = vld [vmem:[%s1257 + $0xc] sm:$0xf]
      %v1262 = vld [vmem:[%s1257 + $0x10] sm:$0xf]
      %v1263 = vld [vmem:[%s1257 + $0x14] sm:$0xf]
      %v1264 = vld [vmem:[%s1257 + $0x18] sm:$0xf]
      %v1265 = vld [vmem:[%s1257 + $0x1c] sm:$0xf]
      %v1266 = vld [vmem:[%s1257 + $0x20] sm:$0xf]
      %v1267 = vld [vmem:[%s1257 + $0x24] sm:$0xf]
      %v1268 = vld [vmem:[%s1257 + $0x28] sm:$0xf]
      %v1269 = vld [vmem:[%s1257 + $0x2c] sm:$0xf]
      %v1270 = vld [vmem:[%s1257 + $0x30] sm:$0xf]
      %v1271 = vld [vmem:[%s1257 + $0x34] sm:$0xf]
      %v1272 = vld [vmem:[%s1257 + $0x38] sm:$0xf]
      %v1273 = vld [vmem:[%s1257 + $0x3c] sm:$0xf]
      %v1290 = vunpack.c.l.b16 %v1258
      %v1291 = vunpack.c.l.b16 %v1259
      %v1292 = vunpack.c.l.b16 %v1260
      %v1293 = vunpack.c.l.b16 %v1261
      %v1294 = vunpack.c.l.b16 %v1262
      %v1295 = vunpack.c.l.b16 %v1263
      %v1296 = vunpack.c.l.b16 %v1264
      %v1297 = vunpack.c.l.b16 %v1265
      %v1298 = vunpack.c.l.b16 %v1266
      %v1299 = vunpack.c.l.b16 %v1267
      %v1300 = vunpack.c.l.b16 %v1268
      %v1301 = vunpack.c.l.b16 %v1269
      %v1302 = vunpack.c.l.b16 %v1270
      %v1303 = vunpack.c.l.b16 %v1271
      %v1304 = vunpack.c.l.b16 %v1272
      %v1305 = vunpack.c.l.b16 %v1273
      %v1306 = vpack.c.b16 %v1291, %v1290
      %v1307 = vpack.c.b16 %v1293, %v1292
      %v1308 = vpack.c.b16 %v1295, %v1294
      %v1309 = vpack.c.b16 %v1297, %v1296
      %v1310 = vpack.c.b16 %v1299, %v1298
      %v1311 = vpack.c.b16 %v1301, %v1300
      %v1312 = vpack.c.b16 %v1303, %v1302
      %v1313 = vpack.c.b16 %v1305, %v1304
      %1322 = vmatprep.subr.bf16.mxu0 0
      %1323 = vmatpush1.bf16.msra.mxu0 %v1313
      %1324 = vmatprep.subr.bf16.mxu0 0
      %1325 = vmatpush1.bf16.msra.mxu0 %v1312
      %1326 = vmatprep.subr.bf16.mxu0 0
      %1327 = vmatpush1.bf16.msra.mxu0 %v1311
      %1328 = vmatprep.subr.bf16.mxu0 0
      %1329 = vmatpush1.bf16.msra.mxu0 %v1310
      %1330 = vmatprep.subr.bf16.mxu0 0
      %1331 = vmatpush1.bf16.msra.mxu0 %v1309
      %1332 = vmatprep.subr.bf16.mxu0 0
      %1333 = vmatpush1.bf16.msra.mxu0 %v1308
      %1334 = vmatprep.subr.bf16.mxu0 0
      %1335 = vmatpush1.bf16.msra.mxu0 %v1307
      %1336 = vmatprep.subr.bf16.mxu0 0
      %1337 = vmatpush1.bf16.msra.mxu0 %v1306
      %1338 = vmatprep.subr.bf16.mxu0 0
      %1339 = vmatpush2.bf16.msra.mxu0 0
      %1340 = vmatprep.subr.bf16.mxu0 0
      %1341 = vmatpush2.bf16.msra.mxu0 0
      %1342 = vmatprep.subr.bf16.mxu0 0
      %1343 = vmatpush2.bf16.msra.mxu0 0
      %1344 = vmatprep.subr.bf16.mxu0 0
      %1345 = vmatpush2.bf16.msra.mxu0 0
      %1346 = vmatprep.subr.bf16.mxu0 0
      %1347 = vmatpush2.bf16.msra.mxu0 0
      %1348 = vmatprep.subr.bf16.mxu0 0
      %1349 = vmatpush2.bf16.msra.mxu0 0
      %1350 = vmatprep.subr.bf16.mxu0 0
      %1351 = vmatpush2.bf16.msra.mxu0 0
      %1352 = vmatprep.subr.bf16.mxu0 0
      %1353 = vmatpush2.bf16.msra.mxu0 0
      %1354 = vmatprep.mubr.bf16.mxu0 0
      %1355 = vmatmul.mubr.bf16.gmra.mxu0 %v330
      %v1356 = vpop.f32.mrf.mxu0
      %v1357 = vadd.f32 0.0, %v1356
      %v1358 = vpop.f32.mrf.mxu0
      %v1359 = vpop.f32.mrf.mxu0
      %v1360 = vadd.f32 0.0, %v1359
      %v1361 = vpop.f32.mrf.mxu0
      %1362 = vmatprep.mubr.bf16.mxu0 0
      %1363 = vmatmul.mubr.bf16.gmra.mxu0 %v331
      %v1364 = vpop.f32.mrf.mxu0
      %v1365 = vadd.f32 0.0, %v1364
      %v1366 = vpop.f32.mrf.mxu0
      %v1367 = vpop.f32.mrf.mxu0
      %v1368 = vadd.f32 0.0, %v1367
      %v1369 = vpop.f32.mrf.mxu0
      %1370 = vmatprep.mubr.bf16.mxu0 0
      %1371 = vmatmul.mubr.bf16.gmra.mxu0 %v332
      %v1372 = vpop.f32.mrf.mxu0
      %v1373 = vadd.f32 0.0, %v1372
      %v1374 = vpop.f32.mrf.mxu0
      %v1375 = vpop.f32.mrf.mxu0
      %v1376 = vadd.f32 0.0, %v1375
      %v1377 = vpop.f32.mrf.mxu0
      %1378 = vmatprep.mubr.bf16.mxu0 0
      %1379 = vmatmul.mubr.bf16.gmra.mxu0 %v1256
      %v1380 = vpop.f32.mrf.mxu0
      %v1381 = vadd.f32 0.0, %v1380
      %v1382 = vpop.f32.mrf.mxu0
      %v1383 = vpop.f32.mrf.mxu0
      %v1384 = vadd.f32 0.0, %v1383
      %v1385 = vpop.f32.mrf.mxu0
      %1386 = vdwg.mxu0
      %v1387 = vadd.f32 %v1248, %v1357
      %v1388 = vadd.f32 %v1249, %v1360
      %v1389 = vadd.f32 %v1250, %v1365
      %v1390 = vadd.f32 %v1251, %v1368
      %v1391 = vadd.f32 %v1252, %v1373
      %v1392 = vadd.f32 %v1253, %v1376
      %v1393 = vadd.f32 %v1254, %v1381
      %v1394 = vadd.f32 %v1255, %v1384
      %v1395 = vpack.c.bf16 %v368, %v966
      %s1396 = scalar_lea.vmem %s3, 448
      %v1397 = vld [vmem:[%s1396] sm:$0xf]
      %v1398 = vld [vmem:[%s1396 + $0x4] sm:$0xf]
      %v1399 = vld [vmem:[%s1396 + $0x8] sm:$0xf]
      %v1400 = vld [vmem:[%s1396 + $0xc] sm:$0xf]
      %v1401 = vld [vmem:[%s1396 + $0x10] sm:$0xf]
      %v1402 = vld [vmem:[%s1396 + $0x14] sm:$0xf]
      %v1403 = vld [vmem:[%s1396 + $0x18] sm:$0xf]
      %v1404 = vld [vmem:[%s1396 + $0x1c] sm:$0xf]
      %v1405 = vld [vmem:[%s1396 + $0x20] sm:$0xf]
      %v1406 = vld [vmem:[%s1396 + $0x24] sm:$0xf]
      %v1407 = vld [vmem:[%s1396 + $0x28] sm:$0xf]
      %v1408 = vld [vmem:[%s1396 + $0x2c] sm:$0xf]
      %v1409 = vld [vmem:[%s1396 + $0x30] sm:$0xf]
      %v1410 = vld [vmem:[%s1396 + $0x34] sm:$0xf]
      %v1411 = vld [vmem:[%s1396 + $0x38] sm:$0xf]
      %v1412 = vld [vmem:[%s1396 + $0x3c] sm:$0xf]
      %v1429 = vunpack.c.l.b16 %v1397
      %v1430 = vunpack.c.l.b16 %v1398
      %v1431 = vunpack.c.l.b16 %v1399
      %v1432 = vunpack.c.l.b16 %v1400
      %v1433 = vunpack.c.l.b16 %v1401
      %v1434 = vunpack.c.l.b16 %v1402
      %v1435 = vunpack.c.l.b16 %v1403
      %v1436 = vunpack.c.l.b16 %v1404
      %v1437 = vunpack.c.l.b16 %v1405
      %v1438 = vunpack.c.l.b16 %v1406
      %v1439 = vunpack.c.l.b16 %v1407
      %v1440 = vunpack.c.l.b16 %v1408
      %v1441 = vunpack.c.l.b16 %v1409
      %v1442 = vunpack.c.l.b16 %v1410
      %v1443 = vunpack.c.l.b16 %v1411
      %v1444 = vunpack.c.l.b16 %v1412
      %v1445 = vpack.c.b16 %v1430, %v1429
      %v1446 = vpack.c.b16 %v1432, %v1431
      %v1447 = vpack.c.b16 %v1434, %v1433
      %v1448 = vpack.c.b16 %v1436, %v1435
      %v1449 = vpack.c.b16 %v1438, %v1437
      %v1450 = vpack.c.b16 %v1440, %v1439
      %v1451 = vpack.c.b16 %v1442, %v1441
      %v1452 = vpack.c.b16 %v1444, %v1443
      %1461 = vmatprep.subr.bf16.mxu0 0
      %1462 = vmatpush1.bf16.msra.mxu0 %v1452
      %1463 = vmatprep.subr.bf16.mxu0 0
      %1464 = vmatpush1.bf16.msra.mxu0 %v1451
      %1465 = vmatprep.subr.bf16.mxu0 0
      %1466 = vmatpush1.bf16.msra.mxu0 %v1450
      %1467 = vmatprep.subr.bf16.mxu0 0
      %1468 = vmatpush1.bf16.msra.mxu0 %v1449
      %1469 = vmatprep.subr.bf16.mxu0 0
      %1470 = vmatpush1.bf16.msra.mxu0 %v1448
      %1471 = vmatprep.subr.bf16.mxu0 0
      %1472 = vmatpush1.bf16.msra.mxu0 %v1447
      %1473 = vmatprep.subr.bf16.mxu0 0
      %1474 = vmatpush1.bf16.msra.mxu0 %v1446
      %1475 = vmatprep.subr.bf16.mxu0 0
      %1476 = vmatpush1.bf16.msra.mxu0 %v1445
      %1477 = vmatprep.subr.bf16.mxu0 0
      %1478 = vmatpush2.bf16.msra.mxu0 0
      %1479 = vmatprep.subr.bf16.mxu0 0
      %1480 = vmatpush2.bf16.msra.mxu0 0
      %1481 = vmatprep.subr.bf16.mxu0 0
      %1482 = vmatpush2.bf16.msra.mxu0 0
      %1483 = vmatprep.subr.bf16.mxu0 0
      %1484 = vmatpush2.bf16.msra.mxu0 0
      %1485 = vmatprep.subr.bf16.mxu0 0
      %1486 = vmatpush2.bf16.msra.mxu0 0
      %1487 = vmatprep.subr.bf16.mxu0 0
      %1488 = vmatpush2.bf16.msra.mxu0 0
      %1489 = vmatprep.subr.bf16.mxu0 0
      %1490 = vmatpush2.bf16.msra.mxu0 0
      %1491 = vmatprep.subr.bf16.mxu0 0
      %1492 = vmatpush2.bf16.msra.mxu0 0
      %1493 = vmatprep.mubr.bf16.mxu0 0
      %1494 = vmatmul.mubr.bf16.gmra.mxu0 %v399
      %v1495 = vpop.f32.mrf.mxu0
      %v1496 = vadd.f32 0.0, %v1495
      %v1497 = vpop.f32.mrf.mxu0
      %v1498 = vpop.f32.mrf.mxu0
      %v1499 = vadd.f32 0.0, %v1498
      %v1500 = vpop.f32.mrf.mxu0
      %1501 = vmatprep.mubr.bf16.mxu0 0
      %1502 = vmatmul.mubr.bf16.gmra.mxu0 %v400
      %v1503 = vpop.f32.mrf.mxu0
      %v1504 = vadd.f32 0.0, %v1503
      %v1505 = vpop.f32.mrf.mxu0
      %v1506 = vpop.f32.mrf.mxu0
      %v1507 = vadd.f32 0.0, %v1506
      %v1508 = vpop.f32.mrf.mxu0
      %1509 = vmatprep.mubr.bf16.mxu0 0
      %1510 = vmatmul.mubr.bf16.gmra.mxu0 %v401
      %v1511 = vpop.f32.mrf.mxu0
      %v1512 = vadd.f32 0.0, %v1511
      %v1513 = vpop.f32.mrf.mxu0
      %v1514 = vpop.f32.mrf.mxu0
      %v1515 = vadd.f32 0.0, %v1514
      %v1516 = vpop.f32.mrf.mxu0
      %1517 = vmatprep.mubr.bf16.mxu0 0
      %1518 = vmatmul.mubr.bf16.gmra.mxu0 %v1395
      %v1519 = vpop.f32.mrf.mxu0
      %v1520 = vadd.f32 0.0, %v1519
      %v1521 = vpop.f32.mrf.mxu0
      %v1522 = vpop.f32.mrf.mxu0
      %v1523 = vadd.f32 0.0, %v1522
      %v1524 = vpop.f32.mrf.mxu0
      %1525 = vdwg.mxu0
      %v1526 = vadd.f32 %v1387, %v1496
      %v1527 = vadd.f32 %v1388, %v1499
      %v1528 = vadd.f32 %v1389, %v1504
      %v1529 = vadd.f32 %v1390, %v1507
      %v1530 = vadd.f32 %v1391, %v1512
      %v1531 = vadd.f32 %v1392, %v1515
      %v1532 = vadd.f32 %v1393, %v1520
      %v1533 = vadd.f32 %v1394, %v1523
      %v1534 = vpack.c.bf16 %v648, %v1112
      %s1535 = scalar_lea.vmem %s3, 512
      %v1536 = vld [vmem:[%s1535] sm:$0xf]
      %v1537 = vld [vmem:[%s1535 + $0x4] sm:$0xf]
      %v1538 = vld [vmem:[%s1535 + $0x8] sm:$0xf]
      %v1539 = vld [vmem:[%s1535 + $0xc] sm:$0xf]
      %v1540 = vld [vmem:[%s1535 + $0x10] sm:$0xf]
      %v1541 = vld [vmem:[%s1535 + $0x14] sm:$0xf]
      %v1542 = vld [vmem:[%s1535 + $0x18] sm:$0xf]
      %v1543 = vld [vmem:[%s1535 + $0x1c] sm:$0xf]
      %v1544 = vld [vmem:[%s1535 + $0x20] sm:$0xf]
      %v1545 = vld [vmem:[%s1535 + $0x24] sm:$0xf]
      %v1546 = vld [vmem:[%s1535 + $0x28] sm:$0xf]
      %v1547 = vld [vmem:[%s1535 + $0x2c] sm:$0xf]
      %v1548 = vld [vmem:[%s1535 + $0x30] sm:$0xf]
      %v1549 = vld [vmem:[%s1535 + $0x34] sm:$0xf]
      %v1550 = vld [vmem:[%s1535 + $0x38] sm:$0xf]
      %v1551 = vld [vmem:[%s1535 + $0x3c] sm:$0xf]
      %v1568 = vunpack.c.l.b16 %v1536
      %v1569 = vunpack.c.l.b16 %v1537
      %v1570 = vunpack.c.l.b16 %v1538
      %v1571 = vunpack.c.l.b16 %v1539
      %v1572 = vunpack.c.l.b16 %v1540
      %v1573 = vunpack.c.l.b16 %v1541
      %v1574 = vunpack.c.l.b16 %v1542
      %v1575 = vunpack.c.l.b16 %v1543
      %v1576 = vunpack.c.l.b16 %v1544
      %v1577 = vunpack.c.l.b16 %v1545
      %v1578 = vunpack.c.l.b16 %v1546
      %v1579 = vunpack.c.l.b16 %v1547
      %v1580 = vunpack.c.l.b16 %v1548
      %v1581 = vunpack.c.l.b16 %v1549
      %v1582 = vunpack.c.l.b16 %v1550
      %v1583 = vunpack.c.l.b16 %v1551
      %v1584 = vpack.c.b16 %v1569, %v1568
      %v1585 = vpack.c.b16 %v1571, %v1570
      %v1586 = vpack.c.b16 %v1573, %v1572
      %v1587 = vpack.c.b16 %v1575, %v1574
      %v1588 = vpack.c.b16 %v1577, %v1576
      %v1589 = vpack.c.b16 %v1579, %v1578
      %v1590 = vpack.c.b16 %v1581, %v1580
      %v1591 = vpack.c.b16 %v1583, %v1582
      %1600 = vmatprep.subr.bf16.mxu0 0
      %1601 = vmatpush1.bf16.msra.mxu0 %v1591
      %1602 = vmatprep.subr.bf16.mxu0 0
      %1603 = vmatpush1.bf16.msra.mxu0 %v1590
      %1604 = vmatprep.subr.bf16.mxu0 0
      %1605 = vmatpush1.bf16.msra.mxu0 %v1589
      %1606 = vmatprep.subr.bf16.mxu0 0
      %1607 = vmatpush1.bf16.msra.mxu0 %v1588
      %1608 = vmatprep.subr.bf16.mxu0 0
      %1609 = vmatpush1.bf16.msra.mxu0 %v1587
      %1610 = vmatprep.subr.bf16.mxu0 0
      %1611 = vmatpush1.bf16.msra.mxu0 %v1586
      %1612 = vmatprep.subr.bf16.mxu0 0
      %1613 = vmatpush1.bf16.msra.mxu0 %v1585
      %1614 = vmatprep.subr.bf16.mxu0 0
      %1615 = vmatpush1.bf16.msra.mxu0 %v1584
      %1616 = vmatprep.subr.bf16.mxu0 0
      %1617 = vmatpush2.bf16.msra.mxu0 0
      %1618 = vmatprep.subr.bf16.mxu0 0
      %1619 = vmatpush2.bf16.msra.mxu0 0
      %1620 = vmatprep.subr.bf16.mxu0 0
      %1621 = vmatpush2.bf16.msra.mxu0 0
      %1622 = vmatprep.subr.bf16.mxu0 0
      %1623 = vmatpush2.bf16.msra.mxu0 0
      %1624 = vmatprep.subr.bf16.mxu0 0
      %1625 = vmatpush2.bf16.msra.mxu0 0
      %1626 = vmatprep.subr.bf16.mxu0 0
      %1627 = vmatpush2.bf16.msra.mxu0 0
      %1628 = vmatprep.subr.bf16.mxu0 0
      %1629 = vmatpush2.bf16.msra.mxu0 0
      %1630 = vmatprep.subr.bf16.mxu0 0
      %1631 = vmatpush2.bf16.msra.mxu0 0
      %1632 = vmatprep.mubr.bf16.mxu0 0
      %1633 = vmatmul.mubr.bf16.gmra.mxu0 %v679
      %v1634 = vpop.f32.mrf.mxu0
      %v1635 = vadd.f32 0.0, %v1634
      %v1636 = vpop.f32.mrf.mxu0
      %v1637 = vpop.f32.mrf.mxu0
      %v1638 = vadd.f32 0.0, %v1637
      %v1639 = vpop.f32.mrf.mxu0
      %1640 = vmatprep.mubr.bf16.mxu0 0
      %1641 = vmatmul.mubr.bf16.gmra.mxu0 %v680
      %v1642 = vpop.f32.mrf.mxu0
      %v1643 = vadd.f32 0.0, %v1642
      %v1644 = vpop.f32.mrf.mxu0
      %v1645 = vpop.f32.mrf.mxu0
      %v1646 = vadd.f32 0.0, %v1645
      %v1647 = vpop.f32.mrf.mxu0
      %1648 = vmatprep.mubr.bf16.mxu0 0
      %1649 = vmatmul.mubr.bf16.gmra.mxu0 %v681
      %v1650 = vpop.f32.mrf.mxu0
      %v1651 = vadd.f32 0.0, %v1650
      %v1652 = vpop.f32.mrf.mxu0
      %v1653 = vpop.f32.mrf.mxu0
      %v1654 = vadd.f32 0.0, %v1653
      %v1655 = vpop.f32.mrf.mxu0
      %1656 = vmatprep.mubr.bf16.mxu0 0
      %1657 = vmatmul.mubr.bf16.gmra.mxu0 %v1534
      %v1658 = vpop.f32.mrf.mxu0
      %v1659 = vadd.f32 0.0, %v1658
      %v1660 = vpop.f32.mrf.mxu0
      %v1661 = vpop.f32.mrf.mxu0
      %v1662 = vadd.f32 0.0, %v1661
      %v1663 = vpop.f32.mrf.mxu0
      %1664 = vdwg.mxu0
      %v1665 = vadd.f32 %v1526, %v1635
      %v1666 = vadd.f32 %v1527, %v1638
      %v1667 = vadd.f32 %v1528, %v1643
      %v1668 = vadd.f32 %v1529, %v1646
      %v1669 = vadd.f32 %v1530, %v1651
      %v1670 = vadd.f32 %v1531, %v1654
      %v1671 = vadd.f32 %v1532, %v1659
      %v1672 = vadd.f32 %v1533, %v1662
      %1673 = vst [vmem:[%s231] sm:$0xff] %v1665
      %1674 = vst [vmem:[%s231 + $0x8] sm:$0xff] %v1666
      %1675 = vst [vmem:[%s231 + $0x10] sm:$0xff] %v1667
      %1676 = vst [vmem:[%s231 + $0x18] sm:$0xff] %v1668
      %1677 = vst [vmem:[%s231 + $0x20] sm:$0xff] %v1669
      %1678 = vst [vmem:[%s231 + $0x28] sm:$0xff] %v1670
      %1679 = vst [vmem:[%s231 + $0x30] sm:$0xff] %v1671
      %1680 = vst [vmem:[%s231 + $0x38] sm:$0xff] %v1672
      %v1681 = vadd.f32 %v1665, %v1666
      %v1682 = vadd.f32 %v1681, %v1667
      %v1683 = vadd.f32 %v1682, %v1668
      %v1684 = vadd.f32 %v1683, %v1669
      %v1685 = vadd.f32 %v1684, %v1670
      %v1686 = vadd.f32 %v1685, %v1671
      %v1687 = vadd.f32 %v1686, %v1672
      %v1688 = vrot.slane %v1687, 4
      %v1689 = vadd.f32 %v1687, %v1688
      %v1690 = vrot.slane %v1689, 2
      %v1691 = vadd.f32 %v1689, %v1690
      %v1692 = vrot.slane %v1691, 1
      %v1693 = vadd.f32 %v1691, %v1692
      %v1694 = vmul.f32 %v1665, %v1665
      %v1695 = vmul.f32 %v1666, %v1666
      %v1696 = vmul.f32 %v1667, %v1667
      %v1697 = vmul.f32 %v1668, %v1668
      %v1698 = vmul.f32 %v1669, %v1669
      %v1699 = vmul.f32 %v1670, %v1670
      %v1700 = vmul.f32 %v1671, %v1671
      %v1701 = vmul.f32 %v1672, %v1672
      %v1702 = vadd.f32 %v1694, %v1695
      %v1703 = vadd.f32 %v1702, %v1696
      %v1704 = vadd.f32 %v1703, %v1697
      %v1705 = vadd.f32 %v1704, %v1698
      %v1706 = vadd.f32 %v1705, %v1699
      %v1707 = vadd.f32 %v1706, %v1700
      %v1708 = vadd.f32 %v1707, %v1701
      %v1709 = vrot.slane %v1708, 4
      %v1710 = vadd.f32 %v1708, %v1709
      %v1711 = vrot.slane %v1710, 2
      %v1712 = vadd.f32 %v1710, %v1711
      %v1713 = vrot.slane %v1712, 1
      %v1714 = vadd.f32 %v1712, %v1713
      %v1715 = vsel %vm310, %v1693, %v1714
      %1716 = vst [vmem:[%s235] sm:$0x3] %v1715
      %p1717 = scmp.lt.s32.totalorder %s17, 1
      %s1718 = scalar_select %p1717, %s17, 1
      %s1719 = smul.addr %s1718, 8
      %s1720 = smul.addr %s1719, 8
      %s1721 = scalar_lea.vmem %s4, %s1720
      %p1722 = scmp.lt.s32.totalorder %s17, 1
      %s1723 = scalar_select %p1722, %s17, 1
      %s1724 = smul.addr %s1723, 2
      %s1725 = scalar_lea.vmem %s5, %s1724
      // Predicated region
      $region37: #{residual_block_forward.5} parent=35 // pred_check
        %p1726 = pneg %p124
      $region38: #{residual_block_forward.5} parent=35 // pred_check_branch
        %1728 = sbr.rel (%p1726) target = $region40
      $region39: #{residual_block_forward.5} parent=35 // pred_region
        _
      $region40: #{residual_block_forward.5} parent=35 // pred_fallthru
        _
      // Predicated region
      $region41: #{residual_block_forward.5} parent=35 // pred_check
        %p1729 = pneg %p150
      $region42: #{residual_block_forward.5} parent=35 // pred_check_branch
        %1731 = sbr.rel (%p1729) target = $region44
      $region43: #{residual_block_forward.5} parent=35 // pred_region
        _
      $region44: #{residual_block_forward.5} parent=35 // pred_fallthru
        _
    $region36: #{residual_block_forward.5} parent=5 // pred_fallthru
      _
    %p1732 = scmp.le.s32.totalorder 2, %s12
    // Predicated region
    $region45: #{residual_block_forward.5} parent=5 // pred_check
      %p1733 = pneg %p1732
    $region46: #{residual_block_forward.5} parent=5 // pred_check_branch
      %1735 = sbr.rel (%p1733) target = $region48
    $region47: #{residual_block_forward.5} parent=5 // pred_region
      %s1736 = ssub.s32 %s12, 2
      // Predicated region
      $region49: #{residual_block_forward.5} parent=47 // pred_check
        %p1737 = pneg %p130
      $region50: #{residual_block_forward.5} parent=47 // pred_check_branch
        %1739 = sbr.rel (%p1737) target = $region52
      $region51: #{residual_block_forward.5} parent=47 // pred_region
        %p1740 = scmp.lt.s32.totalorder %s18, 1
        %s1741 = scalar_select %p1740, %s18, 1
        %s1742 = smul.addr %s1741, 8
        %s1743 = smul.addr %s1742, 8
        %s1744 = scalar_lea.vmem %s4, %s1743
      $region52: #{residual_block_forward.5} parent=47 // pred_fallthru
        _
      // Predicated region
      $region53: #{residual_block_forward.5} parent=47 // pred_check
        %p1745 = pneg %p156
      $region54: #{residual_block_forward.5} parent=47 // pred_check_branch
        %1747 = sbr.rel (%p1745) target = $region56
      $region55: #{residual_block_forward.5} parent=47 // pred_region
        %p1748 = scmp.lt.s32.totalorder %s18, 1
        %s1749 = scalar_select %p1748, %s18, 1
        %s1750 = smul.addr %s1749, 2
        %s1751 = scalar_lea.vmem %s5, %s1750
      $region56: #{residual_block_forward.5} parent=47 // pred_fallthru
        _
    $region48: #{residual_block_forward.5} parent=5 // pred_fallthru
      _
  $region6: #{residual_block_forward.5} parent=0 // loop_footer
    %s16 = sadd.s32 1, %s12
  $region7: #{residual_block_forward.5} parent=0 // loop_footer_branch
    %11 = sbr.rel target = $region3
  $region8: #{residual_block_forward.5} parent=0 // loop_exit
    _

</llo_original>
